<compile_context>
chip_gen: v7x
topology: tpu7x:2x2x1
jax: 0.10.0
libtpu: 0.0.40
codegen_flags: <defaults>
</compile_context>

<pallas_src>
import math

import jax
import jax.numpy as jnp
from jax import lax
from jax.experimental import pallas as pl
from jax.experimental.pallas import tpu as pltpu

# ----- decay functions (standard Flashback choices, defined in-script) -----
LAMBDA_T = 0.1
LAMBDA_S = 1.0
DAY = 86400.0


def f_t(dt, user_len=None):  # temporal decay (kernel uses the fused equivalent)
    return ((jnp.cos(dt * 2.0 * math.pi / DAY) + 1.0) * 0.5) * jnp.exp(-(dt / DAY) * LAMBDA_T)


def f_s(ds, user_len=None):  # spatial decay
    return jnp.exp(-ds * LAMBDA_S)


# ----------------------------- Pallas kernels ------------------------------

def _fused_rnn_flashback_kernel(x_ref, wih_t_ref, whh_t_ref, b_ref,
                                t_ref, sx_ref, sy_ref, mask_ref,
                                ow_ref, pre_ref, h_ref):
    """Elman RNN recurrence fused with the causal spatio-temporal aggregation.

    x_ref:        (S, TU, HP) bf16  time-major embedded inputs
    wih_t/whh_t:  (HP, HP)    bf16  W_ih^T / W_hh^T
    b_ref:        (1, HP)     f32   b_ih + b_hh
    t/sx/sy/mask: (TU, S)     f32   timestamps, coords, valid-step mask
    ow_ref:       (TU, S, HP) bf16  OUTPUT: normalised weighted history
    pre_ref:      (S, TU, HP) f32   VMEM scratch: hoisted input projection
    h_ref:        (TU, S, HP) f32   VMEM scratch: hidden states (batch-major)
    """
    S, TU, HP = x_ref.shape

    # ---- RNN: hoisted input projection = ONE MXU GEMM for the whole block ----
    pre_ref[...] = (jnp.dot(x_ref[...].reshape(S * TU, HP), wih_t_ref[...],
                            preferred_element_type=jnp.float32)
                    + b_ref[...]).reshape(S, TU, HP)

    w_hh_t = whh_t_ref[...]                       # bf16, loaded once
    # Only h @ W_hh^T + tanh stays on the sequential critical path.  S is
    # static and small, so the loop is fully unrolled; per-step reads come
    # from pre_ref and per-step writes go to h_ref, keeping vreg pressure flat.
    # TODO(synk): for S >> 64 switch to lax.fori_loop over a time-major scratch.
    h = jnp.tanh(pre_ref[0])                      # h_0 = 0
    h_ref[:, 0, :] = h
    for step in range(1, S):
        h = jnp.tanh(pre_ref[step]
                     + jnp.dot(h.astype(jnp.bfloat16), w_hh_t,
                               preferred_element_type=jnp.float32))
        h_ref[:, step, :] = h

    # ---- flashback aggregation on the VMEM-resident hidden states ----
    ts = t_ref[...]
    sx = sx_ref[...]
    sy = sy_ref[...]
    mask = mask_ref[...]                          # 1.0 where history step < length

    # pairwise (i = current step -> axis 1, j = history step -> axis 2)
    dt = jnp.maximum(ts[:, :, None] - ts[:, None, :], 0.0)           # (TU,S,S)
    ds = jnp.sqrt(jnp.square(sx[:, :, None] - sx[:, None, :])
                  + jnp.square(sy[:, :, None] - sy[:, None, :]))      # (TU,S,S)

    # fused decay f_t(dt)*f_s(ds): single exp over the (TU,S,S) slab
    w = (0.5 * (jnp.cos(dt * (2.0 * math.pi / DAY)) + 1.0)
         * jnp.exp(-(dt * (LAMBDA_T / DAY) + ds * LAMBDA_S)) + 1e-10)

    # causal mask (history j <= current i), built once in 2-D
    row = lax.broadcasted_iota(jnp.int32, (S, S), 0)
    col = lax.broadcasted_iota(jnp.int32, (S, S), 1)
    w = jnp.where((col <= row)[None, :, :], w, 0.0)

    # denominator over the UNMASKED causal weights (matches the PyTorch
    # reference: padded history rows of `out` are zero but still counted in
    # sum_w).  Exact reciprocal for parity with the f32 reference.
    inv = 1.0 / jnp.maximum(jnp.sum(w, axis=2, keepdims=True), 1e-10)  # (TU,S,1)

    # TODO(synk): for deployed S < 128 the (TU,S,S) slabs are lane-sparse; a
    # users-on-lanes (S,S,TU) layout with a VPU broadcast-MAC would be denser.
    h_bf = h_ref[...].astype(jnp.bfloat16)                             # (TU,S,HP)
    if S <= HP:
        # scale the (TU,S,S) weights before the matmul (fewer multiplies)
        wn = (w * inv * mask[:, None, :]).astype(jnp.bfloat16)
        agg = jnp.einsum('uij,ujh->uih', wn, h_bf,
                         preferred_element_type=jnp.float32)
    else:
        # scale the (TU,S,HP) result after the matmul instead
        wm = (w * mask[:, None, :]).astype(jnp.bfloat16)
        agg = jnp.einsum('uij,ujh->uih', wm, h_bf,
                         preferred_element_type=jnp.float32) * inv
    ow_ref[...] = agg.astype(ow_ref.dtype)


def _fc_softmax_kernel(ow_ref, pu_ref, wh_ref, wu_ref, b_ref, y_ref):
    """Split Linear (history half + user half) + softmax over the POI dim.

    ow_ref: (TU, S, HP) bf16  weighted history
    pu_ref: (TU, HP)    bf16  user embeddings
    wh_ref: (HP, PP)    bf16  W_hist (history half of fc_w^T)
    wu_ref: (HP, PP)    bf16  W_user (user half of fc_w^T)
    b_ref:  (1, PP)     f32   bias (-1e30 in padded columns)
    y_ref:  (TU, S, PP) f32   softmax probabilities
    """
    # TODO(synk): for a realistic POI vocab (P >= 10k) tile the P axis (extra
    # 'arbitrary' grid dim) with an online-softmax running max/denominator so
    # the (HP,PP) weights and the (TU,S,PPtile) output fit VMEM.
    TU, S, HP = ow_ref.shape
    PP = y_ref.shape[-1]

    hist = jnp.dot(ow_ref[...].reshape(TU * S, HP), wh_ref[...],
                   preferred_element_type=jnp.float32)              # (TU*S, PP)
    user = jnp.dot(pu_ref[...], wu_ref[...],
                   preferred_element_type=jnp.float32)              # (TU, PP)

    logits = hist.reshape(TU, S, PP) + user[:, None, :] + b_ref[...]
    m = jnp.max(logits, axis=-1, keepdims=True)
    e = jnp.exp(logits - m)
    # exact division: softmax rows must sum to 1 to f32 accuracy
    y_ref[...] = e / jnp.sum(e, axis=-1, keepdims=True)


# ------------------------------ wrapper -------------------------------------

def _round_up(x, m):
    return ((x + m - 1) // m) * m


def _pad_to(a, shape):
    return jnp.pad(a, [(0, s - d) for d, s in zip(a.shape, shape)])


def flashback_forward(params, poi_inputs, lengths, timestamp_inputs,
                      location_inputs, active_user):
    """Returns (y_linear (U,S,P) softmaxed, out_pu (U,S,2H)) like Flashback.forward."""
    U, S = poi_inputs.shape
    H = params['enc_w'].shape[1]
    P = params['fc_w'].shape[0]
    f32, bf16 = jnp.float32, jnp.bfloat16

    # --- tiling ---------------------------------------------------------------
    # TU users per block: fill the MXU rows (cap 128 -> safe on v5e/v7x; v6e's
    # 128 MiB VMEM would even allow 256).  When the batch allows, split into
    # >=2 blocks so the 'parallel' grid axis can shard across v7x's 2 cores.
    TU = min(128, _round_up(max(U, 8), 16))
    if 32 <= U <= 128:
        TU = _round_up((U + 1) // 2, 16)
    UP = _round_up(U, TU)
    HP = _round_up(H, 128)
    PP = _round_up(P, 128)
    n_ub = UP // TU
    cp = pltpu.CompilerParams(
        dimension_semantics=("parallel",),
        vmem_limit_bytes=56 * 1024 * 1024,   # > default scoped limit, < v7x physical
    )

    # ---- glue: pad + gather embeddings (bf16 matmul operands) ----------------
    enc_w = _pad_to(params['enc_w'].astype(bf16), (params['enc_w'].shape[0], HP))
    poi_p = _pad_to(poi_inputs, (UP, S))
    # TODO(synk): move this gather into the fused kernel (enc_w resident in
    # VMEM / scalar-prefetched ids) to save one HBM write+read of this slab.
    x_emb_t = enc_w[poi_p.T]                                      # (S, UP, HP) time-major

    w_ih_t = _pad_to(params['w_ih'].T.astype(bf16), (HP, HP))
    w_hh_t = _pad_to(params['w_hh'].T.astype(bf16), (HP, HP))
    b_rnn = _pad_to((params['b_ih'] + params['b_hh']).astype(f32), (HP,))[None, :]

    mask = (jnp.arange(S)[None, :] < _pad_to(lengths, (UP,))[:, None]).astype(f32)
    # subtract the batch base time in the *integer* domain so pairwise dt keeps
    # full precision (f32 ulp at epoch scale ~1.6e9 is ~128 s).
    t_rel = _pad_to(timestamp_inputs - jnp.min(timestamp_inputs), (UP, S)).astype(f32)
    loc = _pad_to(location_inputs.astype(f32), (UP, S, 2))
    sx = loc[..., 0]
    sy = loc[..., 1]

    # ---- fused kernel: RNN recurrence + flashback aggregation ----------------
    out_w = pl.pallas_call(
        _fused_rnn_flashback_kernel,
        out_shape=jax.ShapeDtypeStruct((UP, S, HP), bf16),
        grid=(n_ub,),
        in_specs=[
            pl.BlockSpec((S, TU, HP), lambda u: (0, u, 0)),
            pl.BlockSpec((HP, HP), lambda u: (0, 0)),
            pl.BlockSpec((HP, HP), lambda u: (0, 0)),
            pl.BlockSpec((1, HP), lambda u: (0, 0)),
            pl.BlockSpec((TU, S), lambda u: (u, 0)),
            pl.BlockSpec((TU, S), lambda u: (u, 0)),
            pl.BlockSpec((TU, S), lambda u: (u, 0)),
            pl.BlockSpec((TU, S), lambda u: (u, 0)),
        ],
        out_specs=pl.BlockSpec((TU, S, HP), lambda u: (u, 0, 0)),
        scratch_shapes=[
            pltpu.VMEM((S, TU, HP), f32),   # hoisted input projection
            pltpu.VMEM((TU, S, HP), f32),   # hidden states (never hit HBM)
        ],
        compiler_params=cp,
    )(x_emb_t, w_ih_t, w_hh_t, b_rnn, t_rel, sx, sy, mask)

    # ---- kernel 2: split FC (no (U,S,2H) concat through HBM) + softmax -------
    p_u = params['user_w'][active_user]                           # (U, H) f32
    p_u_p = _pad_to(p_u, (UP, HP)).astype(bf16)
    w_hist = _pad_to(params['fc_w'][:, :H].T.astype(bf16), (HP, PP))
    w_user = _pad_to(params['fc_w'][:, H:].T.astype(bf16), (HP, PP))
    fc_b = jnp.full((PP,), -1e30, f32).at[:P].set(params['fc_b'].astype(f32))[None, :]

    y = pl.pallas_call(
        _fc_softmax_kernel,
        out_shape=jax.ShapeDtypeStruct((UP, S, PP), f32),
        grid=(n_ub,),
        in_specs=[
            pl.BlockSpec((TU, S, HP), lambda u: (u, 0, 0)),
            pl.BlockSpec((TU, HP), lambda u: (u, 0)),
            pl.BlockSpec((HP, PP), lambda u: (0, 0)),
            pl.BlockSpec((HP, PP), lambda u: (0, 0)),
            pl.BlockSpec((1, PP), lambda u: (0, 0)),
        ],
        out_specs=pl.BlockSpec((TU, S, PP), lambda u: (u, 0, 0)),
        compiler_params=cp,
    )(out_w, p_u_p, w_hist, w_user, fc_b)

    y_linear = y[:U, :, :P]
    # out_pu is a required module output; built once here, not fed back to kernels.
    out_pu = jnp.concatenate(
        [out_w[:U, :, :H].astype(f32),
         jnp.broadcast_to(p_u[:, None, :], (U, S, H)).astype(f32)], axis=-1)
    return y_linear, out_pu


# ------------------------- pure-JAX reference --------------------------------

def flashback_reference(params, poi_inputs, lengths, timestamp_inputs,
                        location_inputs, active_user):
    U, S = poi_inputs.shape
    H = params['enc_w'].shape[1]
    x_emb = params['enc_w'][poi_inputs]                            # (U, S, H)

    def step(h, x_t):
        h = jnp.tanh(x_t @ params['w_ih'].T + params['b_ih']
                     + h @ params['w_hh'].T + params['b_hh'])
        return h, h

    _, out_tm = lax.scan(step, jnp.zeros((U, H), jnp.float32),
                         jnp.transpose(x_emb, (1, 0, 2)))
    out = jnp.transpose(out_tm, (1, 0, 2))                         # (U, S, H)
    valid = (jnp.arange(S)[None, :] < lengths[:, None]).astype(jnp.float32)
    out = out * valid[:, :, None]                                  # pad_packed_sequence zero-fill

    t_rel = (timestamp_inputs - jnp.min(timestamp_inputs)).astype(jnp.float32)
    dt = jnp.maximum(t_rel[:, :, None] - t_rel[:, None, :], 0.0)
    diff = location_inputs[:, :, None, :] - location_inputs[:, None, :, :]
    ds = jnp.sqrt(jnp.sum(diff * diff, axis=-1))
    w = f_t(dt) * f_s(ds) + 1e-10
    causal = (jnp.arange(S)[:, None] >= jnp.arange(S)[None, :])[None, :, :]
    w = jnp.where(causal, w, 0.0)
    sum_w = jnp.maximum(jnp.sum(w, axis=2, keepdims=True), 1e-10)
    out_w = jnp.einsum('uij,ujh->uih', w, out) / sum_w

    p_u = params['user_w'][active_user]
    out_pu = jnp.concatenate(
        [out_w, jnp.broadcast_to(p_u[:, None, :], (U, S, H))], axis=-1)
    y = out_pu @ params['fc_w'].T + params['fc_b']
    return jax.nn.softmax(y, axis=-1), out_pu


# ------------------------------- main ----------------------------------------

if __name__ == "__main__":
    # small shapes consistent with the module
    INPUT_SIZE = 64    # number of POIs
    USER_COUNT = 8
    HIDDEN = 32
    U = 4              # batch of users (user_len)
    S = 8              # sequence length

    key = jax.random.PRNGKey(0)
    ks = jax.random.split(key, 12)

    b_rnn = 1.0 / math.sqrt(HIDDEN)
    b_fc = 1.0 / math.sqrt(2 * HIDDEN)
    params = dict(
        enc_w=jax.random.normal(ks[0], (INPUT_SIZE, HIDDEN), jnp.float32) * 0.1,
        user_w=jax.random.normal(ks[1], (USER_COUNT, HIDDEN), jnp.float32) * 0.1,
        w_ih=jax.random.uniform(ks[2], (HIDDEN, HIDDEN), jnp.float32, -b_rnn, b_rnn),
        w_hh=jax.random.uniform(ks[3], (HIDDEN, HIDDEN), jnp.float32, -b_rnn, b_rnn),
        b_ih=jax.random.uniform(ks[4], (HIDDEN,), jnp.float32, -b_rnn, b_rnn),
        b_hh=jax.random.uniform(ks[5], (HIDDEN,), jnp.float32, -b_rnn, b_rnn),
        fc_w=jax.random.uniform(ks[6], (INPUT_SIZE, 2 * HIDDEN), jnp.float32, -b_fc, b_fc),
        fc_b=jax.random.uniform(ks[7], (INPUT_SIZE,), jnp.float32, -b_fc, b_fc),
    )

    poi_inputs = jax.random.randint(ks[8], (U, S), 0, INPUT_SIZE)
    lengths = jnp.array([S, S - 2, S - 3, 2], dtype=jnp.int32)
    # integer epoch timestamps (seconds); the wrapper subtracts the batch min in
    # integer arithmetic before casting to f32, so pairwise dt keeps full precision.
    dt_sec = jax.random.randint(ks[9], (U, S), 600, 7200).astype(jnp.int32)
    timestamp_inputs = jnp.cumsum(dt_sec, axis=1) + jnp.int32(1_600_000_000)
    location_inputs = jax.random.uniform(ks[10], (U, S, 2), jnp.float32, 0.0, 1.0)
    active_user = jax.random.randint(ks[11], (U,), 0, USER_COUNT)

    args = (params, poi_inputs, lengths, timestamp_inputs, location_inputs, active_user)
    y_linear, out_pu = jax.jit(flashback_forward)(*args)
    y_linear = jax.block_until_ready(y_linear)
    out_pu = jax.block_until_ready(out_pu)

    # shape / sanity checks
    assert y_linear.shape == (U, S, INPUT_SIZE)
    assert out_pu.shape == (U, S, 2 * HIDDEN)
    assert bool(jnp.all(jnp.isfinite(y_linear)))
    assert bool(jnp.all(jnp.isfinite(out_pu)))
    # softmax rows sum to 1 (exact division in the kernel -> tight tolerance)
    assert bool(jnp.all(jnp.abs(jnp.sum(y_linear, axis=-1) - 1.0) < 1e-3))

    # parity with the pure-JAX (f32) reference; loose tolerances cover the
    # bf16 matmul operands / bf16 history writeback of the kernel path.
    ref_y, ref_pu = jax.jit(flashback_reference)(*args)
    ref_y = jax.block_until_ready(ref_y)
    ref_pu = jax.block_until_ready(ref_pu)
    assert bool(jnp.max(jnp.abs(y_linear - ref_y)) < 1e-2)
    assert bool(jnp.max(jnp.abs(out_pu - ref_pu)) < 5e-2)

    print("KERNEL_OK")
</pallas_src>

<mosaic_0001>
module attributes {stable_mosaic.version = 11 : i64} {
  func.func @_fused_rnn_flashback_kernel(%arg0: i32, %arg1: memref<8x16x128xbf16, #tpu.memory_space<vmem>>, %arg2: memref<128x128xbf16, #tpu.memory_space<vmem>>, %arg3: memref<128x128xbf16, #tpu.memory_space<vmem>>, %arg4: memref<1x128xf32, #tpu.memory_space<vmem>>, %arg5: memref<16x8xf32, #tpu.memory_space<vmem>>, %arg6: memref<16x8xf32, #tpu.memory_space<vmem>>, %arg7: memref<16x8xf32, #tpu.memory_space<vmem>>, %arg8: memref<16x8xf32, #tpu.memory_space<vmem>>, %arg9: memref<16x8x128xbf16, #tpu.memory_space<vmem>>, %arg10: memref<8x16x128xf32, #tpu.memory_space<vmem>>, %arg11: memref<16x8x128xf32, #tpu.memory_space<vmem>>) attributes {dimension_semantics = [#tpu.dimension_semantics<parallel>], iteration_bounds = array<i64: 1>, scalar_prefetch = 0 : i64, scratch_operands = 2 : i64, tpu.core_type = #tpu.core_type<tc>, window_params = [{transform_indices = @transform_0, window_bounds = array<i64: 8, 16, 128>}, {pipeline_mode = #tpu.pipeline_mode<synchronous>, transform_indices = @transform_1, window_bounds = array<i64: 128, 128>}, {pipeline_mode = #tpu.pipeline_mode<synchronous>, transform_indices = @transform_2, window_bounds = array<i64: 128, 128>}, {pipeline_mode = #tpu.pipeline_mode<synchronous>, transform_indices = @transform_3, window_bounds = array<i64: 1, 128>}, {transform_indices = @transform_4, window_bounds = array<i64: 16, 8>}, {transform_indices = @transform_5, window_bounds = array<i64: 16, 8>}, {transform_indices = @transform_6, window_bounds = array<i64: 16, 8>}, {transform_indices = @transform_7, window_bounds = array<i64: 16, 8>}, {transform_indices = @transform_8, window_bounds = array<i64: 16, 8, 128>}]} {
    %c0 = arith.constant 0 : index
    %c0_0 = arith.constant 0 : index
    %c0_1 = arith.constant 0 : index
    %0 = vector.load %arg1[%c0, %c0_0, %c0_1] : memref<8x16x128xbf16, #tpu.memory_space<vmem>>, vector<8x16x128xbf16>
    %1 = vector.shape_cast %0 : vector<8x16x128xbf16> to vector<128x128xbf16>
    %c0_2 = arith.constant 0 : index
    %c0_3 = arith.constant 0 : index
    %2 = vector.load %arg2[%c0_2, %c0_3] : memref<128x128xbf16, #tpu.memory_space<vmem>>, vector<128x128xbf16>
    %cst = arith.constant dense<0.000000e+00> : vector<128x128xf32>
    %3 = tpu.matmul %1, %2, %cst {dimension_numbers = #tpu.dot_dimension_numbers<[1], [0], [0], [1], [0, 0, 1, 1], [], []>} : vector<128x128xbf16>, vector<128x128xbf16>, vector<128x128xf32> -> vector<128x128xf32>
    %c0_4 = arith.constant 0 : index
    %c0_5 = arith.constant 0 : index
    %4 = vector.load %arg4[%c0_4, %c0_5] : memref<1x128xf32, #tpu.memory_space<vmem>>, vector<1x128xf32>
    %5 = vector.broadcast %4 : vector<1x128xf32> to vector<128x128xf32>
    %6 = arith.addf %3, %5 : vector<128x128xf32>
    %7 = vector.shape_cast %6 : vector<128x128xf32> to vector<8x16x128xf32>
    %c0_6 = arith.constant 0 : index
    %c0_7 = arith.constant 0 : index
    %c0_8 = arith.constant 0 : index
    %8 = vector.load %arg10[%c0_6, %c0_7, %c0_8] : memref<8x16x128xf32, #tpu.memory_space<vmem>>, vector<8x16x128xf32>
    tpu.vector_store %arg10[%c0_6, %c0_7, %c0_8], %7 {strides = array<i32>} : memref<8x16x128xf32, #tpu.memory_space<vmem>>, vector<8x16x128xf32>,
    %c0_9 = arith.constant 0 : index
    %c0_10 = arith.constant 0 : index
    %9 = vector.load %arg3[%c0_9, %c0_10] : memref<128x128xbf16, #tpu.memory_space<vmem>>, vector<128x128xbf16>
    %c0_11 = arith.constant 0 : index
    %c0_12 = arith.constant 0 : index
    %c0_13 = arith.constant 0 : index
    %10 = vector.load %arg10[%c0_11, %c0_12, %c0_13] : memref<8x16x128xf32, #tpu.memory_space<vmem>>, vector<1x16x128xf32>
    %11 = vector.shape_cast %10 : vector<1x16x128xf32> to vector<16x128xf32>
    %12 = math.tanh %11 : vector<16x128xf32>
    %c0_14 = arith.constant 0 : index
    %c0_15 = arith.constant 0 : index
    %c0_16 = arith.constant 0 : index
    %13 = vector.load %arg11[%c0_14, %c0_15, %c0_16] : memref<16x8x128xf32, #tpu.memory_space<vmem>>, vector<16x1x128xf32>
    %14 = vector.shape_cast %13 : vector<16x1x128xf32> to vector<16x128xf32>
    %15 = vector.shape_cast %12 : vector<16x128xf32> to vector<16x1x128xf32>
    tpu.vector_store %arg11[%c0_14, %c0_15, %c0_16], %15 {strides = array<i32>} : memref<16x8x128xf32, #tpu.memory_space<vmem>>, vector<16x1x128xf32>,
    %c1 = arith.constant 1 : index
    %c0_17 = arith.constant 0 : index
    %c0_18 = arith.constant 0 : index
    %16 = vector.load %arg10[%c1, %c0_17, %c0_18] : memref<8x16x128xf32, #tpu.memory_space<vmem>>, vector<1x16x128xf32>
    %17 = vector.shape_cast %16 : vector<1x16x128xf32> to vector<16x128xf32>
    %18 = arith.truncf %12 : vector<16x128xf32> to vector<16x128xbf16>
    %cst_19 = arith.constant dense<0.000000e+00> : vector<16x128xf32>
    %19 = tpu.matmul %18, %9, %cst_19 {dimension_numbers = #tpu.dot_dimension_numbers<[1], [0], [0], [1], [0, 0, 1, 1], [], []>} : vector<16x128xbf16>, vector<128x128xbf16>, vector<16x128xf32> -> vector<16x128xf32>
    %20 = arith.addf %17, %19 : vector<16x128xf32>
    %21 = math.tanh %20 : vector<16x128xf32>
    %c0_20 = arith.constant 0 : index
    %c1_21 = arith.constant 1 : index
    %c0_22 = arith.constant 0 : index
    %22 = vector.load %arg11[%c0_20, %c1_21, %c0_22] : memref<16x8x128xf32, #tpu.memory_space<vmem>>, vector<16x1x128xf32>
    %23 = vector.shape_cast %22 : vector<16x1x128xf32> to vector<16x128xf32>
    %24 = vector.shape_cast %21 : vector<16x128xf32> to vector<16x1x128xf32>
    tpu.vector_store %arg11[%c0_20, %c1_21, %c0_22], %24 {strides = array<i32>} : memref<16x8x128xf32, #tpu.memory_space<vmem>>, vector<16x1x128xf32>,
    %c2 = arith.constant 2 : index
    %c0_23 = arith.constant 0 : index
    %c0_24 = arith.constant 0 : index
    %25 = vector.load %arg10[%c2, %c0_23, %c0_24] : memref<8x16x128xf32, #tpu.memory_space<vmem>>, vector<1x16x128xf32>
    %26 = vector.shape_cast %25 : vector<1x16x128xf32> to vector<16x128xf32>
    %27 = arith.truncf %21 : vector<16x128xf32> to vector<16x128xbf16>
    %cst_25 = arith.constant dense<0.000000e+00> : vector<16x128xf32>
    %28 = tpu.matmul %27, %9, %cst_25 {dimension_numbers = #tpu.dot_dimension_numbers<[1], [0], [0], [1], [0, 0, 1, 1], [], []>} : vector<16x128xbf16>, vector<128x128xbf16>, vector<16x128xf32> -> vector<16x128xf32>
    %29 = arith.addf %26, %28 : vector<16x128xf32>
    %30 = math.tanh %29 : vector<16x128xf32>
    %c0_26 = arith.constant 0 : index
    %c2_27 = arith.constant 2 : index
    %c0_28 = arith.constant 0 : index
    %31 = vector.load %arg11[%c0_26, %c2_27, %c0_28] : memref<16x8x128xf32, #tpu.memory_space<vmem>>, vector<16x1x128xf32>
    %32 = vector.shape_cast %31 : vector<16x1x128xf32> to vector<16x128xf32>
    %33 = vector.shape_cast %30 : vector<16x128xf32> to vector<16x1x128xf32>
    tpu.vector_store %arg11[%c0_26, %c2_27, %c0_28], %33 {strides = array<i32>} : memref<16x8x128xf32, #tpu.memory_space<vmem>>, vector<16x1x128xf32>,
    %c3 = arith.constant 3 : index
    %c0_29 = arith.constant 0 : index
    %c0_30 = arith.constant 0 : index
    %34 = vector.load %arg10[%c3, %c0_29, %c0_30] : memref<8x16x128xf32, #tpu.memory_space<vmem>>, vector<1x16x128xf32>
    %35 = vector.shape_cast %34 : vector<1x16x128xf32> to vector<16x128xf32>
    %36 = arith.truncf %30 : vector<16x128xf32> to vector<16x128xbf16>
    %cst_31 = arith.constant dense<0.000000e+00> : vector<16x128xf32>
    %37 = tpu.matmul %36, %9, %cst_31 {dimension_numbers = #tpu.dot_dimension_numbers<[1], [0], [0], [1], [0, 0, 1, 1], [], []>} : vector<16x128xbf16>, vector<128x128xbf16>, vector<16x128xf32> -> vector<16x128xf32>
    %38 = arith.addf %35, %37 : vector<16x128xf32>
    %39 = math.tanh %38 : vector<16x128xf32>
    %c0_32 = arith.constant 0 : index
    %c3_33 = arith.constant 3 : index
    %c0_34 = arith.constant 0 : index
    %40 = vector.load %arg11[%c0_32, %c3_33, %c0_34] : memref<16x8x128xf32, #tpu.memory_space<vmem>>, vector<16x1x128xf32>
    %41 = vector.shape_cast %40 : vector<16x1x128xf32> to vector<16x128xf32>
    %42 = vector.shape_cast %39 : vector<16x128xf32> to vector<16x1x128xf32>
    tpu.vector_store %arg11[%c0_32, %c3_33, %c0_34], %42 {strides = array<i32>} : memref<16x8x128xf32, #tpu.memory_space<vmem>>, vector<16x1x128xf32>,
    %c4 = arith.constant 4 : index
    %c0_35 = arith.constant 0 : index
    %c0_36 = arith.constant 0 : index
    %43 = vector.load %arg10[%c4, %c0_35, %c0_36] : memref<8x16x128xf32, #tpu.memory_space<vmem>>, vector<1x16x128xf32>
    %44 = vector.shape_cast %43 : vector<1x16x128xf32> to vector<16x128xf32>
    %45 = arith.truncf %39 : vector<16x128xf32> to vector<16x128xbf16>
    %cst_37 = arith.constant dense<0.000000e+00> : vector<16x128xf32>
    %46 = tpu.matmul %45, %9, %cst_37 {dimension_numbers = #tpu.dot_dimension_numbers<[1], [0], [0], [1], [0, 0, 1, 1], [], []>} : vector<16x128xbf16>, vector<128x128xbf16>, vector<16x128xf32> -> vector<16x128xf32>
    %47 = arith.addf %44, %46 : vector<16x128xf32>
    %48 = math.tanh %47 : vector<16x128xf32>
    %c0_38 = arith.constant 0 : index
    %c4_39 = arith.constant 4 : index
    %c0_40 = arith.constant 0 : index
    %49 = vector.load %arg11[%c0_38, %c4_39, %c0_40] : memref<16x8x128xf32, #tpu.memory_space<vmem>>, vector<16x1x128xf32>
    %50 = vector.shape_cast %49 : vector<16x1x128xf32> to vector<16x128xf32>
    %51 = vector.shape_cast %48 : vector<16x128xf32> to vector<16x1x128xf32>
    tpu.vector_store %arg11[%c0_38, %c4_39, %c0_40], %51 {strides = array<i32>} : memref<16x8x128xf32, #tpu.memory_space<vmem>>, vector<16x1x128xf32>,
    %c5 = arith.constant 5 : index
    %c0_41 = arith.constant 0 : index
    %c0_42 = arith.constant 0 : index
    %52 = vector.load %arg10[%c5, %c0_41, %c0_42] : memref<8x16x128xf32, #tpu.memory_space<vmem>>, vector<1x16x128xf32>
    %53 = vector.shape_cast %52 : vector<1x16x128xf32> to vector<16x128xf32>
    %54 = arith.truncf %48 : vector<16x128xf32> to vector<16x128xbf16>
    %cst_43 = arith.constant dense<0.000000e+00> : vector<16x128xf32>
    %55 = tpu.matmul %54, %9, %cst_43 {dimension_numbers = #tpu.dot_dimension_numbers<[1], [0], [0], [1], [0, 0, 1, 1], [], []>} : vector<16x128xbf16>, vector<128x128xbf16>, vector<16x128xf32> -> vector<16x128xf32>
    %56 = arith.addf %53, %55 : vector<16x128xf32>
    %57 = math.tanh %56 : vector<16x128xf32>
    %c0_44 = arith.constant 0 : index
    %c5_45 = arith.constant 5 : index
    %c0_46 = arith.constant 0 : index
    %58 = vector.load %arg11[%c0_44, %c5_45, %c0_46] : memref<16x8x128xf32, #tpu.memory_space<vmem>>, vector<16x1x128xf32>
    %59 = vector.shape_cast %58 : vector<16x1x128xf32> to vector<16x128xf32>
    %60 = vector.shape_cast %57 : vector<16x128xf32> to vector<16x1x128xf32>
    tpu.vector_store %arg11[%c0_44, %c5_45, %c0_46], %60 {strides = array<i32>} : memref<16x8x128xf32, #tpu.memory_space<vmem>>, vector<16x1x128xf32>,
    %c6 = arith.constant 6 : index
    %c0_47 = arith.constant 0 : index
    %c0_48 = arith.constant 0 : index
    %61 = vector.load %arg10[%c6, %c0_47, %c0_48] : memref<8x16x128xf32, #tpu.memory_space<vmem>>, vector<1x16x128xf32>
    %62 = vector.shape_cast %61 : vector<1x16x128xf32> to vector<16x128xf32>
    %63 = arith.truncf %57 : vector<16x128xf32> to vector<16x128xbf16>
    %cst_49 = arith.constant dense<0.000000e+00> : vector<16x128xf32>
    %64 = tpu.matmul %63, %9, %cst_49 {dimension_numbers = #tpu.dot_dimension_numbers<[1], [0], [0], [1], [0, 0, 1, 1], [], []>} : vector<16x128xbf16>, vector<128x128xbf16>, vector<16x128xf32> -> vector<16x128xf32>
    %65 = arith.addf %62, %64 : vector<16x128xf32>
    %66 = math.tanh %65 : vector<16x128xf32>
    %c0_50 = arith.constant 0 : index
    %c6_51 = arith.constant 6 : index
    %c0_52 = arith.constant 0 : index
    %67 = vector.load %arg11[%c0_50, %c6_51, %c0_52] : memref<16x8x128xf32, #tpu.memory_space<vmem>>, vector<16x1x128xf32>
    %68 = vector.shape_cast %67 : vector<16x1x128xf32> to vector<16x128xf32>
    %69 = vector.shape_cast %66 : vector<16x128xf32> to vector<16x1x128xf32>
    tpu.vector_store %arg11[%c0_50, %c6_51, %c0_52], %69 {strides = array<i32>} : memref<16x8x128xf32, #tpu.memory_space<vmem>>, vector<16x1x128xf32>,
    %c7 = arith.constant 7 : index
    %c0_53 = arith.constant 0 : index
    %c0_54 = arith.constant 0 : index
    %70 = vector.load %arg10[%c7, %c0_53, %c0_54] : memref<8x16x128xf32, #tpu.memory_space<vmem>>, vector<1x16x128xf32>
    %71 = vector.shape_cast %70 : vector<1x16x128xf32> to vector<16x128xf32>
    %72 = arith.truncf %66 : vector<16x128xf32> to vector<16x128xbf16>
    %cst_55 = arith.constant dense<0.000000e+00> : vector<16x128xf32>
    %73 = tpu.matmul %72, %9, %cst_55 {dimension_numbers = #tpu.dot_dimension_numbers<[1], [0], [0], [1], [0, 0, 1, 1], [], []>} : vector<16x128xbf16>, vector<128x128xbf16>, vector<16x128xf32> -> vector<16x128xf32>
    %74 = arith.addf %71, %73 : vector<16x128xf32>
    %75 = math.tanh %74 : vector<16x128xf32>
    %c0_56 = arith.constant 0 : index
    %c7_57 = arith.constant 7 : index
    %c0_58 = arith.constant 0 : index
    %76 = vector.load %arg11[%c0_56, %c7_57, %c0_58] : memref<16x8x128xf32, #tpu.memory_space<vmem>>, vector<16x1x128xf32>
    %77 = vector.shape_cast %76 : vector<16x1x128xf32> to vector<16x128xf32>
    %78 = vector.shape_cast %75 : vector<16x128xf32> to vector<16x1x128xf32>
    tpu.vector_store %arg11[%c0_56, %c7_57, %c0_58], %78 {strides = array<i32>} : memref<16x8x128xf32, #tpu.memory_space<vmem>>, vector<16x1x128xf32>,
    %c0_59 = arith.constant 0 : index
    %c0_60 = arith.constant 0 : index
    %79 = vector.load %arg5[%c0_59, %c0_60] : memref<16x8xf32, #tpu.memory_space<vmem>>, vector<16x8xf32>
    %c0_61 = arith.constant 0 : index
    %c0_62 = arith.constant 0 : index
    %80 = vector.load %arg6[%c0_61, %c0_62] : memref<16x8xf32, #tpu.memory_space<vmem>>, vector<16x8xf32>
    %c0_63 = arith.constant 0 : index
    %c0_64 = arith.constant 0 : index
    %81 = vector.load %arg7[%c0_63, %c0_64] : memref<16x8xf32, #tpu.memory_space<vmem>>, vector<16x8xf32>
    %c0_65 = arith.constant 0 : index
    %c0_66 = arith.constant 0 : index
    %82 = vector.load %arg8[%c0_65, %c0_66] : memref<16x8xf32, #tpu.memory_space<vmem>>, vector<16x8xf32>
    %83 = vector.shape_cast %79 : vector<16x8xf32> to vector<16x8x1xf32>
    %84 = vector.shape_cast %79 : vector<16x8xf32> to vector<16x1x8xf32>
    %85 = vector.broadcast %83 : vector<16x8x1xf32> to vector<16x8x8xf32>
    %86 = vector.broadcast %84 : vector<16x1x8xf32> to vector<16x8x8xf32>
    %87 = arith.subf %85, %86 : vector<16x8x8xf32>
    %cst_67 = arith.constant 0.000000e+00 : f32
    %88 = vector.broadcast %cst_67 : f32 to vector<16x8x8xf32>
    %89 = arith.maximumf %87, %88 : vector<16x8x8xf32>
    %90 = vector.shape_cast %80 : vector<16x8xf32> to vector<16x8x1xf32>
    %91 = vector.shape_cast %80 : vector<16x8xf32> to vector<16x1x8xf32>
    %92 = vector.broadcast %90 : vector<16x8x1xf32> to vector<16x8x8xf32>
    %93 = vector.broadcast %91 : vector<16x1x8xf32> to vector<16x8x8xf32>
    %94 = arith.subf %92, %93 : vector<16x8x8xf32>
    %95 = arith.mulf %94, %94 : vector<16x8x8xf32>
    %96 = vector.shape_cast %81 : vector<16x8xf32> to vector<16x8x1xf32>
    %97 = vector.shape_cast %81 : vector<16x8xf32> to vector<16x1x8xf32>
    %98 = vector.broadcast %96 : vector<16x8x1xf32> to vector<16x8x8xf32>
    %99 = vector.broadcast %97 : vector<16x1x8xf32> to vector<16x8x8xf32>
    %100 = arith.subf %98, %99 : vector<16x8x8xf32>
    %101 = arith.mulf %100, %100 : vector<16x8x8xf32>
    %102 = arith.addf %95, %101 : vector<16x8x8xf32>
    %103 = math.sqrt %102 : vector<16x8x8xf32>
    %cst_68 = arith.constant 7.2722054E-5 : f32
    %104 = vector.broadcast %cst_68 : f32 to vector<16x8x8xf32>
    %105 = arith.mulf %89, %104 : vector<16x8x8xf32>
    %106 = math.cos %105 : vector<16x8x8xf32>
    %cst_69 = arith.constant 1.000000e+00 : f32
    %107 = vector.broadcast %cst_69 : f32 to vector<16x8x8xf32>
    %108 = arith.addf %106, %107 : vector<16x8x8xf32>
    %cst_70 = arith.constant 5.000000e-01 : f32
    %109 = vector.broadcast %cst_70 : f32 to vector<16x8x8xf32>
    %110 = arith.mulf %109, %108 : vector<16x8x8xf32>
    %cst_71 = arith.constant 1.15740738E-6 : f32
    %111 = vector.broadcast %cst_71 : f32 to vector<16x8x8xf32>
    %112 = arith.mulf %89, %111 : vector<16x8x8xf32>
    %cst_72 = arith.constant 1.000000e+00 : f32
    %113 = vector.broadcast %cst_72 : f32 to vector<16x8x8xf32>
    %114 = arith.mulf %103, %113 : vector<16x8x8xf32>
    %115 = arith.addf %112, %114 : vector<16x8x8xf32>
    %cst_73 = arith.constant 0.000000e+00 : f32
    %116 = vector.broadcast %cst_73 : f32 to vector<16x8x8xf32>
    %117 = arith.subf %116, %115 : vector<16x8x8xf32>
    %118 = math.exp %117 : vector<16x8x8xf32>
    %119 = arith.mulf %110, %118 : vector<16x8x8xf32>
    %cst_74 = arith.constant 1.000000e-10 : f32
    %120 = vector.broadcast %cst_74 : f32 to vector<16x8x8xf32>
    %121 = arith.addf %119, %120 : vector<16x8x8xf32>
    %122 = tpu.iota {dimensions = array<i32: 0>} : vector<8x8xi32>
    %123 = tpu.iota {dimensions = array<i32: 1>} : vector<8x8xi32>
    %124 = arith.cmpi sle, %123, %122 : vector<8x8xi32>
    %125 = vector.shape_cast %124 : vector<8x8xi1> to vector<1x8x8xi1>
    %cst_75 = arith.constant 0.000000e+00 : f32
    %126 = vector.shape_cast %125 : vector<1x8x8xi1> to vector<1x8x8xi1>
    %127 = vector.broadcast %126 : vector<1x8x8xi1> to vector<16x8x8xi1>
    %128 = vector.broadcast %cst_75 : f32 to vector<16x8x8xf32>
    %129 = arith.select %127, %121, %128 : vector<16x8x8xi1>, vector<16x8x8xf32>
    %cst_76 = arith.constant dense<0.000000e+00> : vector<16x8xf32>
    %130 = vector.multi_reduction <add>, %129, %cst_76 [2] : vector<16x8x8xf32> to vector<16x8xf32>
    %131 = vector.shape_cast %130 : vector<16x8xf32> to vector<16x8x1xf32>
    %cst_77 = arith.constant 1.000000e-10 : f32
    %132 = vector.broadcast %cst_77 : f32 to vector<16x8x1xf32>
    %133 = arith.maximumf %131, %132 : vector<16x8x1xf32>
    %cst_78 = arith.constant 1.000000e+00 : f32
    %134 = vector.broadcast %cst_78 : f32 to vector<16x8x1xf32>
    %135 = arith.divf %134, %133 : vector<16x8x1xf32>
    %c0_79 = arith.constant 0 : index
    %c0_80 = arith.constant 0 : index
    %c0_81 = arith.constant 0 : index
    %136 = vector.load %arg11[%c0_79, %c0_80, %c0_81] : memref<16x8x128xf32, #tpu.memory_space<vmem>>, vector<16x8x128xf32>
    %137 = arith.truncf %136 : vector<16x8x128xf32> to vector<16x8x128xbf16>
    %138 = vector.broadcast %135 : vector<16x8x1xf32> to vector<16x8x8xf32>
    %139 = arith.mulf %129, %138 : vector<16x8x8xf32>
    %140 = vector.shape_cast %82 : vector<16x8xf32> to vector<16x1x8xf32>
    %141 = vector.broadcast %140 : vector<16x1x8xf32> to vector<16x8x8xf32>
    %142 = arith.mulf %139, %141 : vector<16x8x8xf32>
    %143 = arith.truncf %142 : vector<16x8x8xf32> to vector<16x8x8xbf16>
    "tpu.trace_start"() <{level = 10 : i32, message = "uij,ujh->uih"}> : () -> ()
    %cst_82 = arith.constant dense<0.000000e+00> : vector<16x8x128xf32>
    %144 = tpu.matmul %143, %137, %cst_82 {dimension_numbers = #tpu.dot_dimension_numbers<[2], [1], [1], [2], [0, 0, 0, 1, 1, 2], [0], [0]>} : vector<16x8x8xbf16>, vector<16x8x128xbf16>, vector<16x8x128xf32> -> vector<16x8x128xf32>
    "tpu.trace_stop"() : () -> ()
    %145 = arith.truncf %144 : vector<16x8x128xf32> to vector<16x8x128xbf16>
    %c0_83 = arith.constant 0 : index
    %c0_84 = arith.constant 0 : index
    %c0_85 = arith.constant 0 : index
    %146 = vector.load %arg9[%c0_83, %c0_84, %c0_85] : memref<16x8x128xbf16, #tpu.memory_space<vmem>>, vector<16x8x128xbf16>
    tpu.vector_store %arg9[%c0_83, %c0_84, %c0_85], %145 {strides = array<i32>} : memref<16x8x128xbf16, #tpu.memory_space<vmem>>, vector<16x8x128xbf16>,
    return
  }
  func.func @transform_0(%arg0: i32) -> (i32, i32, i32) {
    %c0_i32 = arith.constant 0 : i32
    %c0_i32_0 = arith.constant 0 : i32
    %c0_i32_1 = arith.constant 0 : i32
    return %c0_i32, %arg0, %c0_i32_0 : i32, i32, i32
  }
  func.func @transform_1(%arg0: i32) -> (i32, i32) {
    %c0_i32 = arith.constant 0 : i32
    %c0_i32_0 = arith.constant 0 : i32
    %c0_i32_1 = arith.constant 0 : i32
    return %c0_i32, %c0_i32_0 : i32, i32
  }
  func.func @transform_2(%arg0: i32) -> (i32, i32) {
    %c0_i32 = arith.constant 0 : i32
    %c0_i32_0 = arith.constant 0 : i32
    %c0_i32_1 = arith.constant 0 : i32
    return %c0_i32, %c0_i32_0 : i32, i32
  }
  func.func @transform_3(%arg0: i32) -> (i32, i32) {
    %c0_i32 = arith.constant 0 : i32
    %c0_i32_0 = arith.constant 0 : i32
    %c0_i32_1 = arith.constant 0 : i32
    return %c0_i32, %c0_i32_0 : i32, i32
  }
  func.func @transform_4(%arg0: i32) -> (i32, i32) {
    %c0_i32 = arith.constant 0 : i32
    %c0_i32_0 = arith.constant 0 : i32
    return %arg0, %c0_i32 : i32, i32
  }
  func.func @transform_5(%arg0: i32) -> (i32, i32) {
    %c0_i32 = arith.constant 0 : i32
    %c0_i32_0 = arith.constant 0 : i32
    return %arg0, %c0_i32 : i32, i32
  }
  func.func @transform_6(%arg0: i32) -> (i32, i32) {
    %c0_i32 = arith.constant 0 : i32
    %c0_i32_0 = arith.constant 0 : i32
    return %arg0, %c0_i32 : i32, i32
  }
  func.func @transform_7(%arg0: i32) -> (i32, i32) {
    %c0_i32 = arith.constant 0 : i32
    %c0_i32_0 = arith.constant 0 : i32
    return %arg0, %c0_i32 : i32, i32
  }
  func.func @transform_8(%arg0: i32) -> (i32, i32, i32) {
    %c0_i32 = arith.constant 0 : i32
    %c0_i32_0 = arith.constant 0 : i32
    %c0_i32_1 = arith.constant 0 : i32
    return %arg0, %c0_i32, %c0_i32_0 : i32, i32, i32
  }
}

module attributes {stable_mosaic.version = 11 : i64} {
  func.func @_fc_softmax_kernel(%arg0: i32, %arg1: memref<16x8x128xbf16, #tpu.memory_space<vmem>>, %arg2: memref<16x128xbf16, #tpu.memory_space<vmem>>, %arg3: memref<128x128xbf16, #tpu.memory_space<vmem>>, %arg4: memref<128x128xbf16, #tpu.memory_space<vmem>>, %arg5: memref<1x128xf32, #tpu.memory_space<vmem>>, %arg6: memref<16x8x128xf32, #tpu.memory_space<vmem>>) attributes {dimension_semantics = [#tpu.dimension_semantics<parallel>], iteration_bounds = array<i64: 1>, scalar_prefetch = 0 : i64, scratch_operands = 0 : i64, tpu.core_type = #tpu.core_type<tc>, window_params = [{transform_indices = @transform_0, window_bounds = array<i64: 16, 8, 128>}, {transform_indices = @transform_1, window_bounds = array<i64: 16, 128>}, {pipeline_mode = #tpu.pipeline_mode<synchronous>, transform_indices = @transform_2, window_bounds = array<i64: 128, 128>}, {pipeline_mode = #tpu.pipeline_mode<synchronous>, transform_indices = @transform_3, window_bounds = array<i64: 128, 128>}, {pipeline_mode = #tpu.pipeline_mode<synchronous>, transform_indices = @transform_4, window_bounds = array<i64: 1, 128>}, {transform_indices = @transform_5, window_bounds = array<i64: 16, 8, 128>}]} {
    %c0 = arith.constant 0 : index
    %c0_0 = arith.constant 0 : index
    %c0_1 = arith.constant 0 : index
    %0 = vector.load %arg1[%c0, %c0_0, %c0_1] : memref<16x8x128xbf16, #tpu.memory_space<vmem>>, vector<16x8x128xbf16>
    %1 = vector.shape_cast %0 : vector<16x8x128xbf16> to vector<128x128xbf16>
    %c0_2 = arith.constant 0 : index
    %c0_3 = arith.constant 0 : index
    %2 = vector.load %arg3[%c0_2, %c0_3] : memref<128x128xbf16, #tpu.memory_space<vmem>>, vector<128x128xbf16>
    %cst = arith.constant dense<0.000000e+00> : vector<128x128xf32>
    %3 = tpu.matmul %1, %2, %cst {dimension_numbers = #tpu.dot_dimension_numbers<[1], [0], [0], [1], [0, 0, 1, 1], [], []>} : vector<128x128xbf16>, vector<128x128xbf16>, vector<128x128xf32> -> vector<128x128xf32>
    %c0_4 = arith.constant 0 : index
    %c0_5 = arith.constant 0 : index
    %4 = vector.load %arg2[%c0_4, %c0_5] : memref<16x128xbf16, #tpu.memory_space<vmem>>, vector<16x128xbf16>
    %c0_6 = arith.constant 0 : index
    %c0_7 = arith.constant 0 : index
    %5 = vector.load %arg4[%c0_6, %c0_7] : memref<128x128xbf16, #tpu.memory_space<vmem>>, vector<128x128xbf16>
    %cst_8 = arith.constant dense<0.000000e+00> : vector<16x128xf32>
    %6 = tpu.matmul %4, %5, %cst_8 {dimension_numbers = #tpu.dot_dimension_numbers<[1], [0], [0], [1], [0, 0, 1, 1], [], []>} : vector<16x128xbf16>, vector<128x128xbf16>, vector<16x128xf32> -> vector<16x128xf32>
    %7 = vector.shape_cast %3 : vector<128x128xf32> to vector<16x8x128xf32>
    %8 = vector.shape_cast %6 : vector<16x128xf32> to vector<16x1x128xf32>
    %9 = vector.broadcast %8 : vector<16x1x128xf32> to vector<16x8x128xf32>
    %10 = arith.addf %7, %9 : vector<16x8x128xf32>
    %c0_9 = arith.constant 0 : index
    %c0_10 = arith.constant 0 : index
    %11 = vector.load %arg5[%c0_9, %c0_10] : memref<1x128xf32, #tpu.memory_space<vmem>>, vector<1x128xf32>
    %12 = vector.shape_cast %11 : vector<1x128xf32> to vector<1x1x128xf32>
    %13 = vector.broadcast %12 : vector<1x1x128xf32> to vector<16x8x128xf32>
    %14 = arith.addf %10, %13 : vector<16x8x128xf32>
    %cst_11 = arith.constant dense<0xFF800000> : vector<16x8xf32>
    %15 = vector.multi_reduction <maximumf>, %14, %cst_11 [2] : vector<16x8x128xf32> to vector<16x8xf32>
    %16 = vector.shape_cast %15 : vector<16x8xf32> to vector<16x8x1xf32>
    %17 = vector.broadcast %16 : vector<16x8x1xf32> to vector<16x8x128xf32>
    %18 = arith.subf %14, %17 : vector<16x8x128xf32>
    %19 = math.exp %18 : vector<16x8x128xf32>
    %cst_12 = arith.constant dense<0.000000e+00> : vector<16x8xf32>
    %20 = vector.multi_reduction <add>, %19, %cst_12 [2] : vector<16x8x128xf32> to vector<16x8xf32>
    %21 = vector.shape_cast %20 : vector<16x8xf32> to vector<16x8x1xf32>
    %22 = vector.broadcast %21 : vector<16x8x1xf32> to vector<16x8x128xf32>
    %23 = arith.divf %19, %22 : vector<16x8x128xf32>
    %c0_13 = arith.constant 0 : index
    %c0_14 = arith.constant 0 : index
    %c0_15 = arith.constant 0 : index
    %24 = vector.load %arg6[%c0_13, %c0_14, %c0_15] : memref<16x8x128xf32, #tpu.memory_space<vmem>>, vector<16x8x128xf32>
    tpu.vector_store %arg6[%c0_13, %c0_14, %c0_15], %23 {strides = array<i32>} : memref<16x8x128xf32, #tpu.memory_space<vmem>>, vector<16x8x128xf32>,
    return
  }
  func.func @transform_0(%arg0: i32) -> (i32, i32, i32) {
    %c0_i32 = arith.constant 0 : i32
    %c0_i32_0 = arith.constant 0 : i32
    %c0_i32_1 = arith.constant 0 : i32
    return %arg0, %c0_i32, %c0_i32_0 : i32, i32, i32
  }
  func.func @transform_1(%arg0: i32) -> (i32, i32) {
    %c0_i32 = arith.constant 0 : i32
    %c0_i32_0 = arith.constant 0 : i32
    return %arg0, %c0_i32 : i32, i32
  }
  func.func @transform_2(%arg0: i32) -> (i32, i32) {
    %c0_i32 = arith.constant 0 : i32
    %c0_i32_0 = arith.constant 0 : i32
    %c0_i32_1 = arith.constant 0 : i32
    return %c0_i32, %c0_i32_0 : i32, i32
  }
  func.func @transform_3(%arg0: i32) -> (i32, i32) {
    %c0_i32 = arith.constant 0 : i32
    %c0_i32_0 = arith.constant 0 : i32
    %c0_i32_1 = arith.constant 0 : i32
    return %c0_i32, %c0_i32_0 : i32, i32
  }
  func.func @transform_4(%arg0: i32) -> (i32, i32) {
    %c0_i32 = arith.constant 0 : i32
    %c0_i32_0 = arith.constant 0 : i32
    %c0_i32_1 = arith.constant 0 : i32
    return %c0_i32, %c0_i32_0 : i32, i32
  }
  func.func @transform_5(%arg0: i32) -> (i32, i32, i32) {
    %c0_i32 = arith.constant 0 : i32
    %c0_i32_0 = arith.constant 0 : i32
    %c0_i32_1 = arith.constant 0 : i32
    return %arg0, %c0_i32, %c0_i32_0 : i32, i32, i32
  }
}

</mosaic_0001>

<llo_original>
// kernel: flashback_forward.3
$region0: #{flashback_forward.3}
  #allocation0 [shape = 'u32[]', space=smem, size = 0x4, offset = 0x4, fixed_abs, tag = 'smem constant byte address 0x4 - core index']
  #allocation1 [shape = 'u32[144,128]{1,0:T(1,128)}', space=vmem, size = 0x12000, scoped, tag = 'internal scratch']
  %s0 = inlined_call_operand.vmem [shape: bf16[16,8,128], index: 0, kind: input, shape index: {}]
  %s1 = inlined_call_operand.vmem [shape: bf16[16,128], index: 1, kind: input, shape index: {}]
  %s2 = inlined_call_operand.vmem [shape: bf16[128,128], index: 2, kind: input, shape index: {}]
  %s3 = inlined_call_operand.vmem [shape: bf16[128,128], index: 3, kind: input, shape index: {}]
  %s4 = inlined_call_operand.vmem [shape: f32[1,128], index: 4, kind: input, shape index: {}]
  %s5 = inlined_call_operand.vmem [shape: f32[16,8,128], index: 5, kind: output, shape index: {}]
  %s6 = sld [smem:[#allocation0]]
  $region30: #{flashback_forward.3} parent=0
    _
  %s8 = ssub.s32 1, %s6
  %s9 = scalar_select 0, %s8, %s6
  // Predicated region
  $region2: #{flashback_forward.3} parent=0 // pred_check
    _
  $region3: #{flashback_forward.3} parent=0 // pred_check_branch
    %11 = sbr.rel (0) target = $region5
  $region4: #{flashback_forward.3} parent=0 // pred_region
    _
  $region5: #{flashback_forward.3} parent=0 // pred_fallthru
    _
  // Predicated region
  $region6: #{flashback_forward.3} parent=0 // pred_check
    _
  $region7: #{flashback_forward.3} parent=0 // pred_check_branch
    %13 = sbr.rel (0) target = $region9
  $region8: #{flashback_forward.3} parent=0 // pred_region
    _
  $region9: #{flashback_forward.3} parent=0 // pred_fallthru
    _
  // Predicated region
  $region10: #{flashback_forward.3} parent=0 // pred_check
    _
  $region11: #{flashback_forward.3} parent=0 // pred_check_branch
    %15 = sbr.rel (0) target = $region13
  $region12: #{flashback_forward.3} parent=0 // pred_region
    _
  $region13: #{flashback_forward.3} parent=0 // pred_fallthru
    _
  // Predicated region
  $region14: #{flashback_forward.3} parent=0 // pred_check
    _
  $region15: #{flashback_forward.3} parent=0 // pred_check_branch
    %17 = sbr.rel (0) target = $region17
  $region16: #{flashback_forward.3} parent=0 // pred_region
    _
  $region17: #{flashback_forward.3} parent=0 // pred_fallthru
    _
  // Predicated region
  $region18: #{flashback_forward.3} parent=0 // pred_check
    _
  $region19: #{flashback_forward.3} parent=0 // pred_check_branch
    %19 = sbr.rel (0) target = $region21
  $region20: #{flashback_forward.3} parent=0 // pred_region
    _
  $region21: #{flashback_forward.3} parent=0 // pred_fallthru
    _
  %v21 = vld [vmem:[%s0] sm:$0xf]
  %v22 = vld [vmem:[%s0 + $0x4] sm:$0xf]
  %v23 = vld [vmem:[%s0 + $0x8] sm:$0xf]
  %v24 = vld [vmem:[%s0 + $0xc] sm:$0xf]
  %v25 = vld [vmem:[%s0 + $0x10] sm:$0xf]
  %v26 = vld [vmem:[%s0 + $0x14] sm:$0xf]
  %v27 = vld [vmem:[%s0 + $0x18] sm:$0xf]
  %v28 = vld [vmem:[%s0 + $0x1c] sm:$0xf]
  %v29 = vld [vmem:[%s0 + $0x20] sm:$0xf]
  %v30 = vld [vmem:[%s0 + $0x24] sm:$0xf]
  %v31 = vld [vmem:[%s0 + $0x28] sm:$0xf]
  %v32 = vld [vmem:[%s0 + $0x2c] sm:$0xf]
  %v33 = vld [vmem:[%s0 + $0x30] sm:$0xf]
  %v34 = vld [vmem:[%s0 + $0x34] sm:$0xf]
  %v35 = vld [vmem:[%s0 + $0x38] sm:$0xf]
  %v36 = vld [vmem:[%s0 + $0x3c] sm:$0xf]
  %v37 = vld [vmem:[%s2] sm:$0xf]
  %v38 = vld [vmem:[%s2 + $0x4] sm:$0xf]
  %v39 = vld [vmem:[%s2 + $0x8] sm:$0xf]
  %v40 = vld [vmem:[%s2 + $0xc] sm:$0xf]
  %v41 = vld [vmem:[%s2 + $0x10] sm:$0xf]
  %v42 = vld [vmem:[%s2 + $0x14] sm:$0xf]
  %v43 = vld [vmem:[%s2 + $0x18] sm:$0xf]
  %v44 = vld [vmem:[%s2 + $0x1c] sm:$0xf]
  %v45 = vld [vmem:[%s2 + $0x20] sm:$0xf]
  %v46 = vld [vmem:[%s2 + $0x24] sm:$0xf]
  %v47 = vld [vmem:[%s2 + $0x28] sm:$0xf]
  %v48 = vld [vmem:[%s2 + $0x2c] sm:$0xf]
  %v49 = vld [vmem:[%s2 + $0x30] sm:$0xf]
  %v50 = vld [vmem:[%s2 + $0x34] sm:$0xf]
  %v51 = vld [vmem:[%s2 + $0x38] sm:$0xf]
  %v52 = vld [vmem:[%s2 + $0x3c] sm:$0xf]
  %v69 = vunpack.c.l.b16 %v21
  %v70 = vunpack.c.l.b16 %v22
  %v71 = vunpack.c.l.b16 %v23
  %v72 = vunpack.c.l.b16 %v24
  %v73 = vunpack.c.l.b16 %v25
  %v74 = vunpack.c.l.b16 %v26
  %v75 = vunpack.c.l.b16 %v27
  %v76 = vunpack.c.l.b16 %v28
  %v77 = vunpack.c.l.b16 %v29
  %v78 = vunpack.c.l.b16 %v30
  %v79 = vunpack.c.l.b16 %v31
  %v80 = vunpack.c.l.b16 %v32
  %v81 = vunpack.c.l.b16 %v33
  %v82 = vunpack.c.l.b16 %v34
  %v83 = vunpack.c.l.b16 %v35
  %v84 = vunpack.c.l.b16 %v36
  %v85 = vpack.c.b16 %v70, %v69
  %v86 = vpack.c.b16 %v72, %v71
  %v87 = vpack.c.b16 %v74, %v73
  %v88 = vpack.c.b16 %v76, %v75
  %v89 = vpack.c.b16 %v78, %v77
  %v90 = vpack.c.b16 %v80, %v79
  %v91 = vpack.c.b16 %v82, %v81
  %v92 = vpack.c.b16 %v84, %v83
  %v117 = vunpack.c.l.b16 %v37
  %v118 = vunpack.c.l.b16 %v38
  %v119 = vunpack.c.l.b16 %v39
  %v120 = vunpack.c.l.b16 %v40
  %v121 = vunpack.c.l.b16 %v41
  %v122 = vunpack.c.l.b16 %v42
  %v123 = vunpack.c.l.b16 %v43
  %v124 = vunpack.c.l.b16 %v44
  %v125 = vunpack.c.l.b16 %v45
  %v126 = vunpack.c.l.b16 %v46
  %v127 = vunpack.c.l.b16 %v47
  %v128 = vunpack.c.l.b16 %v48
  %v129 = vunpack.c.l.b16 %v49
  %v130 = vunpack.c.l.b16 %v50
  %v131 = vunpack.c.l.b16 %v51
  %v132 = vunpack.c.l.b16 %v52
  %v133 = vpack.c.b16 %v118, %v117
  %v134 = vpack.c.b16 %v120, %v119
  %v135 = vpack.c.b16 %v122, %v121
  %v136 = vpack.c.b16 %v124, %v123
  %v137 = vpack.c.b16 %v126, %v125
  %v138 = vpack.c.b16 %v128, %v127
  %v139 = vpack.c.b16 %v130, %v129
  %v140 = vpack.c.b16 %v132, %v131
  %149 = vmatprep.subr.bf16.mxu0 0
  %150 = vmatpush1.bf16.msra.mxu0 %v133
  %151 = vmatprep.subr.bf16.mxu0 0
  %152 = vmatpush1.bf16.msra.mxu0 %v134
  %153 = vmatprep.subr.bf16.mxu0 0
  %154 = vmatpush1.bf16.msra.mxu0 %v135
  %155 = vmatprep.subr.bf16.mxu0 0
  %156 = vmatpush1.bf16.msra.mxu0 %v136
  %157 = vmatprep.subr.bf16.mxu0 0
  %158 = vmatpush1.bf16.msra.mxu0 %v137
  %159 = vmatprep.subr.bf16.mxu0 0
  %160 = vmatpush1.bf16.msra.mxu0 %v138
  %161 = vmatprep.subr.bf16.mxu0 0
  %162 = vmatpush1.bf16.msra.mxu0 %v139
  %163 = vmatprep.subr.bf16.mxu0 0
  %164 = vmatpush1.bf16.msra.mxu0 %v140
  %165 = vmatprep.subr.bf16.mxu0 0
  %166 = vmatpush1.bf16.msra.mxu0 0
  %167 = vmatprep.subr.bf16.mxu0 0
  %168 = vmatpush1.bf16.msra.mxu0 0
  %169 = vmatprep.subr.bf16.mxu0 0
  %170 = vmatpush1.bf16.msra.mxu0 0
  %171 = vmatprep.subr.bf16.mxu0 0
  %172 = vmatpush1.bf16.msra.mxu0 0
  %173 = vmatprep.subr.bf16.mxu0 0
  %174 = vmatpush1.bf16.msra.mxu0 0
  %175 = vmatprep.subr.bf16.mxu0 0
  %176 = vmatpush1.bf16.msra.mxu0 0
  %177 = vmatprep.subr.bf16.mxu0 0
  %178 = vmatpush1.bf16.msra.mxu0 0
  %179 = vmatprep.subr.bf16.mxu0 0
  %180 = vmatpush1.bf16.msra.mxu0 0
  %181 = vmatprep.mubr.bf16.mxu0 0
  %182 = vmatmul.mubr.bf16.gmra.mrb[0].mxu0 %v85
  %v183 = vpop.f32.mrb[0].mxu0
  %v184 = vadd.f32 0.0, %v183
  %v185 = vpop.f32.mrb[0].mxu0
  %v186 = vpop.f32.mrb[0].mxu0
  %v187 = vadd.f32 0.0, %v186
  %v188 = vpop.f32.mrb[0].mxu0
  %189 = vmatprep.mubr.bf16.mxu0 0
  %190 = vmatmul.mubr.bf16.gmra.mrb[0].mxu0 %v86
  %v191 = vpop.f32.mrb[0].mxu0
  %v192 = vadd.f32 0.0, %v191
  %v193 = vpop.f32.mrb[0].mxu0
  %v194 = vpop.f32.mrb[0].mxu0
  %v195 = vadd.f32 0.0, %v194
  %v196 = vpop.f32.mrb[0].mxu0
  %197 = vmatprep.mubr.bf16.mxu0 0
  %198 = vmatmul.mubr.bf16.gmra.mrb[0].mxu0 %v87
  %v199 = vpop.f32.mrb[0].mxu0
  %v200 = vadd.f32 0.0, %v199
  %v201 = vpop.f32.mrb[0].mxu0
  %v202 = vpop.f32.mrb[0].mxu0
  %v203 = vadd.f32 0.0, %v202
  %v204 = vpop.f32.mrb[0].mxu0
  %205 = vmatprep.mubr.bf16.mxu0 0
  %206 = vmatmul.mubr.bf16.gmra.mrb[0].mxu0 %v88
  %v207 = vpop.f32.mrb[0].mxu0
  %v208 = vadd.f32 0.0, %v207
  %v209 = vpop.f32.mrb[0].mxu0
  %v210 = vpop.f32.mrb[0].mxu0
  %v211 = vadd.f32 0.0, %v210
  %v212 = vpop.f32.mrb[0].mxu0
  %213 = vmatprep.mubr.bf16.mxu0 0
  %214 = vmatmul.mubr.bf16.gmra.mrb[0].mxu0 %v89
  %v215 = vpop.f32.mrb[0].mxu0
  %v216 = vadd.f32 0.0, %v215
  %v217 = vpop.f32.mrb[0].mxu0
  %v218 = vpop.f32.mrb[0].mxu0
  %v219 = vadd.f32 0.0, %v218
  %v220 = vpop.f32.mrb[0].mxu0
  %221 = vmatprep.mubr.bf16.mxu0 0
  %222 = vmatmul.mubr.bf16.gmra.mrb[0].mxu0 %v90
  %v223 = vpop.f32.mrb[0].mxu0
  %v224 = vadd.f32 0.0, %v223
  %v225 = vpop.f32.mrb[0].mxu0
  %v226 = vpop.f32.mrb[0].mxu0
  %v227 = vadd.f32 0.0, %v226
  %v228 = vpop.f32.mrb[0].mxu0
  %229 = vmatprep.mubr.bf16.mxu0 0
  %230 = vmatmul.mubr.bf16.gmra.mrb[0].mxu0 %v91
  %v231 = vpop.f32.mrb[0].mxu0
  %v232 = vadd.f32 0.0, %v231
  %v233 = vpop.f32.mrb[0].mxu0
  %v234 = vpop.f32.mrb[0].mxu0
  %v235 = vadd.f32 0.0, %v234
  %v236 = vpop.f32.mrb[0].mxu0
  %237 = vmatprep.mubr.bf16.mxu0 0
  %238 = vmatmul.mubr.bf16.gmra.mrb[0].mxu0 %v92
  %v239 = vpop.f32.mrb[0].mxu0
  %v240 = vadd.f32 0.0, %v239
  %v241 = vpop.f32.mrb[0].mxu0
  %v242 = vpop.f32.mrb[0].mxu0
  %v243 = vadd.f32 0.0, %v242
  %v244 = vpop.f32.mrb[0].mxu0
  %245 = vdwg.mxu0
  %v246 = vld [vmem:[%s1] sm:$0xf]
  %v247 = vld [vmem:[%s1 + $0x4] sm:$0xf]
  %v248 = vld [vmem:[%s3] sm:$0xf]
  %v249 = vld [vmem:[%s3 + $0x4] sm:$0xf]
  %v250 = vld [vmem:[%s3 + $0x8] sm:$0xf]
  %v251 = vld [vmem:[%s3 + $0xc] sm:$0xf]
  %v252 = vld [vmem:[%s3 + $0x10] sm:$0xf]
  %v253 = vld [vmem:[%s3 + $0x14] sm:$0xf]
  %v254 = vld [vmem:[%s3 + $0x18] sm:$0xf]
  %v255 = vld [vmem:[%s3 + $0x1c] sm:$0xf]
  %v256 = vld [vmem:[%s3 + $0x20] sm:$0xf]
  %v257 = vld [vmem:[%s3 + $0x24] sm:$0xf]
  %v258 = vld [vmem:[%s3 + $0x28] sm:$0xf]
  %v259 = vld [vmem:[%s3 + $0x2c] sm:$0xf]
  %v260 = vld [vmem:[%s3 + $0x30] sm:$0xf]
  %v261 = vld [vmem:[%s3 + $0x34] sm:$0xf]
  %v262 = vld [vmem:[%s3 + $0x38] sm:$0xf]
  %v263 = vld [vmem:[%s3 + $0x3c] sm:$0xf]
  %v266 = vunpack.c.l.b16 %v246
  %v267 = vunpack.c.l.b16 %v247
  %v268 = vpack.c.b16 %v267, %v266
  %v286 = vunpack.c.l.b16 %v248
  %v287 = vunpack.c.l.b16 %v249
  %v288 = vunpack.c.l.b16 %v250
  %v289 = vunpack.c.l.b16 %v251
  %v290 = vunpack.c.l.b16 %v252
  %v291 = vunpack.c.l.b16 %v253
  %v292 = vunpack.c.l.b16 %v254
  %v293 = vunpack.c.l.b16 %v255
  %v294 = vunpack.c.l.b16 %v256
  %v295 = vunpack.c.l.b16 %v257
  %v296 = vunpack.c.l.b16 %v258
  %v297 = vunpack.c.l.b16 %v259
  %v298 = vunpack.c.l.b16 %v260
  %v299 = vunpack.c.l.b16 %v261
  %v300 = vunpack.c.l.b16 %v262
  %v301 = vunpack.c.l.b16 %v263
  %v302 = vpack.c.b16 %v287, %v286
  %v303 = vpack.c.b16 %v289, %v288
  %v304 = vpack.c.b16 %v291, %v290
  %v305 = vpack.c.b16 %v293, %v292
  %v306 = vpack.c.b16 %v295, %v294
  %v307 = vpack.c.b16 %v297, %v296
  %v308 = vpack.c.b16 %v299, %v298
  %v309 = vpack.c.b16 %v301, %v300
  %318 = vmatprep.subr.bf16.mxu0 0
  %319 = vmatpush1.bf16.msra.mxu0 %v302
  %320 = vmatprep.subr.bf16.mxu0 0
  %321 = vmatpush1.bf16.msra.mxu0 %v303
  %322 = vmatprep.subr.bf16.mxu0 0
  %323 = vmatpush1.bf16.msra.mxu0 %v304
  %324 = vmatprep.subr.bf16.mxu0 0
  %325 = vmatpush1.bf16.msra.mxu0 %v305
  %326 = vmatprep.subr.bf16.mxu0 0
  %327 = vmatpush1.bf16.msra.mxu0 %v306
  %328 = vmatprep.subr.bf16.mxu0 0
  %329 = vmatpush1.bf16.msra.mxu0 %v307
  %330 = vmatprep.subr.bf16.mxu0 0
  %331 = vmatpush1.bf16.msra.mxu0 %v308
  %332 = vmatprep.subr.bf16.mxu0 0
  %333 = vmatpush1.bf16.msra.mxu0 %v309
  %334 = vmatprep.subr.bf16.mxu0 0
  %335 = vmatpush1.bf16.msra.mxu0 0
  %336 = vmatprep.subr.bf16.mxu0 0
  %337 = vmatpush1.bf16.msra.mxu0 0
  %338 = vmatprep.subr.bf16.mxu0 0
  %339 = vmatpush1.bf16.msra.mxu0 0
  %340 = vmatprep.subr.bf16.mxu0 0
  %341 = vmatpush1.bf16.msra.mxu0 0
  %342 = vmatprep.subr.bf16.mxu0 0
  %343 = vmatpush1.bf16.msra.mxu0 0
  %344 = vmatprep.subr.bf16.mxu0 0
  %345 = vmatpush1.bf16.msra.mxu0 0
  %346 = vmatprep.subr.bf16.mxu0 0
  %347 = vmatpush1.bf16.msra.mxu0 0
  %348 = vmatprep.subr.bf16.mxu0 0
  %349 = vmatpush1.bf16.msra.mxu0 0
  %350 = vmatprep.mubr.bf16.mxu0 0
  %351 = vmatmul.mubr.bf16.gmra.mrb[0].mxu0 %v268
  %v352 = vpop.f32.mrb[0].mxu0
  %v353 = vadd.f32 0.0, %v352
  %v354 = vpop.f32.mrb[0].mxu0
  %v355 = vpop.f32.mrb[0].mxu0
  %v356 = vadd.f32 0.0, %v355
  %v357 = vpop.f32.mrb[0].mxu0
  %358 = vdwg.mxu0
  %v361 = vcombine.high %v353, %v353
  %v363 = vunpack.c.l.s4 1966171168
  %v364 = vunpack.c.0.s8 %v363
  %v365 = vlaneseq
  %v366 = vshrl.u32 %v365, 7
  %v367 = vsub.s32 %v364, %v366
  %v368 = vrot.slane %v353, %v367
  %v370 = vunpack.c.l.s4 1966171168
  %v371 = vunpack.c.0.s8 %v370
  %v372 = vlaneseq
  %v373 = vshrl.u32 %v372, 7
  %v374 = vsub.s32 %v371, %v373
  %v375 = vrot.slane %v361, %v374
  %v376 = vcombine.high %v368, %v368
  %v377 = vcombine.high %v375, %v375
  %v379 = vunpack.c.l.s4 1966171168
  %v380 = vunpack.c.0.s8 %v379
  %v381 = vlaneseq
  %v382 = vshrl.u32 %v381, 7
  %v383 = vsub.s32 %v380, %v382
  %v384 = vrot.slane %v368, %v383
  %v386 = vunpack.c.l.s4 1966171168
  %v387 = vunpack.c.0.s8 %v386
  %v388 = vlaneseq
  %v389 = vshrl.u32 %v388, 7
  %v390 = vsub.s32 %v387, %v389
  %v391 = vrot.slane %v375, %v390
  %v393 = vunpack.c.l.s4 1966171168
  %v394 = vunpack.c.0.s8 %v393
  %v395 = vlaneseq
  %v396 = vshrl.u32 %v395, 7
  %v397 = vsub.s32 %v394, %v396
  %v398 = vrot.slane %v376, %v397
  %v400 = vunpack.c.l.s4 1966171168
  %v401 = vunpack.c.0.s8 %v400
  %v402 = vlaneseq
  %v403 = vshrl.u32 %v402, 7
  %v404 = vsub.s32 %v401, %v403
  %v405 = vrot.slane %v377, %v404
  %v406 = vcombine.high %v384, %v384
  %v407 = vcombine.high %v391, %v391
  %v408 = vcombine.high %v398, %v398
  %v409 = vcombine.high %v405, %v405
  %v410 = vcombine.high %v356, %v356
  %v412 = vunpack.c.l.s4 1966171168
  %v413 = vunpack.c.0.s8 %v412
  %v414 = vlaneseq
  %v415 = vshrl.u32 %v414, 7
  %v416 = vsub.s32 %v413, %v415
  %v417 = vrot.slane %v356, %v416
  %v419 = vunpack.c.l.s4 1966171168
  %v420 = vunpack.c.0.s8 %v419
  %v421 = vlaneseq
  %v422 = vshrl.u32 %v421, 7
  %v423 = vsub.s32 %v420, %v422
  %v424 = vrot.slane %v410, %v423
  %v425 = vcombine.high %v417, %v417
  %v426 = vcombine.high %v424, %v424
  %v428 = vunpack.c.l.s4 1966171168
  %v429 = vunpack.c.0.s8 %v428
  %v430 = vlaneseq
  %v431 = vshrl.u32 %v430, 7
  %v432 = vsub.s32 %v429, %v431
  %v433 = vrot.slane %v417, %v432
  %v435 = vunpack.c.l.s4 1966171168
  %v436 = vunpack.c.0.s8 %v435
  %v437 = vlaneseq
  %v438 = vshrl.u32 %v437, 7
  %v439 = vsub.s32 %v436, %v438
  %v440 = vrot.slane %v424, %v439
  %v442 = vunpack.c.l.s4 1966171168
  %v443 = vunpack.c.0.s8 %v442
  %v444 = vlaneseq
  %v445 = vshrl.u32 %v444, 7
  %v446 = vsub.s32 %v443, %v445
  %v447 = vrot.slane %v425, %v446
  %v449 = vunpack.c.l.s4 1966171168
  %v450 = vunpack.c.0.s8 %v449
  %v451 = vlaneseq
  %v452 = vshrl.u32 %v451, 7
  %v453 = vsub.s32 %v450, %v452
  %v454 = vrot.slane %v426, %v453
  %v455 = vcombine.high %v433, %v433
  %v456 = vcombine.high %v440, %v440
  %v457 = vcombine.high %v447, %v447
  %v458 = vcombine.high %v454, %v454
  %v459 = vlaneseq
  %v460 = vshrl.u32 %v459, 7
  %v461 = vsub.s32 0, %v460
  %v462 = vrot.slane %v384, %v461
  %v463 = vlaneseq
  %v464 = vshrl.u32 %v463, 7
  %v465 = vsub.s32 0, %v464
  %v466 = vrot.slane %v398, %v465
  %v467 = vlaneseq
  %v468 = vshrl.u32 %v467, 7
  %v469 = vsub.s32 0, %v468
  %v470 = vrot.slane %v406, %v469
  %v471 = vlaneseq
  %v472 = vshrl.u32 %v471, 7
  %v473 = vsub.s32 0, %v472
  %v474 = vrot.slane %v408, %v473
  %v475 = vlaneseq
  %v476 = vshrl.u32 %v475, 7
  %v477 = vsub.s32 0, %v476
  %v478 = vrot.slane %v391, %v477
  %v479 = vlaneseq
  %v480 = vshrl.u32 %v479, 7
  %v481 = vsub.s32 0, %v480
  %v482 = vrot.slane %v405, %v481
  %v483 = vlaneseq
  %v484 = vshrl.u32 %v483, 7
  %v485 = vsub.s32 0, %v484
  %v486 = vrot.slane %v407, %v485
  %v487 = vlaneseq
  %v488 = vshrl.u32 %v487, 7
  %v489 = vsub.s32 0, %v488
  %v490 = vrot.slane %v409, %v489
  %v491 = vlaneseq
  %v492 = vshrl.u32 %v491, 7
  %v493 = vsub.s32 0, %v492
  %v494 = vrot.slane %v433, %v493
  %v495 = vlaneseq
  %v496 = vshrl.u32 %v495, 7
  %v497 = vsub.s32 0, %v496
  %v498 = vrot.slane %v447, %v497
  %v499 = vlaneseq
  %v500 = vshrl.u32 %v499, 7
  %v501 = vsub.s32 0, %v500
  %v502 = vrot.slane %v455, %v501
  %v503 = vlaneseq
  %v504 = vshrl.u32 %v503, 7
  %v505 = vsub.s32 0, %v504
  %v506 = vrot.slane %v457, %v505
  %v507 = vlaneseq
  %v508 = vshrl.u32 %v507, 7
  %v509 = vsub.s32 0, %v508
  %v510 = vrot.slane %v440, %v509
  %v511 = vlaneseq
  %v512 = vshrl.u32 %v511, 7
  %v513 = vsub.s32 0, %v512
  %v514 = vrot.slane %v454, %v513
  %v515 = vlaneseq
  %v516 = vshrl.u32 %v515, 7
  %v517 = vsub.s32 0, %v516
  %v518 = vrot.slane %v456, %v517
  %v519 = vlaneseq
  %v520 = vshrl.u32 %v519, 7
  %v521 = vsub.s32 0, %v520
  %v522 = vrot.slane %v458, %v521
  %v539 = vadd.f32 %v184, %v462
  %v540 = vadd.f32 %v187, %v466
  %v541 = vadd.f32 %v192, %v470
  %v542 = vadd.f32 %v195, %v474
  %v543 = vadd.f32 %v200, %v478
  %v544 = vadd.f32 %v203, %v482
  %v545 = vadd.f32 %v208, %v486
  %v546 = vadd.f32 %v211, %v490
  %v547 = vadd.f32 %v216, %v494
  %v548 = vadd.f32 %v219, %v498
  %v549 = vadd.f32 %v224, %v502
  %v550 = vadd.f32 %v227, %v506
  %v551 = vadd.f32 %v232, %v510
  %v552 = vadd.f32 %v235, %v514
  %v553 = vadd.f32 %v240, %v518
  %v554 = vadd.f32 %v243, %v522
  %v555 = vld [vmem:[%s4] sm:$0x1]
  %v557 = vlaneseq
  %v558 = vshrl.u32 %v557, 7
  %v559 = vsub.s32 0, %v558
  %v560 = vrot.slane %v555, %v559
  %v562 = vadd.f32 %v539, %v560
  %v563 = vadd.f32 %v540, %v560
  %v564 = vadd.f32 %v541, %v560
  %v565 = vadd.f32 %v542, %v560
  %v566 = vadd.f32 %v543, %v560
  %v567 = vadd.f32 %v544, %v560
  %v568 = vadd.f32 %v545, %v560
  %v569 = vadd.f32 %v546, %v560
  %v570 = vadd.f32 %v547, %v560
  %v571 = vadd.f32 %v548, %v560
  %v572 = vadd.f32 %v549, %v560
  %v573 = vadd.f32 %v550, %v560
  %v574 = vadd.f32 %v551, %v560
  %v575 = vadd.f32 %v552, %v560
  %v576 = vadd.f32 %v553, %v560
  %v577 = vadd.f32 %v554, %v560
  %578 = vmax.xlane.f32.xlu0 %v562
  %v579 = vpop.xlane.xlu0 %578
  %580 = vmax.xlane.f32.xlu0 %v563
  %v581 = vpop.xlane.xlu0 %580
  %582 = vmax.xlane.f32.xlu0 %v564
  %v583 = vpop.xlane.xlu0 %582
  %584 = vmax.xlane.f32.xlu0 %v565
  %v585 = vpop.xlane.xlu0 %584
  %586 = vmax.xlane.f32.xlu0 %v566
  %v587 = vpop.xlane.xlu0 %586
  %588 = vmax.xlane.f32.xlu0 %v567
  %v589 = vpop.xlane.xlu0 %588
  %590 = vmax.xlane.f32.xlu0 %v568
  %v591 = vpop.xlane.xlu0 %590
  %592 = vmax.xlane.f32.xlu0 %v569
  %v593 = vpop.xlane.xlu0 %592
  %594 = vmax.xlane.f32.xlu0 %v570
  %v595 = vpop.xlane.xlu0 %594
  %596 = vmax.xlane.f32.xlu0 %v571
  %v597 = vpop.xlane.xlu0 %596
  %598 = vmax.xlane.f32.xlu0 %v572
  %v599 = vpop.xlane.xlu0 %598
  %600 = vmax.xlane.f32.xlu0 %v573
  %v601 = vpop.xlane.xlu0 %600
  %602 = vmax.xlane.f32.xlu0 %v574
  %v603 = vpop.xlane.xlu0 %602
  %604 = vmax.xlane.f32.xlu0 %v575
  %v605 = vpop.xlane.xlu0 %604
  %606 = vmax.xlane.f32.xlu0 %v576
  %v607 = vpop.xlane.xlu0 %606
  %608 = vmax.xlane.f32.xlu0 %v577
  %v609 = vpop.xlane.xlu0 %608
  %v610 = vsub.f32 %v562, %v579
  %v611 = vsub.f32 %v563, %v581
  %v612 = vsub.f32 %v564, %v583
  %v613 = vsub.f32 %v565, %v585
  %v614 = vsub.f32 %v566, %v587
  %v615 = vsub.f32 %v567, %v589
  %v616 = vsub.f32 %v568, %v591
  %v617 = vsub.f32 %v569, %v593
  %v618 = vsub.f32 %v570, %v595
  %v619 = vsub.f32 %v571, %v597
  %v620 = vsub.f32 %v572, %v599
  %v621 = vsub.f32 %v573, %v601
  %v622 = vsub.f32 %v574, %v603
  %v623 = vsub.f32 %v575, %v605
  %v624 = vsub.f32 %v576, %v607
  %v625 = vsub.f32 %v577, %v609
  %v626 = vmul.f32 %v610, 1.442695
  %v627 = vpow.pop %v626
  %v628 = vmul.f32 %v611, 1.442695
  %v629 = vpow.pop %v628
  %v630 = vmul.f32 %v612, 1.442695
  %v631 = vpow.pop %v630
  %v632 = vmul.f32 %v613, 1.442695
  %v633 = vpow.pop %v632
  %v634 = vmul.f32 %v614, 1.442695
  %v635 = vpow.pop %v634
  %v636 = vmul.f32 %v615, 1.442695
  %v637 = vpow.pop %v636
  %v638 = vmul.f32 %v616, 1.442695
  %v639 = vpow.pop %v638
  %v640 = vmul.f32 %v617, 1.442695
  %v641 = vpow.pop %v640
  %v642 = vmul.f32 %v618, 1.442695
  %v643 = vpow.pop %v642
  %v644 = vmul.f32 %v619, 1.442695
  %v645 = vpow.pop %v644
  %v646 = vmul.f32 %v620, 1.442695
  %v647 = vpow.pop %v646
  %v648 = vmul.f32 %v621, 1.442695
  %v649 = vpow.pop %v648
  %v650 = vmul.f32 %v622, 1.442695
  %v651 = vpow.pop %v650
  %v652 = vmul.f32 %v623, 1.442695
  %v653 = vpow.pop %v652
  %v654 = vmul.f32 %v624, 1.442695
  %v655 = vpow.pop %v654
  %v656 = vmul.f32 %v625, 1.442695
  %v657 = vpow.pop %v656
  %658 = vadd.xlane.f32.xlu0 %v627
  %v659 = vpop.xlane.xlu0 %658
  %660 = vadd.xlane.f32.xlu0 %v629
  %v661 = vpop.xlane.xlu0 %660
  %662 = vadd.xlane.f32.xlu0 %v631
  %v663 = vpop.xlane.xlu0 %662
  %664 = vadd.xlane.f32.xlu0 %v633
  %v665 = vpop.xlane.xlu0 %664
  %666 = vadd.xlane.f32.xlu0 %v635
  %v667 = vpop.xlane.xlu0 %666
  %668 = vadd.xlane.f32.xlu0 %v637
  %v669 = vpop.xlane.xlu0 %668
  %670 = vadd.xlane.f32.xlu0 %v639
  %v671 = vpop.xlane.xlu0 %670
  %672 = vadd.xlane.f32.xlu0 %v641
  %v673 = vpop.xlane.xlu0 %672
  %674 = vadd.xlane.f32.xlu0 %v643
  %v675 = vpop.xlane.xlu0 %674
  %676 = vadd.xlane.f32.xlu0 %v645
  %v677 = vpop.xlane.xlu0 %676
  %678 = vadd.xlane.f32.xlu0 %v647
  %v679 = vpop.xlane.xlu0 %678
  %680 = vadd.xlane.f32.xlu0 %v649
  %v681 = vpop.xlane.xlu0 %680
  %682 = vadd.xlane.f32.xlu0 %v651
  %v683 = vpop.xlane.xlu0 %682
  %684 = vadd.xlane.f32.xlu0 %v653
  %v685 = vpop.xlane.xlu0 %684
  %686 = vadd.xlane.f32.xlu0 %v655
  %v687 = vpop.xlane.xlu0 %686
  %688 = vadd.xlane.f32.xlu0 %v657
  %v689 = vpop.xlane.xlu0 %688
  %v690 = vrcp.pop %v659
  %v691 = vmul.f32 %v627, %v690
  %v692 = vrcp.pop %v661
  %v693 = vmul.f32 %v629, %v692
  %v694 = vrcp.pop %v663
  %v695 = vmul.f32 %v631, %v694
  %v696 = vrcp.pop %v665
  %v697 = vmul.f32 %v633, %v696
  %v698 = vrcp.pop %v667
  %v699 = vmul.f32 %v635, %v698
  %v700 = vrcp.pop %v669
  %v701 = vmul.f32 %v637, %v700
  %v702 = vrcp.pop %v671
  %v703 = vmul.f32 %v639, %v702
  %v704 = vrcp.pop %v673
  %v705 = vmul.f32 %v641, %v704
  %v706 = vrcp.pop %v675
  %v707 = vmul.f32 %v643, %v706
  %v708 = vrcp.pop %v677
  %v709 = vmul.f32 %v645, %v708
  %v710 = vrcp.pop %v679
  %v711 = vmul.f32 %v647, %v710
  %v712 = vrcp.pop %v681
  %v713 = vmul.f32 %v649, %v712
  %v714 = vrcp.pop %v683
  %v715 = vmul.f32 %v651, %v714
  %v716 = vrcp.pop %v685
  %v717 = vmul.f32 %v653, %v716
  %v718 = vrcp.pop %v687
  %v719 = vmul.f32 %v655, %v718
  %v720 = vrcp.pop %v689
  %v721 = vmul.f32 %v657, %v720
  %722 = vst [vmem:[%s5] sm:$0xff] %v691
  %723 = vst [vmem:[%s5 + $0x8] sm:$0xff] %v693
  %724 = vst [vmem:[%s5 + $0x10] sm:$0xff] %v695
  %725 = vst [vmem:[%s5 + $0x18] sm:$0xff] %v697
  %726 = vst [vmem:[%s5 + $0x20] sm:$0xff] %v699
  %727 = vst [vmem:[%s5 + $0x28] sm:$0xff] %v701
  %728 = vst [vmem:[%s5 + $0x30] sm:$0xff] %v703
  %729 = vst [vmem:[%s5 + $0x38] sm:$0xff] %v705
  %730 = vst [vmem:[%s5 + $0x40] sm:$0xff] %v707
  %731 = vst [vmem:[%s5 + $0x48] sm:$0xff] %v709
  %732 = vst [vmem:[%s5 + $0x50] sm:$0xff] %v711
  %733 = vst [vmem:[%s5 + $0x58] sm:$0xff] %v713
  %734 = vst [vmem:[%s5 + $0x60] sm:$0xff] %v715
  %735 = vst [vmem:[%s5 + $0x68] sm:$0xff] %v717
  %736 = vst [vmem:[%s5 + $0x70] sm:$0xff] %v719
  %737 = vst [vmem:[%s5 + $0x78] sm:$0xff] %v721
  // Predicated region
  $region22: #{flashback_forward.3} parent=0 // pred_check
    _
  $region23: #{flashback_forward.3} parent=0 // pred_check_branch
    %739 = sbr.rel (0) target = $region25
  $region24: #{flashback_forward.3} parent=0 // pred_region
    _
  $region25: #{flashback_forward.3} parent=0 // pred_fallthru
    _
  // Predicated region
  $region26: #{flashback_forward.3} parent=0 // pred_check
    _
  $region27: #{flashback_forward.3} parent=0 // pred_check_branch
    %741 = sbr.rel (0) target = $region29
  $region28: #{flashback_forward.3} parent=0 // pred_region
    _
  $region29: #{flashback_forward.3} parent=0 // pred_fallthru
    _

// kernel: flashback_forward.2
$region0: #{flashback_forward.2}
  #allocation0 [shape = 'u32[]', space=smem, size = 0x4, offset = 0x4, fixed_abs, tag = 'smem constant byte address 0x4 - core index']
  #allocation1 [shape = 'u32[144,128]{1,0:T(1,128)}', space=vmem, size = 0x12000, scoped, tag = 'internal scratch']
  #allocation2 [shape = 'f32[8,16,128]{2,1,0:T(8,128)}', space=vmem, size = 0x10000, scoped, tag = 'scratch operand']
  #allocation3 [shape = 'f32[16,8,128]{2,1,0:T(8,128)}', space=vmem, size = 0x10000, scoped, tag = 'scratch operand']
  %s0 = inlined_call_operand.vmem [shape: bf16[8,16,128], index: 0, kind: input, shape index: {}]
  %s1 = inlined_call_operand.vmem [shape: bf16[128,128], index: 1, kind: input, shape index: {}]
  %s2 = inlined_call_operand.vmem [shape: bf16[128,128], index: 2, kind: input, shape index: {}]
  %s3 = inlined_call_operand.vmem [shape: f32[1,128], index: 3, kind: input, shape index: {}]
  %s4 = inlined_call_operand.vmem [shape: f32[16,8], index: 4, kind: input, shape index: {}]
  %s5 = inlined_call_operand.vmem [shape: f32[16,8], index: 5, kind: input, shape index: {}]
  %s6 = inlined_call_operand.vmem [shape: f32[16,8], index: 6, kind: input, shape index: {}]
  %s7 = inlined_call_operand.vmem [shape: f32[16,8], index: 7, kind: input, shape index: {}]
  %s8 = inlined_call_operand.vmem [shape: bf16[16,8,128], index: 8, kind: output, shape index: {}]
  %s9 = sld [smem:[#allocation0]]
  $region42: #{flashback_forward.2} parent=0
    _
  %s11 = ssub.s32 1, %s9
  %s12 = scalar_select 0, %s11, %s9
  // Predicated region
  $region2: #{flashback_forward.2} parent=0 // pred_check
    _
  $region3: #{flashback_forward.2} parent=0 // pred_check_branch
    %14 = sbr.rel (0) target = $region5
  $region4: #{flashback_forward.2} parent=0 // pred_region
    _
  $region5: #{flashback_forward.2} parent=0 // pred_fallthru
    _
  // Predicated region
  $region6: #{flashback_forward.2} parent=0 // pred_check
    _
  $region7: #{flashback_forward.2} parent=0 // pred_check_branch
    %16 = sbr.rel (0) target = $region9
  $region8: #{flashback_forward.2} parent=0 // pred_region
    _
  $region9: #{flashback_forward.2} parent=0 // pred_fallthru
    _
  // Predicated region
  $region10: #{flashback_forward.2} parent=0 // pred_check
    _
  $region11: #{flashback_forward.2} parent=0 // pred_check_branch
    %18 = sbr.rel (0) target = $region13
  $region12: #{flashback_forward.2} parent=0 // pred_region
    _
  $region13: #{flashback_forward.2} parent=0 // pred_fallthru
    _
  // Predicated region
  $region14: #{flashback_forward.2} parent=0 // pred_check
    _
  $region15: #{flashback_forward.2} parent=0 // pred_check_branch
    %20 = sbr.rel (0) target = $region17
  $region16: #{flashback_forward.2} parent=0 // pred_region
    _
  $region17: #{flashback_forward.2} parent=0 // pred_fallthru
    _
  // Predicated region
  $region18: #{flashback_forward.2} parent=0 // pred_check
    _
  $region19: #{flashback_forward.2} parent=0 // pred_check_branch
    %22 = sbr.rel (0) target = $region21
  $region20: #{flashback_forward.2} parent=0 // pred_region
    _
  $region21: #{flashback_forward.2} parent=0 // pred_fallthru
    _
  // Predicated region
  $region22: #{flashback_forward.2} parent=0 // pred_check
    _
  $region23: #{flashback_forward.2} parent=0 // pred_check_branch
    %24 = sbr.rel (0) target = $region25
  $region24: #{flashback_forward.2} parent=0 // pred_region
    _
  $region25: #{flashback_forward.2} parent=0 // pred_fallthru
    _
  // Predicated region
  $region26: #{flashback_forward.2} parent=0 // pred_check
    _
  $region27: #{flashback_forward.2} parent=0 // pred_check_branch
    %26 = sbr.rel (0) target = $region29
  $region28: #{flashback_forward.2} parent=0 // pred_region
    _
  $region29: #{flashback_forward.2} parent=0 // pred_fallthru
    _
  // Predicated region
  $region30: #{flashback_forward.2} parent=0 // pred_check
    _
  $region31: #{flashback_forward.2} parent=0 // pred_check_branch
    %28 = sbr.rel (0) target = $region33
  $region32: #{flashback_forward.2} parent=0 // pred_region
    _
  $region33: #{flashback_forward.2} parent=0 // pred_fallthru
    _
  %v30 = vld [vmem:[%s0] sm:$0xf]
  %v31 = vld [vmem:[%s0 + $0x4] sm:$0xf]
  %v32 = vld [vmem:[%s0 + $0x8] sm:$0xf]
  %v33 = vld [vmem:[%s0 + $0xc] sm:$0xf]
  %v34 = vld [vmem:[%s0 + $0x10] sm:$0xf]
  %v35 = vld [vmem:[%s0 + $0x14] sm:$0xf]
  %v36 = vld [vmem:[%s0 + $0x18] sm:$0xf]
  %v37 = vld [vmem:[%s0 + $0x1c] sm:$0xf]
  %v38 = vld [vmem:[%s0 + $0x20] sm:$0xf]
  %v39 = vld [vmem:[%s0 + $0x24] sm:$0xf]
  %v40 = vld [vmem:[%s0 + $0x28] sm:$0xf]
  %v41 = vld [vmem:[%s0 + $0x2c] sm:$0xf]
  %v42 = vld [vmem:[%s0 + $0x30] sm:$0xf]
  %v43 = vld [vmem:[%s0 + $0x34] sm:$0xf]
  %v44 = vld [vmem:[%s0 + $0x38] sm:$0xf]
  %v45 = vld [vmem:[%s0 + $0x3c] sm:$0xf]
  %v46 = vld [vmem:[%s1] sm:$0xf]
  %v47 = vld [vmem:[%s1 + $0x4] sm:$0xf]
  %v48 = vld [vmem:[%s1 + $0x8] sm:$0xf]
  %v49 = vld [vmem:[%s1 + $0xc] sm:$0xf]
  %v50 = vld [vmem:[%s1 + $0x10] sm:$0xf]
  %v51 = vld [vmem:[%s1 + $0x14] sm:$0xf]
  %v52 = vld [vmem:[%s1 + $0x18] sm:$0xf]
  %v53 = vld [vmem:[%s1 + $0x1c] sm:$0xf]
  %v54 = vld [vmem:[%s1 + $0x20] sm:$0xf]
  %v55 = vld [vmem:[%s1 + $0x24] sm:$0xf]
  %v56 = vld [vmem:[%s1 + $0x28] sm:$0xf]
  %v57 = vld [vmem:[%s1 + $0x2c] sm:$0xf]
  %v58 = vld [vmem:[%s1 + $0x30] sm:$0xf]
  %v59 = vld [vmem:[%s1 + $0x34] sm:$0xf]
  %v60 = vld [vmem:[%s1 + $0x38] sm:$0xf]
  %v61 = vld [vmem:[%s1 + $0x3c] sm:$0xf]
  %v62 = vld [vmem:[%s3] sm:$0x1]
  %v64 = vlaneseq
  %v65 = vshrl.u32 %v64, 7
  %v66 = vsub.s32 0, %v65
  %v67 = vrot.slane %v62, %v66
  %v85 = vunpack.c.l.b16 %v30
  %v86 = vunpack.c.l.b16 %v31
  %v87 = vunpack.c.l.b16 %v32
  %v88 = vunpack.c.l.b16 %v33
  %v89 = vunpack.c.l.b16 %v34
  %v90 = vunpack.c.l.b16 %v35
  %v91 = vunpack.c.l.b16 %v36
  %v92 = vunpack.c.l.b16 %v37
  %v93 = vunpack.c.l.b16 %v38
  %v94 = vunpack.c.l.b16 %v39
  %v95 = vunpack.c.l.b16 %v40
  %v96 = vunpack.c.l.b16 %v41
  %v97 = vunpack.c.l.b16 %v42
  %v98 = vunpack.c.l.b16 %v43
  %v99 = vunpack.c.l.b16 %v44
  %v100 = vunpack.c.l.b16 %v45
  %v101 = vpack.c.b16 %v86, %v85
  %v102 = vpack.c.b16 %v88, %v87
  %v103 = vpack.c.b16 %v90, %v89
  %v104 = vpack.c.b16 %v92, %v91
  %v105 = vpack.c.b16 %v94, %v93
  %v106 = vpack.c.b16 %v96, %v95
  %v107 = vpack.c.b16 %v98, %v97
  %v108 = vpack.c.b16 %v100, %v99
  %v133 = vunpack.c.l.b16 %v46
  %v134 = vunpack.c.l.b16 %v47
  %v135 = vunpack.c.l.b16 %v48
  %v136 = vunpack.c.l.b16 %v49
  %v137 = vunpack.c.l.b16 %v50
  %v138 = vunpack.c.l.b16 %v51
  %v139 = vunpack.c.l.b16 %v52
  %v140 = vunpack.c.l.b16 %v53
  %v141 = vunpack.c.l.b16 %v54
  %v142 = vunpack.c.l.b16 %v55
  %v143 = vunpack.c.l.b16 %v56
  %v144 = vunpack.c.l.b16 %v57
  %v145 = vunpack.c.l.b16 %v58
  %v146 = vunpack.c.l.b16 %v59
  %v147 = vunpack.c.l.b16 %v60
  %v148 = vunpack.c.l.b16 %v61
  %v149 = vpack.c.b16 %v134, %v133
  %v150 = vpack.c.b16 %v136, %v135
  %v151 = vpack.c.b16 %v138, %v137
  %v152 = vpack.c.b16 %v140, %v139
  %v153 = vpack.c.b16 %v142, %v141
  %v154 = vpack.c.b16 %v144, %v143
  %v155 = vpack.c.b16 %v146, %v145
  %v156 = vpack.c.b16 %v148, %v147
  %165 = vmatprep.subr.bf16.mxu0 0
  %166 = vmatpush1.bf16.msra.mxu0 %v149
  %167 = vmatprep.subr.bf16.mxu0 0
  %168 = vmatpush1.bf16.msra.mxu0 %v150
  %169 = vmatprep.subr.bf16.mxu0 0
  %170 = vmatpush1.bf16.msra.mxu0 %v151
  %171 = vmatprep.subr.bf16.mxu0 0
  %172 = vmatpush1.bf16.msra.mxu0 %v152
  %173 = vmatprep.subr.bf16.mxu0 0
  %174 = vmatpush1.bf16.msra.mxu0 %v153
  %175 = vmatprep.subr.bf16.mxu0 0
  %176 = vmatpush1.bf16.msra.mxu0 %v154
  %177 = vmatprep.subr.bf16.mxu0 0
  %178 = vmatpush1.bf16.msra.mxu0 %v155
  %179 = vmatprep.subr.bf16.mxu0 0
  %180 = vmatpush1.bf16.msra.mxu0 %v156
  %181 = vmatprep.subr.bf16.mxu0 0
  %182 = vmatpush1.bf16.msra.mxu0 0
  %183 = vmatprep.subr.bf16.mxu0 0
  %184 = vmatpush1.bf16.msra.mxu0 0
  %185 = vmatprep.subr.bf16.mxu0 0
  %186 = vmatpush1.bf16.msra.mxu0 0
  %187 = vmatprep.subr.bf16.mxu0 0
  %188 = vmatpush1.bf16.msra.mxu0 0
  %189 = vmatprep.subr.bf16.mxu0 0
  %190 = vmatpush1.bf16.msra.mxu0 0
  %191 = vmatprep.subr.bf16.mxu0 0
  %192 = vmatpush1.bf16.msra.mxu0 0
  %193 = vmatprep.subr.bf16.mxu0 0
  %194 = vmatpush1.bf16.msra.mxu0 0
  %195 = vmatprep.subr.bf16.mxu0 0
  %196 = vmatpush1.bf16.msra.mxu0 0
  %197 = vmatprep.mubr.bf16.mxu0 0
  %198 = vmatmul.mubr.bf16.gmra.mrb[0].mxu0 %v101
  %v199 = vpop.f32.mrb[0].mxu0
  %v200 = vadd.f32 %v67, %v199
  %v201 = vpop.f32.mrb[0].mxu0
  %v202 = vpop.f32.mrb[0].mxu0
  %v203 = vadd.f32 %v67, %v202
  %v204 = vpop.f32.mrb[0].mxu0
  %205 = vmatprep.mubr.bf16.mxu0 0
  %206 = vmatmul.mubr.bf16.gmra.mrb[0].mxu0 %v102
  %v207 = vpop.f32.mrb[0].mxu0
  %v208 = vadd.f32 %v67, %v207
  %v209 = vpop.f32.mrb[0].mxu0
  %v210 = vpop.f32.mrb[0].mxu0
  %v211 = vadd.f32 %v67, %v210
  %v212 = vpop.f32.mrb[0].mxu0
  %213 = vmatprep.mubr.bf16.mxu0 0
  %214 = vmatmul.mubr.bf16.gmra.mrb[0].mxu0 %v103
  %v215 = vpop.f32.mrb[0].mxu0
  %v216 = vadd.f32 %v67, %v215
  %v217 = vpop.f32.mrb[0].mxu0
  %v218 = vpop.f32.mrb[0].mxu0
  %v219 = vadd.f32 %v67, %v218
  %v220 = vpop.f32.mrb[0].mxu0
  %221 = vmatprep.mubr.bf16.mxu0 0
  %222 = vmatmul.mubr.bf16.gmra.mrb[0].mxu0 %v104
  %v223 = vpop.f32.mrb[0].mxu0
  %v224 = vadd.f32 %v67, %v223
  %v225 = vpop.f32.mrb[0].mxu0
  %v226 = vpop.f32.mrb[0].mxu0
  %v227 = vadd.f32 %v67, %v226
  %v228 = vpop.f32.mrb[0].mxu0
  %229 = vmatprep.mubr.bf16.mxu0 0
  %230 = vmatmul.mubr.bf16.gmra.mrb[0].mxu0 %v105
  %v231 = vpop.f32.mrb[0].mxu0
  %v232 = vadd.f32 %v67, %v231
  %v233 = vpop.f32.mrb[0].mxu0
  %v234 = vpop.f32.mrb[0].mxu0
  %v235 = vadd.f32 %v67, %v234
  %v236 = vpop.f32.mrb[0].mxu0
  %237 = vmatprep.mubr.bf16.mxu0 0
  %238 = vmatmul.mubr.bf16.gmra.mrb[0].mxu0 %v106
  %v239 = vpop.f32.mrb[0].mxu0
  %v240 = vadd.f32 %v67, %v239
  %v241 = vpop.f32.mrb[0].mxu0
  %v242 = vpop.f32.mrb[0].mxu0
  %v243 = vadd.f32 %v67, %v242
  %v244 = vpop.f32.mrb[0].mxu0
  %245 = vmatprep.mubr.bf16.mxu0 0
  %246 = vmatmul.mubr.bf16.gmra.mrb[0].mxu0 %v107
  %v247 = vpop.f32.mrb[0].mxu0
  %v248 = vadd.f32 %v67, %v247
  %v249 = vpop.f32.mrb[0].mxu0
  %v250 = vpop.f32.mrb[0].mxu0
  %v251 = vadd.f32 %v67, %v250
  %v252 = vpop.f32.mrb[0].mxu0
  %253 = vmatprep.mubr.bf16.mxu0 0
  %254 = vmatmul.mubr.bf16.gmra.mrb[0].mxu0 %v108
  %v255 = vpop.f32.mrb[0].mxu0
  %v256 = vadd.f32 %v67, %v255
  %v257 = vpop.f32.mrb[0].mxu0
  %v258 = vpop.f32.mrb[0].mxu0
  %v259 = vadd.f32 %v67, %v258
  %v260 = vpop.f32.mrb[0].mxu0
  %261 = vdwg.mxu0
  %262 = vst [vmem:[#allocation2] sm:$0xff] %v200
  %263 = vst [vmem:[#allocation2 + $0x8] sm:$0xff] %v203
  %264 = vst [vmem:[#allocation2 + $0x10] sm:$0xff] %v208
  %265 = vst [vmem:[#allocation2 + $0x18] sm:$0xff] %v211
  %266 = vst [vmem:[#allocation2 + $0x20] sm:$0xff] %v216
  %267 = vst [vmem:[#allocation2 + $0x28] sm:$0xff] %v219
  %268 = vst [vmem:[#allocation2 + $0x30] sm:$0xff] %v224
  %269 = vst [vmem:[#allocation2 + $0x38] sm:$0xff] %v227
  %270 = vst [vmem:[#allocation2 + $0x40] sm:$0xff] %v232
  %271 = vst [vmem:[#allocation2 + $0x48] sm:$0xff] %v235
  %272 = vst [vmem:[#allocation2 + $0x50] sm:$0xff] %v240
  %273 = vst [vmem:[#allocation2 + $0x58] sm:$0xff] %v243
  %274 = vst [vmem:[#allocation2 + $0x60] sm:$0xff] %v248
  %275 = vst [vmem:[#allocation2 + $0x68] sm:$0xff] %v251
  %276 = vst [vmem:[#allocation2 + $0x70] sm:$0xff] %v256
  %277 = vst [vmem:[#allocation2 + $0x78] sm:$0xff] %v259
  %v278 = vld [vmem:[%s2] sm:$0xf]
  %v279 = vld [vmem:[%s2 + $0x4] sm:$0xf]
  %v280 = vld [vmem:[%s2 + $0x8] sm:$0xf]
  %v281 = vld [vmem:[%s2 + $0xc] sm:$0xf]
  %v282 = vld [vmem:[%s2 + $0x10] sm:$0xf]
  %v283 = vld [vmem:[%s2 + $0x14] sm:$0xf]
  %v284 = vld [vmem:[%s2 + $0x18] sm:$0xf]
  %v285 = vld [vmem:[%s2 + $0x1c] sm:$0xf]
  %v286 = vld [vmem:[%s2 + $0x20] sm:$0xf]
  %v287 = vld [vmem:[%s2 + $0x24] sm:$0xf]
  %v288 = vld [vmem:[%s2 + $0x28] sm:$0xf]
  %v289 = vld [vmem:[%s2 + $0x2c] sm:$0xf]
  %v290 = vld [vmem:[%s2 + $0x30] sm:$0xf]
  %v291 = vld [vmem:[%s2 + $0x34] sm:$0xf]
  %v292 = vld [vmem:[%s2 + $0x38] sm:$0xf]
  %v293 = vld [vmem:[%s2 + $0x3c] sm:$0xf]
  %v294 = vld [vmem:[#allocation2] sm:$0xff]
  %v295 = vld [vmem:[#allocation2 + $0x8] sm:$0xff]
  %v296 = vtanh.pop %v294
  %v297 = vtanh.pop %v295
  %v300 = vcombine.high %v296, %v296
  %v302 = vunpack.c.l.s4 1966171168
  %v303 = vunpack.c.0.s8 %v302
  %v304 = vlaneseq
  %v305 = vshrl.u32 %v304, 7
  %v306 = vsub.s32 %v303, %v305
  %v307 = vrot.slane %v296, %v306
  %v309 = vunpack.c.l.s4 1966171168
  %v310 = vunpack.c.0.s8 %v309
  %v311 = vlaneseq
  %v312 = vshrl.u32 %v311, 7
  %v313 = vsub.s32 %v310, %v312
  %v314 = vrot.slane %v300, %v313
  %v315 = vcombine.high %v307, %v307
  %v316 = vcombine.high %v314, %v314
  %v318 = vunpack.c.l.s4 1966171168
  %v319 = vunpack.c.0.s8 %v318
  %v320 = vlaneseq
  %v321 = vshrl.u32 %v320, 7
  %v322 = vsub.s32 %v319, %v321
  %v323 = vrot.slane %v307, %v322
  %v325 = vunpack.c.l.s4 1966171168
  %v326 = vunpack.c.0.s8 %v325
  %v327 = vlaneseq
  %v328 = vshrl.u32 %v327, 7
  %v329 = vsub.s32 %v326, %v328
  %v330 = vrot.slane %v314, %v329
  %v332 = vunpack.c.l.s4 1966171168
  %v333 = vunpack.c.0.s8 %v332
  %v334 = vlaneseq
  %v335 = vshrl.u32 %v334, 7
  %v336 = vsub.s32 %v333, %v335
  %v337 = vrot.slane %v315, %v336
  %v339 = vunpack.c.l.s4 1966171168
  %v340 = vunpack.c.0.s8 %v339
  %v341 = vlaneseq
  %v342 = vshrl.u32 %v341, 7
  %v343 = vsub.s32 %v340, %v342
  %v344 = vrot.slane %v316, %v343
  %v345 = vcombine.high %v323, %v323
  %v346 = vcombine.high %v330, %v330
  %v347 = vcombine.high %v337, %v337
  %v348 = vcombine.high %v344, %v344
  %v349 = vcombine.high %v297, %v297
  %v351 = vunpack.c.l.s4 1966171168
  %v352 = vunpack.c.0.s8 %v351
  %v353 = vlaneseq
  %v354 = vshrl.u32 %v353, 7
  %v355 = vsub.s32 %v352, %v354
  %v356 = vrot.slane %v297, %v355
  %v358 = vunpack.c.l.s4 1966171168
  %v359 = vunpack.c.0.s8 %v358
  %v360 = vlaneseq
  %v361 = vshrl.u32 %v360, 7
  %v362 = vsub.s32 %v359, %v361
  %v363 = vrot.slane %v349, %v362
  %v364 = vcombine.high %v356, %v356
  %v365 = vcombine.high %v363, %v363
  %v367 = vunpack.c.l.s4 1966171168
  %v368 = vunpack.c.0.s8 %v367
  %v369 = vlaneseq
  %v370 = vshrl.u32 %v369, 7
  %v371 = vsub.s32 %v368, %v370
  %v372 = vrot.slane %v356, %v371
  %v374 = vunpack.c.l.s4 1966171168
  %v375 = vunpack.c.0.s8 %v374
  %v376 = vlaneseq
  %v377 = vshrl.u32 %v376, 7
  %v378 = vsub.s32 %v375, %v377
  %v379 = vrot.slane %v363, %v378
  %v381 = vunpack.c.l.s4 1966171168
  %v382 = vunpack.c.0.s8 %v381
  %v383 = vlaneseq
  %v384 = vshrl.u32 %v383, 7
  %v385 = vsub.s32 %v382, %v384
  %v386 = vrot.slane %v364, %v385
  %v388 = vunpack.c.l.s4 1966171168
  %v389 = vunpack.c.0.s8 %v388
  %v390 = vlaneseq
  %v391 = vshrl.u32 %v390, 7
  %v392 = vsub.s32 %v389, %v391
  %v393 = vrot.slane %v365, %v392
  %v394 = vcombine.high %v372, %v372
  %v395 = vcombine.high %v379, %v379
  %v396 = vcombine.high %v386, %v386
  %v397 = vcombine.high %v393, %v393
  %414 = vst [vmem:[#allocation3] sm:$0x1] %v323
  %415 = vst [vmem:[#allocation3 + $0x8] sm:$0x1] %v337
  %416 = vst [vmem:[#allocation3 + $0x10] sm:$0x1] %v345
  %417 = vst [vmem:[#allocation3 + $0x18] sm:$0x1] %v347
  %418 = vst [vmem:[#allocation3 + $0x20] sm:$0x1] %v330
  %419 = vst [vmem:[#allocation3 + $0x28] sm:$0x1] %v344
  %420 = vst [vmem:[#allocation3 + $0x30] sm:$0x1] %v346
  %421 = vst [vmem:[#allocation3 + $0x38] sm:$0x1] %v348
  %422 = vst [vmem:[#allocation3 + $0x40] sm:$0x1] %v372
  %423 = vst [vmem:[#allocation3 + $0x48] sm:$0x1] %v386
  %424 = vst [vmem:[#allocation3 + $0x50] sm:$0x1] %v394
  %425 = vst [vmem:[#allocation3 + $0x58] sm:$0x1] %v396
  %426 = vst [vmem:[#allocation3 + $0x60] sm:$0x1] %v379
  %427 = vst [vmem:[#allocation3 + $0x68] sm:$0x1] %v393
  %428 = vst [vmem:[#allocation3 + $0x70] sm:$0x1] %v395
  %429 = vst [vmem:[#allocation3 + $0x78] sm:$0x1] %v397
  %s430 = scalar_lea.vmem [#allocation2], 16
  %v431 = vld [vmem:[%s430] sm:$0xff]
  %v432 = vld [vmem:[%s430 + $0x8] sm:$0xff]
  %v433 = vpack.c.bf16 %v297, %v296
  %v450 = vunpack.c.l.b16 %v278
  %v451 = vunpack.c.l.b16 %v279
  %v452 = vunpack.c.l.b16 %v280
  %v453 = vunpack.c.l.b16 %v281
  %v454 = vunpack.c.l.b16 %v282
  %v455 = vunpack.c.l.b16 %v283
  %v456 = vunpack.c.l.b16 %v284
  %v457 = vunpack.c.l.b16 %v285
  %v458 = vunpack.c.l.b16 %v286
  %v459 = vunpack.c.l.b16 %v287
  %v460 = vunpack.c.l.b16 %v288
  %v461 = vunpack.c.l.b16 %v289
  %v462 = vunpack.c.l.b16 %v290
  %v463 = vunpack.c.l.b16 %v291
  %v464 = vunpack.c.l.b16 %v292
  %v465 = vunpack.c.l.b16 %v293
  %v466 = vpack.c.b16 %v451, %v450
  %v467 = vpack.c.b16 %v453, %v452
  %v468 = vpack.c.b16 %v455, %v454
  %v469 = vpack.c.b16 %v457, %v456
  %v470 = vpack.c.b16 %v459, %v458
  %v471 = vpack.c.b16 %v461, %v460
  %v472 = vpack.c.b16 %v463, %v462
  %v473 = vpack.c.b16 %v465, %v464
  %482 = vmatprep.subr.bf16.mxu0 0
  %483 = vmatpush1.bf16.msra.mxu0 %v466
  %484 = vmatprep.subr.bf16.mxu0 0
  %485 = vmatpush1.bf16.msra.mxu0 %v467
  %486 = vmatprep.subr.bf16.mxu0 0
  %487 = vmatpush1.bf16.msra.mxu0 %v468
  %488 = vmatprep.subr.bf16.mxu0 0
  %489 = vmatpush1.bf16.msra.mxu0 %v469
  %490 = vmatprep.subr.bf16.mxu0 0
  %491 = vmatpush1.bf16.msra.mxu0 %v470
  %492 = vmatprep.subr.bf16.mxu0 0
  %493 = vmatpush1.bf16.msra.mxu0 %v471
  %494 = vmatprep.subr.bf16.mxu0 0
  %495 = vmatpush1.bf16.msra.mxu0 %v472
  %496 = vmatprep.subr.bf16.mxu0 0
  %497 = vmatpush1.bf16.msra.mxu0 %v473
  %498 = vmatprep.subr.bf16.mxu0 0
  %499 = vmatpush1.bf16.msra.mxu0 0
  %500 = vmatprep.subr.bf16.mxu0 0
  %501 = vmatpush1.bf16.msra.mxu0 0
  %502 = vmatprep.subr.bf16.mxu0 0
  %503 = vmatpush1.bf16.msra.mxu0 0
  %504 = vmatprep.subr.bf16.mxu0 0
  %505 = vmatpush1.bf16.msra.mxu0 0
  %506 = vmatprep.subr.bf16.mxu0 0
  %507 = vmatpush1.bf16.msra.mxu0 0
  %508 = vmatprep.subr.bf16.mxu0 0
  %509 = vmatpush1.bf16.msra.mxu0 0
  %510 = vmatprep.subr.bf16.mxu0 0
  %511 = vmatpush1.bf16.msra.mxu0 0
  %512 = vmatprep.subr.bf16.mxu0 0
  %513 = vmatpush1.bf16.msra.mxu0 0
  %514 = vmatprep.mubr.bf16.mxu0 0
  %515 = vmatmul.mubr.bf16.gmra.mrb[0].mxu0 %v433
  %v516 = vpop.f32.mrb[0].mxu0
  %v517 = vadd.f32 0.0, %v516
  %v518 = vpop.f32.mrb[0].mxu0
  %v519 = vpop.f32.mrb[0].mxu0
  %v520 = vadd.f32 0.0, %v519
  %v521 = vpop.f32.mrb[0].mxu0
  %522 = vdwg.mxu0
  %v523 = vadd.f32 %v431, %v517
  %v524 = vadd.f32 %v432, %v520
  %v525 = vtanh.pop %v523
  %v526 = vtanh.pop %v524
  %v529 = vcombine.high %v525, %v525
  %v531 = vunpack.c.l.s4 1966171168
  %v532 = vunpack.c.0.s8 %v531
  %v533 = vlaneseq
  %v534 = vshrl.u32 %v533, 7
  %v535 = vsub.s32 %v532, %v534
  %v536 = vrot.slane %v525, %v535
  %v538 = vunpack.c.l.s4 1966171168
  %v539 = vunpack.c.0.s8 %v538
  %v540 = vlaneseq
  %v541 = vshrl.u32 %v540, 7
  %v542 = vsub.s32 %v539, %v541
  %v543 = vrot.slane %v529, %v542
  %v544 = vcombine.high %v536, %v536
  %v545 = vcombine.high %v543, %v543
  %v547 = vunpack.c.l.s4 1966171168
  %v548 = vunpack.c.0.s8 %v547
  %v549 = vlaneseq
  %v550 = vshrl.u32 %v549, 7
  %v551 = vsub.s32 %v548, %v550
  %v552 = vrot.slane %v536, %v551
  %v554 = vunpack.c.l.s4 1966171168
  %v555 = vunpack.c.0.s8 %v554
  %v556 = vlaneseq
  %v557 = vshrl.u32 %v556, 7
  %v558 = vsub.s32 %v555, %v557
  %v559 = vrot.slane %v543, %v558
  %v561 = vunpack.c.l.s4 1966171168
  %v562 = vunpack.c.0.s8 %v561
  %v563 = vlaneseq
  %v564 = vshrl.u32 %v563, 7
  %v565 = vsub.s32 %v562, %v564
  %v566 = vrot.slane %v544, %v565
  %v568 = vunpack.c.l.s4 1966171168
  %v569 = vunpack.c.0.s8 %v568
  %v570 = vlaneseq
  %v571 = vshrl.u32 %v570, 7
  %v572 = vsub.s32 %v569, %v571
  %v573 = vrot.slane %v545, %v572
  %v574 = vcombine.high %v552, %v552
  %v575 = vcombine.high %v559, %v559
  %v576 = vcombine.high %v566, %v566
  %v577 = vcombine.high %v573, %v573
  %v578 = vcombine.high %v526, %v526
  %v580 = vunpack.c.l.s4 1966171168
  %v581 = vunpack.c.0.s8 %v580
  %v582 = vlaneseq
  %v583 = vshrl.u32 %v582, 7
  %v584 = vsub.s32 %v581, %v583
  %v585 = vrot.slane %v526, %v584
  %v587 = vunpack.c.l.s4 1966171168
  %v588 = vunpack.c.0.s8 %v587
  %v589 = vlaneseq
  %v590 = vshrl.u32 %v589, 7
  %v591 = vsub.s32 %v588, %v590
  %v592 = vrot.slane %v578, %v591
  %v593 = vcombine.high %v585, %v585
  %v594 = vcombine.high %v592, %v592
  %v596 = vunpack.c.l.s4 1966171168
  %v597 = vunpack.c.0.s8 %v596
  %v598 = vlaneseq
  %v599 = vshrl.u32 %v598, 7
  %v600 = vsub.s32 %v597, %v599
  %v601 = vrot.slane %v585, %v600
  %v603 = vunpack.c.l.s4 1966171168
  %v604 = vunpack.c.0.s8 %v603
  %v605 = vlaneseq
  %v606 = vshrl.u32 %v605, 7
  %v607 = vsub.s32 %v604, %v606
  %v608 = vrot.slane %v592, %v607
  %v610 = vunpack.c.l.s4 1966171168
  %v611 = vunpack.c.0.s8 %v610
  %v612 = vlaneseq
  %v613 = vshrl.u32 %v612, 7
  %v614 = vsub.s32 %v611, %v613
  %v615 = vrot.slane %v593, %v614
  %v617 = vunpack.c.l.s4 1966171168
  %v618 = vunpack.c.0.s8 %v617
  %v619 = vlaneseq
  %v620 = vshrl.u32 %v619, 7
  %v621 = vsub.s32 %v618, %v620
  %v622 = vrot.slane %v594, %v621
  %v623 = vcombine.high %v601, %v601
  %v624 = vcombine.high %v608, %v608
  %v625 = vcombine.high %v615, %v615
  %v626 = vcombine.high %v622, %v622
  %643 = vst [vmem:[#allocation3 + $0x1] sm:$0x1] %v552
  %644 = vst [vmem:[#allocation3 + $0x9] sm:$0x1] %v566
  %645 = vst [vmem:[#allocation3 + $0x11] sm:$0x1] %v574
  %646 = vst [vmem:[#allocation3 + $0x19] sm:$0x1] %v576
  %647 = vst [vmem:[#allocation3 + $0x21] sm:$0x1] %v559
  %648 = vst [vmem:[#allocation3 + $0x29] sm:$0x1] %v573
  %649 = vst [vmem:[#allocation3 + $0x31] sm:$0x1] %v575
  %650 = vst [vmem:[#allocation3 + $0x39] sm:$0x1] %v577
  %651 = vst [vmem:[#allocation3 + $0x41] sm:$0x1] %v601
  %652 = vst [vmem:[#allocation3 + $0x49] sm:$0x1] %v615
  %653 = vst [vmem:[#allocation3 + $0x51] sm:$0x1] %v623
  %654 = vst [vmem:[#allocation3 + $0x59] sm:$0x1] %v625
  %655 = vst [vmem:[#allocation3 + $0x61] sm:$0x1] %v608
  %656 = vst [vmem:[#allocation3 + $0x69] sm:$0x1] %v622
  %657 = vst [vmem:[#allocation3 + $0x71] sm:$0x1] %v624
  %658 = vst [vmem:[#allocation3 + $0x79] sm:$0x1] %v626
  %s659 = scalar_lea.vmem [#allocation2], 32
  %v660 = vld [vmem:[%s659] sm:$0xff]
  %v661 = vld [vmem:[%s659 + $0x8] sm:$0xff]
  %v662 = vpack.c.bf16 %v526, %v525
  %663 = vmatprep.subr.bf16.mxu0 0
  %664 = vmatpush1.bf16.msra.mxu0 %v466
  %665 = vmatprep.subr.bf16.mxu0 0
  %666 = vmatpush1.bf16.msra.mxu0 %v467
  %667 = vmatprep.subr.bf16.mxu0 0
  %668 = vmatpush1.bf16.msra.mxu0 %v468
  %669 = vmatprep.subr.bf16.mxu0 0
  %670 = vmatpush1.bf16.msra.mxu0 %v469
  %671 = vmatprep.subr.bf16.mxu0 0
  %672 = vmatpush1.bf16.msra.mxu0 %v470
  %673 = vmatprep.subr.bf16.mxu0 0
  %674 = vmatpush1.bf16.msra.mxu0 %v471
  %675 = vmatprep.subr.bf16.mxu0 0
  %676 = vmatpush1.bf16.msra.mxu0 %v472
  %677 = vmatprep.subr.bf16.mxu0 0
  %678 = vmatpush1.bf16.msra.mxu0 %v473
  %679 = vmatprep.subr.bf16.mxu0 0
  %680 = vmatpush1.bf16.msra.mxu0 0
  %681 = vmatprep.subr.bf16.mxu0 0
  %682 = vmatpush1.bf16.msra.mxu0 0
  %683 = vmatprep.subr.bf16.mxu0 0
  %684 = vmatpush1.bf16.msra.mxu0 0
  %685 = vmatprep.subr.bf16.mxu0 0
  %686 = vmatpush1.bf16.msra.mxu0 0
  %687 = vmatprep.subr.bf16.mxu0 0
  %688 = vmatpush1.bf16.msra.mxu0 0
  %689 = vmatprep.subr.bf16.mxu0 0
  %690 = vmatpush1.bf16.msra.mxu0 0
  %691 = vmatprep.subr.bf16.mxu0 0
  %692 = vmatpush1.bf16.msra.mxu0 0
  %693 = vmatprep.subr.bf16.mxu0 0
  %694 = vmatpush1.bf16.msra.mxu0 0
  %695 = vmatprep.mubr.bf16.mxu0 0
  %696 = vmatmul.mubr.bf16.gmra.mrb[0].mxu0 %v662
  %v697 = vpop.f32.mrb[0].mxu0
  %v698 = vadd.f32 0.0, %v697
  %v699 = vpop.f32.mrb[0].mxu0
  %v700 = vpop.f32.mrb[0].mxu0
  %v701 = vadd.f32 0.0, %v700
  %v702 = vpop.f32.mrb[0].mxu0
  %703 = vdwg.mxu0
  %v704 = vadd.f32 %v660, %v698
  %v705 = vadd.f32 %v661, %v701
  %v706 = vtanh.pop %v704
  %v707 = vtanh.pop %v705
  %v710 = vcombine.high %v706, %v706
  %v712 = vunpack.c.l.s4 1966171168
  %v713 = vunpack.c.0.s8 %v712
  %v714 = vlaneseq
  %v715 = vshrl.u32 %v714, 7
  %v716 = vsub.s32 %v713, %v715
  %v717 = vrot.slane %v706, %v716
  %v719 = vunpack.c.l.s4 1966171168
  %v720 = vunpack.c.0.s8 %v719
  %v721 = vlaneseq
  %v722 = vshrl.u32 %v721, 7
  %v723 = vsub.s32 %v720, %v722
  %v724 = vrot.slane %v710, %v723
  %v725 = vcombine.high %v717, %v717
  %v726 = vcombine.high %v724, %v724
  %v728 = vunpack.c.l.s4 1966171168
  %v729 = vunpack.c.0.s8 %v728
  %v730 = vlaneseq
  %v731 = vshrl.u32 %v730, 7
  %v732 = vsub.s32 %v729, %v731
  %v733 = vrot.slane %v717, %v732
  %v735 = vunpack.c.l.s4 1966171168
  %v736 = vunpack.c.0.s8 %v735
  %v737 = vlaneseq
  %v738 = vshrl.u32 %v737, 7
  %v739 = vsub.s32 %v736, %v738
  %v740 = vrot.slane %v724, %v739
  %v742 = vunpack.c.l.s4 1966171168
  %v743 = vunpack.c.0.s8 %v742
  %v744 = vlaneseq
  %v745 = vshrl.u32 %v744, 7
  %v746 = vsub.s32 %v743, %v745
  %v747 = vrot.slane %v725, %v746
  %v749 = vunpack.c.l.s4 1966171168
  %v750 = vunpack.c.0.s8 %v749
  %v751 = vlaneseq
  %v752 = vshrl.u32 %v751, 7
  %v753 = vsub.s32 %v750, %v752
  %v754 = vrot.slane %v726, %v753
  %v755 = vcombine.high %v733, %v733
  %v756 = vcombine.high %v740, %v740
  %v757 = vcombine.high %v747, %v747
  %v758 = vcombine.high %v754, %v754
  %v759 = vcombine.high %v707, %v707
  %v761 = vunpack.c.l.s4 1966171168
  %v762 = vunpack.c.0.s8 %v761
  %v763 = vlaneseq
  %v764 = vshrl.u32 %v763, 7
  %v765 = vsub.s32 %v762, %v764
  %v766 = vrot.slane %v707, %v765
  %v768 = vunpack.c.l.s4 1966171168
  %v769 = vunpack.c.0.s8 %v768
  %v770 = vlaneseq
  %v771 = vshrl.u32 %v770, 7
  %v772 = vsub.s32 %v769, %v771
  %v773 = vrot.slane %v759, %v772
  %v774 = vcombine.high %v766, %v766
  %v775 = vcombine.high %v773, %v773
  %v777 = vunpack.c.l.s4 1966171168
  %v778 = vunpack.c.0.s8 %v777
  %v779 = vlaneseq
  %v780 = vshrl.u32 %v779, 7
  %v781 = vsub.s32 %v778, %v780
  %v782 = vrot.slane %v766, %v781
  %v784 = vunpack.c.l.s4 1966171168
  %v785 = vunpack.c.0.s8 %v784
  %v786 = vlaneseq
  %v787 = vshrl.u32 %v786, 7
  %v788 = vsub.s32 %v785, %v787
  %v789 = vrot.slane %v773, %v788
  %v791 = vunpack.c.l.s4 1966171168
  %v792 = vunpack.c.0.s8 %v791
  %v793 = vlaneseq
  %v794 = vshrl.u32 %v793, 7
  %v795 = vsub.s32 %v792, %v794
  %v796 = vrot.slane %v774, %v795
  %v798 = vunpack.c.l.s4 1966171168
  %v799 = vunpack.c.0.s8 %v798
  %v800 = vlaneseq
  %v801 = vshrl.u32 %v800, 7
  %v802 = vsub.s32 %v799, %v801
  %v803 = vrot.slane %v775, %v802
  %v804 = vcombine.high %v782, %v782
  %v805 = vcombine.high %v789, %v789
  %v806 = vcombine.high %v796, %v796
  %v807 = vcombine.high %v803, %v803
  %824 = vst [vmem:[#allocation3 + $0x2] sm:$0x1] %v733
  %825 = vst [vmem:[#allocation3 + $0xa] sm:$0x1] %v747
  %826 = vst [vmem:[#allocation3 + $0x12] sm:$0x1] %v755
  %827 = vst [vmem:[#allocation3 + $0x1a] sm:$0x1] %v757
  %828 = vst [vmem:[#allocation3 + $0x22] sm:$0x1] %v740
  %829 = vst [vmem:[#allocation3 + $0x2a] sm:$0x1] %v754
  %830 = vst [vmem:[#allocation3 + $0x32] sm:$0x1] %v756
  %831 = vst [vmem:[#allocation3 + $0x3a] sm:$0x1] %v758
  %832 = vst [vmem:[#allocation3 + $0x42] sm:$0x1] %v782
  %833 = vst [vmem:[#allocation3 + $0x4a] sm:$0x1] %v796
  %834 = vst [vmem:[#allocation3 + $0x52] sm:$0x1] %v804
  %835 = vst [vmem:[#allocation3 + $0x5a] sm:$0x1] %v806
  %836 = vst [vmem:[#allocation3 + $0x62] sm:$0x1] %v789
  %837 = vst [vmem:[#allocation3 + $0x6a] sm:$0x1] %v803
  %838 = vst [vmem:[#allocation3 + $0x72] sm:$0x1] %v805
  %839 = vst [vmem:[#allocation3 + $0x7a] sm:$0x1] %v807
  %s840 = scalar_lea.vmem [#allocation2], 48
  %v841 = vld [vmem:[%s840] sm:$0xff]
  %v842 = vld [vmem:[%s840 + $0x8] sm:$0xff]
  %v843 = vpack.c.bf16 %v707, %v706
  %844 = vmatprep.subr.bf16.mxu0 0
  %845 = vmatpush1.bf16.msra.mxu0 %v466
  %846 = vmatprep.subr.bf16.mxu0 0
  %847 = vmatpush1.bf16.msra.mxu0 %v467
  %848 = vmatprep.subr.bf16.mxu0 0
  %849 = vmatpush1.bf16.msra.mxu0 %v468
  %850 = vmatprep.subr.bf16.mxu0 0
  %851 = vmatpush1.bf16.msra.mxu0 %v469
  %852 = vmatprep.subr.bf16.mxu0 0
  %853 = vmatpush1.bf16.msra.mxu0 %v470
  %854 = vmatprep.subr.bf16.mxu0 0
  %855 = vmatpush1.bf16.msra.mxu0 %v471
  %856 = vmatprep.subr.bf16.mxu0 0
  %857 = vmatpush1.bf16.msra.mxu0 %v472
  %858 = vmatprep.subr.bf16.mxu0 0
  %859 = vmatpush1.bf16.msra.mxu0 %v473
  %860 = vmatprep.subr.bf16.mxu0 0
  %861 = vmatpush1.bf16.msra.mxu0 0
  %862 = vmatprep.subr.bf16.mxu0 0
  %863 = vmatpush1.bf16.msra.mxu0 0
  %864 = vmatprep.subr.bf16.mxu0 0
  %865 = vmatpush1.bf16.msra.mxu0 0
  %866 = vmatprep.subr.bf16.mxu0 0
  %867 = vmatpush1.bf16.msra.mxu0 0
  %868 = vmatprep.subr.bf16.mxu0 0
  %869 = vmatpush1.bf16.msra.mxu0 0
  %870 = vmatprep.subr.bf16.mxu0 0
  %871 = vmatpush1.bf16.msra.mxu0 0
  %872 = vmatprep.subr.bf16.mxu0 0
  %873 = vmatpush1.bf16.msra.mxu0 0
  %874 = vmatprep.subr.bf16.mxu0 0
  %875 = vmatpush1.bf16.msra.mxu0 0
  %876 = vmatprep.mubr.bf16.mxu0 0
  %877 = vmatmul.mubr.bf16.gmra.mrb[0].mxu0 %v843
  %v878 = vpop.f32.mrb[0].mxu0
  %v879 = vadd.f32 0.0, %v878
  %v880 = vpop.f32.mrb[0].mxu0
  %v881 = vpop.f32.mrb[0].mxu0
  %v882 = vadd.f32 0.0, %v881
  %v883 = vpop.f32.mrb[0].mxu0
  %884 = vdwg.mxu0
  %v885 = vadd.f32 %v841, %v879
  %v886 = vadd.f32 %v842, %v882
  %v887 = vtanh.pop %v885
  %v888 = vtanh.pop %v886
  %v891 = vcombine.high %v887, %v887
  %v893 = vunpack.c.l.s4 1966171168
  %v894 = vunpack.c.0.s8 %v893
  %v895 = vlaneseq
  %v896 = vshrl.u32 %v895, 7
  %v897 = vsub.s32 %v894, %v896
  %v898 = vrot.slane %v887, %v897
  %v900 = vunpack.c.l.s4 1966171168
  %v901 = vunpack.c.0.s8 %v900
  %v902 = vlaneseq
  %v903 = vshrl.u32 %v902, 7
  %v904 = vsub.s32 %v901, %v903
  %v905 = vrot.slane %v891, %v904
  %v906 = vcombine.high %v898, %v898
  %v907 = vcombine.high %v905, %v905
  %v909 = vunpack.c.l.s4 1966171168
  %v910 = vunpack.c.0.s8 %v909
  %v911 = vlaneseq
  %v912 = vshrl.u32 %v911, 7
  %v913 = vsub.s32 %v910, %v912
  %v914 = vrot.slane %v898, %v913
  %v916 = vunpack.c.l.s4 1966171168
  %v917 = vunpack.c.0.s8 %v916
  %v918 = vlaneseq
  %v919 = vshrl.u32 %v918, 7
  %v920 = vsub.s32 %v917, %v919
  %v921 = vrot.slane %v905, %v920
  %v923 = vunpack.c.l.s4 1966171168
  %v924 = vunpack.c.0.s8 %v923
  %v925 = vlaneseq
  %v926 = vshrl.u32 %v925, 7
  %v927 = vsub.s32 %v924, %v926
  %v928 = vrot.slane %v906, %v927
  %v930 = vunpack.c.l.s4 1966171168
  %v931 = vunpack.c.0.s8 %v930
  %v932 = vlaneseq
  %v933 = vshrl.u32 %v932, 7
  %v934 = vsub.s32 %v931, %v933
  %v935 = vrot.slane %v907, %v934
  %v936 = vcombine.high %v914, %v914
  %v937 = vcombine.high %v921, %v921
  %v938 = vcombine.high %v928, %v928
  %v939 = vcombine.high %v935, %v935
  %v940 = vcombine.high %v888, %v888
  %v942 = vunpack.c.l.s4 1966171168
  %v943 = vunpack.c.0.s8 %v942
  %v944 = vlaneseq
  %v945 = vshrl.u32 %v944, 7
  %v946 = vsub.s32 %v943, %v945
  %v947 = vrot.slane %v888, %v946
  %v949 = vunpack.c.l.s4 1966171168
  %v950 = vunpack.c.0.s8 %v949
  %v951 = vlaneseq
  %v952 = vshrl.u32 %v951, 7
  %v953 = vsub.s32 %v950, %v952
  %v954 = vrot.slane %v940, %v953
  %v955 = vcombine.high %v947, %v947
  %v956 = vcombine.high %v954, %v954
  %v958 = vunpack.c.l.s4 1966171168
  %v959 = vunpack.c.0.s8 %v958
  %v960 = vlaneseq
  %v961 = vshrl.u32 %v960, 7
  %v962 = vsub.s32 %v959, %v961
  %v963 = vrot.slane %v947, %v962
  %v965 = vunpack.c.l.s4 1966171168
  %v966 = vunpack.c.0.s8 %v965
  %v967 = vlaneseq
  %v968 = vshrl.u32 %v967, 7
  %v969 = vsub.s32 %v966, %v968
  %v970 = vrot.slane %v954, %v969
  %v972 = vunpack.c.l.s4 1966171168
  %v973 = vunpack.c.0.s8 %v972
  %v974 = vlaneseq
  %v975 = vshrl.u32 %v974, 7
  %v976 = vsub.s32 %v973, %v975
  %v977 = vrot.slane %v955, %v976
  %v979 = vunpack.c.l.s4 1966171168
  %v980 = vunpack.c.0.s8 %v979
  %v981 = vlaneseq
  %v982 = vshrl.u32 %v981, 7
  %v983 = vsub.s32 %v980, %v982
  %v984 = vrot.slane %v956, %v983
  %v985 = vcombine.high %v963, %v963
  %v986 = vcombine.high %v970, %v970
  %v987 = vcombine.high %v977, %v977
  %v988 = vcombine.high %v984, %v984
  %1005 = vst [vmem:[#allocation3 + $0x3] sm:$0x1] %v914
  %1006 = vst [vmem:[#allocation3 + $0xb] sm:$0x1] %v928
  %1007 = vst [vmem:[#allocation3 + $0x13] sm:$0x1] %v936
  %1008 = vst [vmem:[#allocation3 + $0x1b] sm:$0x1] %v938
  %1009 = vst [vmem:[#allocation3 + $0x23] sm:$0x1] %v921
  %1010 = vst [vmem:[#allocation3 + $0x2b] sm:$0x1] %v935
  %1011 = vst [vmem:[#allocation3 + $0x33] sm:$0x1] %v937
  %1012 = vst [vmem:[#allocation3 + $0x3b] sm:$0x1] %v939
  %1013 = vst [vmem:[#allocation3 + $0x43] sm:$0x1] %v963
  %1014 = vst [vmem:[#allocation3 + $0x4b] sm:$0x1] %v977
  %1015 = vst [vmem:[#allocation3 + $0x53] sm:$0x1] %v985
  %1016 = vst [vmem:[#allocation3 + $0x5b] sm:$0x1] %v987
  %1017 = vst [vmem:[#allocation3 + $0x63] sm:$0x1] %v970
  %1018 = vst [vmem:[#allocation3 + $0x6b] sm:$0x1] %v984
  %1019 = vst [vmem:[#allocation3 + $0x73] sm:$0x1] %v986
  %1020 = vst [vmem:[#allocation3 + $0x7b] sm:$0x1] %v988
  %s1021 = scalar_lea.vmem [#allocation2], 64
  %v1022 = vld [vmem:[%s1021] sm:$0xff]
  %v1023 = vld [vmem:[%s1021 + $0x8] sm:$0xff]
  %v1024 = vpack.c.bf16 %v888, %v887
  %1025 = vmatprep.subr.bf16.mxu0 0
  %1026 = vmatpush1.bf16.msra.mxu0 %v466
  %1027 = vmatprep.subr.bf16.mxu0 0
  %1028 = vmatpush1.bf16.msra.mxu0 %v467
  %1029 = vmatprep.subr.bf16.mxu0 0
  %1030 = vmatpush1.bf16.msra.mxu0 %v468
  %1031 = vmatprep.subr.bf16.mxu0 0
  %1032 = vmatpush1.bf16.msra.mxu0 %v469
  %1033 = vmatprep.subr.bf16.mxu0 0
  %1034 = vmatpush1.bf16.msra.mxu0 %v470
  %1035 = vmatprep.subr.bf16.mxu0 0
  %1036 = vmatpush1.bf16.msra.mxu0 %v471
  %1037 = vmatprep.subr.bf16.mxu0 0
  %1038 = vmatpush1.bf16.msra.mxu0 %v472
  %1039 = vmatprep.subr.bf16.mxu0 0
  %1040 = vmatpush1.bf16.msra.mxu0 %v473
  %1041 = vmatprep.subr.bf16.mxu0 0
  %1042 = vmatpush1.bf16.msra.mxu0 0
  %1043 = vmatprep.subr.bf16.mxu0 0
  %1044 = vmatpush1.bf16.msra.mxu0 0
  %1045 = vmatprep.subr.bf16.mxu0 0
  %1046 = vmatpush1.bf16.msra.mxu0 0
  %1047 = vmatprep.subr.bf16.mxu0 0
  %1048 = vmatpush1.bf16.msra.mxu0 0
  %1049 = vmatprep.subr.bf16.mxu0 0
  %1050 = vmatpush1.bf16.msra.mxu0 0
  %1051 = vmatprep.subr.bf16.mxu0 0
  %1052 = vmatpush1.bf16.msra.mxu0 0
  %1053 = vmatprep.subr.bf16.mxu0 0
  %1054 = vmatpush1.bf16.msra.mxu0 0
  %1055 = vmatprep.subr.bf16.mxu0 0
  %1056 = vmatpush1.bf16.msra.mxu0 0
  %1057 = vmatprep.mubr.bf16.mxu0 0
  %1058 = vmatmul.mubr.bf16.gmra.mrb[0].mxu0 %v1024
  %v1059 = vpop.f32.mrb[0].mxu0
  %v1060 = vadd.f32 0.0, %v1059
  %v1061 = vpop.f32.mrb[0].mxu0
  %v1062 = vpop.f32.mrb[0].mxu0
  %v1063 = vadd.f32 0.0, %v1062
  %v1064 = vpop.f32.mrb[0].mxu0
  %1065 = vdwg.mxu0
  %v1066 = vadd.f32 %v1022, %v1060
  %v1067 = vadd.f32 %v1023, %v1063
  %v1068 = vtanh.pop %v1066
  %v1069 = vtanh.pop %v1067
  %v1072 = vcombine.high %v1068, %v1068
  %v1074 = vunpack.c.l.s4 1966171168
  %v1075 = vunpack.c.0.s8 %v1074
  %v1076 = vlaneseq
  %v1077 = vshrl.u32 %v1076, 7
  %v1078 = vsub.s32 %v1075, %v1077
  %v1079 = vrot.slane %v1068, %v1078
  %v1081 = vunpack.c.l.s4 1966171168
  %v1082 = vunpack.c.0.s8 %v1081
  %v1083 = vlaneseq
  %v1084 = vshrl.u32 %v1083, 7
  %v1085 = vsub.s32 %v1082, %v1084
  %v1086 = vrot.slane %v1072, %v1085
  %v1087 = vcombine.high %v1079, %v1079
  %v1088 = vcombine.high %v1086, %v1086
  %v1090 = vunpack.c.l.s4 1966171168
  %v1091 = vunpack.c.0.s8 %v1090
  %v1092 = vlaneseq
  %v1093 = vshrl.u32 %v1092, 7
  %v1094 = vsub.s32 %v1091, %v1093
  %v1095 = vrot.slane %v1079, %v1094
  %v1097 = vunpack.c.l.s4 1966171168
  %v1098 = vunpack.c.0.s8 %v1097
  %v1099 = vlaneseq
  %v1100 = vshrl.u32 %v1099, 7
  %v1101 = vsub.s32 %v1098, %v1100
  %v1102 = vrot.slane %v1086, %v1101
  %v1104 = vunpack.c.l.s4 1966171168
  %v1105 = vunpack.c.0.s8 %v1104
  %v1106 = vlaneseq
  %v1107 = vshrl.u32 %v1106, 7
  %v1108 = vsub.s32 %v1105, %v1107
  %v1109 = vrot.slane %v1087, %v1108
  %v1111 = vunpack.c.l.s4 1966171168
  %v1112 = vunpack.c.0.s8 %v1111
  %v1113 = vlaneseq
  %v1114 = vshrl.u32 %v1113, 7
  %v1115 = vsub.s32 %v1112, %v1114
  %v1116 = vrot.slane %v1088, %v1115
  %v1117 = vcombine.high %v1095, %v1095
  %v1118 = vcombine.high %v1102, %v1102
  %v1119 = vcombine.high %v1109, %v1109
  %v1120 = vcombine.high %v1116, %v1116
  %v1121 = vcombine.high %v1069, %v1069
  %v1123 = vunpack.c.l.s4 1966171168
  %v1124 = vunpack.c.0.s8 %v1123
  %v1125 = vlaneseq
  %v1126 = vshrl.u32 %v1125, 7
  %v1127 = vsub.s32 %v1124, %v1126
  %v1128 = vrot.slane %v1069, %v1127
  %v1130 = vunpack.c.l.s4 1966171168
  %v1131 = vunpack.c.0.s8 %v1130
  %v1132 = vlaneseq
  %v1133 = vshrl.u32 %v1132, 7
  %v1134 = vsub.s32 %v1131, %v1133
  %v1135 = vrot.slane %v1121, %v1134
  %v1136 = vcombine.high %v1128, %v1128
  %v1137 = vcombine.high %v1135, %v1135
  %v1139 = vunpack.c.l.s4 1966171168
  %v1140 = vunpack.c.0.s8 %v1139
  %v1141 = vlaneseq
  %v1142 = vshrl.u32 %v1141, 7
  %v1143 = vsub.s32 %v1140, %v1142
  %v1144 = vrot.slane %v1128, %v1143
  %v1146 = vunpack.c.l.s4 1966171168
  %v1147 = vunpack.c.0.s8 %v1146
  %v1148 = vlaneseq
  %v1149 = vshrl.u32 %v1148, 7
  %v1150 = vsub.s32 %v1147, %v1149
  %v1151 = vrot.slane %v1135, %v1150
  %v1153 = vunpack.c.l.s4 1966171168
  %v1154 = vunpack.c.0.s8 %v1153
  %v1155 = vlaneseq
  %v1156 = vshrl.u32 %v1155, 7
  %v1157 = vsub.s32 %v1154, %v1156
  %v1158 = vrot.slane %v1136, %v1157
  %v1160 = vunpack.c.l.s4 1966171168
  %v1161 = vunpack.c.0.s8 %v1160
  %v1162 = vlaneseq
  %v1163 = vshrl.u32 %v1162, 7
  %v1164 = vsub.s32 %v1161, %v1163
  %v1165 = vrot.slane %v1137, %v1164
  %v1166 = vcombine.high %v1144, %v1144
  %v1167 = vcombine.high %v1151, %v1151
  %v1168 = vcombine.high %v1158, %v1158
  %v1169 = vcombine.high %v1165, %v1165
  %1186 = vst [vmem:[#allocation3 + $0x4] sm:$0x1] %v1095
  %1187 = vst [vmem:[#allocation3 + $0xc] sm:$0x1] %v1109
  %1188 = vst [vmem:[#allocation3 + $0x14] sm:$0x1] %v1117
  %1189 = vst [vmem:[#allocation3 + $0x1c] sm:$0x1] %v1119
  %1190 = vst [vmem:[#allocation3 + $0x24] sm:$0x1] %v1102
  %1191 = vst [vmem:[#allocation3 + $0x2c] sm:$0x1] %v1116
  %1192 = vst [vmem:[#allocation3 + $0x34] sm:$0x1] %v1118
  %1193 = vst [vmem:[#allocation3 + $0x3c] sm:$0x1] %v1120
  %1194 = vst [vmem:[#allocation3 + $0x44] sm:$0x1] %v1144
  %1195 = vst [vmem:[#allocation3 + $0x4c] sm:$0x1] %v1158
  %1196 = vst [vmem:[#allocation3 + $0x54] sm:$0x1] %v1166
  %1197 = vst [vmem:[#allocation3 + $0x5c] sm:$0x1] %v1168
  %1198 = vst [vmem:[#allocation3 + $0x64] sm:$0x1] %v1151
  %1199 = vst [vmem:[#allocation3 + $0x6c] sm:$0x1] %v1165
  %1200 = vst [vmem:[#allocation3 + $0x74] sm:$0x1] %v1167
  %1201 = vst [vmem:[#allocation3 + $0x7c] sm:$0x1] %v1169
  %s1202 = scalar_lea.vmem [#allocation2], 80
  %v1203 = vld [vmem:[%s1202] sm:$0xff]
  %v1204 = vld [vmem:[%s1202 + $0x8] sm:$0xff]
  %v1205 = vpack.c.bf16 %v1069, %v1068
  %1206 = vmatprep.subr.bf16.mxu0 0
  %1207 = vmatpush1.bf16.msra.mxu0 %v466
  %1208 = vmatprep.subr.bf16.mxu0 0
  %1209 = vmatpush1.bf16.msra.mxu0 %v467
  %1210 = vmatprep.subr.bf16.mxu0 0
  %1211 = vmatpush1.bf16.msra.mxu0 %v468
  %1212 = vmatprep.subr.bf16.mxu0 0
  %1213 = vmatpush1.bf16.msra.mxu0 %v469
  %1214 = vmatprep.subr.bf16.mxu0 0
  %1215 = vmatpush1.bf16.msra.mxu0 %v470
  %1216 = vmatprep.subr.bf16.mxu0 0
  %1217 = vmatpush1.bf16.msra.mxu0 %v471
  %1218 = vmatprep.subr.bf16.mxu0 0
  %1219 = vmatpush1.bf16.msra.mxu0 %v472
  %1220 = vmatprep.subr.bf16.mxu0 0
  %1221 = vmatpush1.bf16.msra.mxu0 %v473
  %1222 = vmatprep.subr.bf16.mxu0 0
  %1223 = vmatpush1.bf16.msra.mxu0 0
  %1224 = vmatprep.subr.bf16.mxu0 0
  %1225 = vmatpush1.bf16.msra.mxu0 0
  %1226 = vmatprep.subr.bf16.mxu0 0
  %1227 = vmatpush1.bf16.msra.mxu0 0
  %1228 = vmatprep.subr.bf16.mxu0 0
  %1229 = vmatpush1.bf16.msra.mxu0 0
  %1230 = vmatprep.subr.bf16.mxu0 0
  %1231 = vmatpush1.bf16.msra.mxu0 0
  %1232 = vmatprep.subr.bf16.mxu0 0
  %1233 = vmatpush1.bf16.msra.mxu0 0
  %1234 = vmatprep.subr.bf16.mxu0 0
  %1235 = vmatpush1.bf16.msra.mxu0 0
  %1236 = vmatprep.subr.bf16.mxu0 0
  %1237 = vmatpush1.bf16.msra.mxu0 0
  %1238 = vmatprep.mubr.bf16.mxu0 0
  %1239 = vmatmul.mubr.bf16.gmra.mrb[0].mxu0 %v1205
  %v1240 = vpop.f32.mrb[0].mxu0
  %v1241 = vadd.f32 0.0, %v1240
  %v1242 = vpop.f32.mrb[0].mxu0
  %v1243 = vpop.f32.mrb[0].mxu0
  %v1244 = vadd.f32 0.0, %v1243
  %v1245 = vpop.f32.mrb[0].mxu0
  %1246 = vdwg.mxu0
  %v1247 = vadd.f32 %v1203, %v1241
  %v1248 = vadd.f32 %v1204, %v1244
  %v1249 = vtanh.pop %v1247
  %v1250 = vtanh.pop %v1248
  %v1253 = vcombine.high %v1249, %v1249
  %v1255 = vunpack.c.l.s4 1966171168
  %v1256 = vunpack.c.0.s8 %v1255
  %v1257 = vlaneseq
  %v1258 = vshrl.u32 %v1257, 7
  %v1259 = vsub.s32 %v1256, %v1258
  %v1260 = vrot.slane %v1249, %v1259
  %v1262 = vunpack.c.l.s4 1966171168
  %v1263 = vunpack.c.0.s8 %v1262
  %v1264 = vlaneseq
  %v1265 = vshrl.u32 %v1264, 7
  %v1266 = vsub.s32 %v1263, %v1265
  %v1267 = vrot.slane %v1253, %v1266
  %v1268 = vcombine.high %v1260, %v1260
  %v1269 = vcombine.high %v1267, %v1267
  %v1271 = vunpack.c.l.s4 1966171168
  %v1272 = vunpack.c.0.s8 %v1271
  %v1273 = vlaneseq
  %v1274 = vshrl.u32 %v1273, 7
  %v1275 = vsub.s32 %v1272, %v1274
  %v1276 = vrot.slane %v1260, %v1275
  %v1278 = vunpack.c.l.s4 1966171168
  %v1279 = vunpack.c.0.s8 %v1278
  %v1280 = vlaneseq
  %v1281 = vshrl.u32 %v1280, 7
  %v1282 = vsub.s32 %v1279, %v1281
  %v1283 = vrot.slane %v1267, %v1282
  %v1285 = vunpack.c.l.s4 1966171168
  %v1286 = vunpack.c.0.s8 %v1285
  %v1287 = vlaneseq
  %v1288 = vshrl.u32 %v1287, 7
  %v1289 = vsub.s32 %v1286, %v1288
  %v1290 = vrot.slane %v1268, %v1289
  %v1292 = vunpack.c.l.s4 1966171168
  %v1293 = vunpack.c.0.s8 %v1292
  %v1294 = vlaneseq
  %v1295 = vshrl.u32 %v1294, 7
  %v1296 = vsub.s32 %v1293, %v1295
  %v1297 = vrot.slane %v1269, %v1296
  %v1298 = vcombine.high %v1276, %v1276
  %v1299 = vcombine.high %v1283, %v1283
  %v1300 = vcombine.high %v1290, %v1290
  %v1301 = vcombine.high %v1297, %v1297
  %v1302 = vcombine.high %v1250, %v1250
  %v1304 = vunpack.c.l.s4 1966171168
  %v1305 = vunpack.c.0.s8 %v1304
  %v1306 = vlaneseq
  %v1307 = vshrl.u32 %v1306, 7
  %v1308 = vsub.s32 %v1305, %v1307
  %v1309 = vrot.slane %v1250, %v1308
  %v1311 = vunpack.c.l.s4 1966171168
  %v1312 = vunpack.c.0.s8 %v1311
  %v1313 = vlaneseq
  %v1314 = vshrl.u32 %v1313, 7
  %v1315 = vsub.s32 %v1312, %v1314
  %v1316 = vrot.slane %v1302, %v1315
  %v1317 = vcombine.high %v1309, %v1309
  %v1318 = vcombine.high %v1316, %v1316
  %v1320 = vunpack.c.l.s4 1966171168
  %v1321 = vunpack.c.0.s8 %v1320
  %v1322 = vlaneseq
  %v1323 = vshrl.u32 %v1322, 7
  %v1324 = vsub.s32 %v1321, %v1323
  %v1325 = vrot.slane %v1309, %v1324
  %v1327 = vunpack.c.l.s4 1966171168
  %v1328 = vunpack.c.0.s8 %v1327
  %v1329 = vlaneseq
  %v1330 = vshrl.u32 %v1329, 7
  %v1331 = vsub.s32 %v1328, %v1330
  %v1332 = vrot.slane %v1316, %v1331
  %v1334 = vunpack.c.l.s4 1966171168
  %v1335 = vunpack.c.0.s8 %v1334
  %v1336 = vlaneseq
  %v1337 = vshrl.u32 %v1336, 7
  %v1338 = vsub.s32 %v1335, %v1337
  %v1339 = vrot.slane %v1317, %v1338
  %v1341 = vunpack.c.l.s4 1966171168
  %v1342 = vunpack.c.0.s8 %v1341
  %v1343 = vlaneseq
  %v1344 = vshrl.u32 %v1343, 7
  %v1345 = vsub.s32 %v1342, %v1344
  %v1346 = vrot.slane %v1318, %v1345
  %v1347 = vcombine.high %v1325, %v1325
  %v1348 = vcombine.high %v1332, %v1332
  %v1349 = vcombine.high %v1339, %v1339
  %v1350 = vcombine.high %v1346, %v1346
  %1367 = vst [vmem:[#allocation3 + $0x5] sm:$0x1] %v1276
  %1368 = vst [vmem:[#allocation3 + $0xd] sm:$0x1] %v1290
  %1369 = vst [vmem:[#allocation3 + $0x15] sm:$0x1] %v1298
  %1370 = vst [vmem:[#allocation3 + $0x1d] sm:$0x1] %v1300
  %1371 = vst [vmem:[#allocation3 + $0x25] sm:$0x1] %v1283
  %1372 = vst [vmem:[#allocation3 + $0x2d] sm:$0x1] %v1297
  %1373 = vst [vmem:[#allocation3 + $0x35] sm:$0x1] %v1299
  %1374 = vst [vmem:[#allocation3 + $0x3d] sm:$0x1] %v1301
  %1375 = vst [vmem:[#allocation3 + $0x45] sm:$0x1] %v1325
  %1376 = vst [vmem:[#allocation3 + $0x4d] sm:$0x1] %v1339
  %1377 = vst [vmem:[#allocation3 + $0x55] sm:$0x1] %v1347
  %1378 = vst [vmem:[#allocation3 + $0x5d] sm:$0x1] %v1349
  %1379 = vst [vmem:[#allocation3 + $0x65] sm:$0x1] %v1332
  %1380 = vst [vmem:[#allocation3 + $0x6d] sm:$0x1] %v1346
  %1381 = vst [vmem:[#allocation3 + $0x75] sm:$0x1] %v1348
  %1382 = vst [vmem:[#allocation3 + $0x7d] sm:$0x1] %v1350
  %s1383 = scalar_lea.vmem [#allocation2], 96
  %v1384 = vld [vmem:[%s1383] sm:$0xff]
  %v1385 = vld [vmem:[%s1383 + $0x8] sm:$0xff]
  %v1386 = vpack.c.bf16 %v1250, %v1249
  %1387 = vmatprep.subr.bf16.mxu0 0
  %1388 = vmatpush1.bf16.msra.mxu0 %v466
  %1389 = vmatprep.subr.bf16.mxu0 0
  %1390 = vmatpush1.bf16.msra.mxu0 %v467
  %1391 = vmatprep.subr.bf16.mxu0 0
  %1392 = vmatpush1.bf16.msra.mxu0 %v468
  %1393 = vmatprep.subr.bf16.mxu0 0
  %1394 = vmatpush1.bf16.msra.mxu0 %v469
  %1395 = vmatprep.subr.bf16.mxu0 0
  %1396 = vmatpush1.bf16.msra.mxu0 %v470
  %1397 = vmatprep.subr.bf16.mxu0 0
  %1398 = vmatpush1.bf16.msra.mxu0 %v471
  %1399 = vmatprep.subr.bf16.mxu0 0
  %1400 = vmatpush1.bf16.msra.mxu0 %v472
  %1401 = vmatprep.subr.bf16.mxu0 0
  %1402 = vmatpush1.bf16.msra.mxu0 %v473
  %1403 = vmatprep.subr.bf16.mxu0 0
  %1404 = vmatpush1.bf16.msra.mxu0 0
  %1405 = vmatprep.subr.bf16.mxu0 0
  %1406 = vmatpush1.bf16.msra.mxu0 0
  %1407 = vmatprep.subr.bf16.mxu0 0
  %1408 = vmatpush1.bf16.msra.mxu0 0
  %1409 = vmatprep.subr.bf16.mxu0 0
  %1410 = vmatpush1.bf16.msra.mxu0 0
  %1411 = vmatprep.subr.bf16.mxu0 0
  %1412 = vmatpush1.bf16.msra.mxu0 0
  %1413 = vmatprep.subr.bf16.mxu0 0
  %1414 = vmatpush1.bf16.msra.mxu0 0
  %1415 = vmatprep.subr.bf16.mxu0 0
  %1416 = vmatpush1.bf16.msra.mxu0 0
  %1417 = vmatprep.subr.bf16.mxu0 0
  %1418 = vmatpush1.bf16.msra.mxu0 0
  %1419 = vmatprep.mubr.bf16.mxu0 0
  %1420 = vmatmul.mubr.bf16.gmra.mrb[0].mxu0 %v1386
  %v1421 = vpop.f32.mrb[0].mxu0
  %v1422 = vadd.f32 0.0, %v1421
  %v1423 = vpop.f32.mrb[0].mxu0
  %v1424 = vpop.f32.mrb[0].mxu0
  %v1425 = vadd.f32 0.0, %v1424
  %v1426 = vpop.f32.mrb[0].mxu0
  %1427 = vdwg.mxu0
  %v1428 = vadd.f32 %v1384, %v1422
  %v1429 = vadd.f32 %v1385, %v1425
  %v1430 = vtanh.pop %v1428
  %v1431 = vtanh.pop %v1429
  %v1434 = vcombine.high %v1430, %v1430
  %v1436 = vunpack.c.l.s4 1966171168
  %v1437 = vunpack.c.0.s8 %v1436
  %v1438 = vlaneseq
  %v1439 = vshrl.u32 %v1438, 7
  %v1440 = vsub.s32 %v1437, %v1439
  %v1441 = vrot.slane %v1430, %v1440
  %v1443 = vunpack.c.l.s4 1966171168
  %v1444 = vunpack.c.0.s8 %v1443
  %v1445 = vlaneseq
  %v1446 = vshrl.u32 %v1445, 7
  %v1447 = vsub.s32 %v1444, %v1446
  %v1448 = vrot.slane %v1434, %v1447
  %v1449 = vcombine.high %v1441, %v1441
  %v1450 = vcombine.high %v1448, %v1448
  %v1452 = vunpack.c.l.s4 1966171168
  %v1453 = vunpack.c.0.s8 %v1452
  %v1454 = vlaneseq
  %v1455 = vshrl.u32 %v1454, 7
  %v1456 = vsub.s32 %v1453, %v1455
  %v1457 = vrot.slane %v1441, %v1456
  %v1459 = vunpack.c.l.s4 1966171168
  %v1460 = vunpack.c.0.s8 %v1459
  %v1461 = vlaneseq
  %v1462 = vshrl.u32 %v1461, 7
  %v1463 = vsub.s32 %v1460, %v1462
  %v1464 = vrot.slane %v1448, %v1463
  %v1466 = vunpack.c.l.s4 1966171168
  %v1467 = vunpack.c.0.s8 %v1466
  %v1468 = vlaneseq
  %v1469 = vshrl.u32 %v1468, 7
  %v1470 = vsub.s32 %v1467, %v1469
  %v1471 = vrot.slane %v1449, %v1470
  %v1473 = vunpack.c.l.s4 1966171168
  %v1474 = vunpack.c.0.s8 %v1473
  %v1475 = vlaneseq
  %v1476 = vshrl.u32 %v1475, 7
  %v1477 = vsub.s32 %v1474, %v1476
  %v1478 = vrot.slane %v1450, %v1477
  %v1479 = vcombine.high %v1457, %v1457
  %v1480 = vcombine.high %v1464, %v1464
  %v1481 = vcombine.high %v1471, %v1471
  %v1482 = vcombine.high %v1478, %v1478
  %v1483 = vcombine.high %v1431, %v1431
  %v1485 = vunpack.c.l.s4 1966171168
  %v1486 = vunpack.c.0.s8 %v1485
  %v1487 = vlaneseq
  %v1488 = vshrl.u32 %v1487, 7
  %v1489 = vsub.s32 %v1486, %v1488
  %v1490 = vrot.slane %v1431, %v1489
  %v1492 = vunpack.c.l.s4 1966171168
  %v1493 = vunpack.c.0.s8 %v1492
  %v1494 = vlaneseq
  %v1495 = vshrl.u32 %v1494, 7
  %v1496 = vsub.s32 %v1493, %v1495
  %v1497 = vrot.slane %v1483, %v1496
  %v1498 = vcombine.high %v1490, %v1490
  %v1499 = vcombine.high %v1497, %v1497
  %v1501 = vunpack.c.l.s4 1966171168
  %v1502 = vunpack.c.0.s8 %v1501
  %v1503 = vlaneseq
  %v1504 = vshrl.u32 %v1503, 7
  %v1505 = vsub.s32 %v1502, %v1504
  %v1506 = vrot.slane %v1490, %v1505
  %v1508 = vunpack.c.l.s4 1966171168
  %v1509 = vunpack.c.0.s8 %v1508
  %v1510 = vlaneseq
  %v1511 = vshrl.u32 %v1510, 7
  %v1512 = vsub.s32 %v1509, %v1511
  %v1513 = vrot.slane %v1497, %v1512
  %v1515 = vunpack.c.l.s4 1966171168
  %v1516 = vunpack.c.0.s8 %v1515
  %v1517 = vlaneseq
  %v1518 = vshrl.u32 %v1517, 7
  %v1519 = vsub.s32 %v1516, %v1518
  %v1520 = vrot.slane %v1498, %v1519
  %v1522 = vunpack.c.l.s4 1966171168
  %v1523 = vunpack.c.0.s8 %v1522
  %v1524 = vlaneseq
  %v1525 = vshrl.u32 %v1524, 7
  %v1526 = vsub.s32 %v1523, %v1525
  %v1527 = vrot.slane %v1499, %v1526
  %v1528 = vcombine.high %v1506, %v1506
  %v1529 = vcombine.high %v1513, %v1513
  %v1530 = vcombine.high %v1520, %v1520
  %v1531 = vcombine.high %v1527, %v1527
  %1548 = vst [vmem:[#allocation3 + $0x6] sm:$0x1] %v1457
  %1549 = vst [vmem:[#allocation3 + $0xe] sm:$0x1] %v1471
  %1550 = vst [vmem:[#allocation3 + $0x16] sm:$0x1] %v1479
  %1551 = vst [vmem:[#allocation3 + $0x1e] sm:$0x1] %v1481
  %1552 = vst [vmem:[#allocation3 + $0x26] sm:$0x1] %v1464
  %1553 = vst [vmem:[#allocation3 + $0x2e] sm:$0x1] %v1478
  %1554 = vst [vmem:[#allocation3 + $0x36] sm:$0x1] %v1480
  %1555 = vst [vmem:[#allocation3 + $0x3e] sm:$0x1] %v1482
  %1556 = vst [vmem:[#allocation3 + $0x46] sm:$0x1] %v1506
  %1557 = vst [vmem:[#allocation3 + $0x4e] sm:$0x1] %v1520
  %1558 = vst [vmem:[#allocation3 + $0x56] sm:$0x1] %v1528
  %1559 = vst [vmem:[#allocation3 + $0x5e] sm:$0x1] %v1530
  %1560 = vst [vmem:[#allocation3 + $0x66] sm:$0x1] %v1513
  %1561 = vst [vmem:[#allocation3 + $0x6e] sm:$0x1] %v1527
  %1562 = vst [vmem:[#allocation3 + $0x76] sm:$0x1] %v1529
  %1563 = vst [vmem:[#allocation3 + $0x7e] sm:$0x1] %v1531
  %s1564 = scalar_lea.vmem [#allocation2], 112
  %v1565 = vld [vmem:[%s1564] sm:$0xff]
  %v1566 = vld [vmem:[%s1564 + $0x8] sm:$0xff]
  %v1567 = vpack.c.bf16 %v1431, %v1430
  %1568 = vmatprep.subr.bf16.mxu0 0
  %1569 = vmatpush1.bf16.msra.mxu0 %v466
  %1570 = vmatprep.subr.bf16.mxu0 0
  %1571 = vmatpush1.bf16.msra.mxu0 %v467
  %1572 = vmatprep.subr.bf16.mxu0 0
  %1573 = vmatpush1.bf16.msra.mxu0 %v468
  %1574 = vmatprep.subr.bf16.mxu0 0
  %1575 = vmatpush1.bf16.msra.mxu0 %v469
  %1576 = vmatprep.subr.bf16.mxu0 0
  %1577 = vmatpush1.bf16.msra.mxu0 %v470
  %1578 = vmatprep.subr.bf16.mxu0 0
  %1579 = vmatpush1.bf16.msra.mxu0 %v471
  %1580 = vmatprep.subr.bf16.mxu0 0
  %1581 = vmatpush1.bf16.msra.mxu0 %v472
  %1582 = vmatprep.subr.bf16.mxu0 0
  %1583 = vmatpush1.bf16.msra.mxu0 %v473
  %1584 = vmatprep.subr.bf16.mxu0 0
  %1585 = vmatpush1.bf16.msra.mxu0 0
  %1586 = vmatprep.subr.bf16.mxu0 0
  %1587 = vmatpush1.bf16.msra.mxu0 0
  %1588 = vmatprep.subr.bf16.mxu0 0
  %1589 = vmatpush1.bf16.msra.mxu0 0
  %1590 = vmatprep.subr.bf16.mxu0 0
  %1591 = vmatpush1.bf16.msra.mxu0 0
  %1592 = vmatprep.subr.bf16.mxu0 0
  %1593 = vmatpush1.bf16.msra.mxu0 0
  %1594 = vmatprep.subr.bf16.mxu0 0
  %1595 = vmatpush1.bf16.msra.mxu0 0
  %1596 = vmatprep.subr.bf16.mxu0 0
  %1597 = vmatpush1.bf16.msra.mxu0 0
  %1598 = vmatprep.subr.bf16.mxu0 0
  %1599 = vmatpush1.bf16.msra.mxu0 0
  %1600 = vmatprep.mubr.bf16.mxu0 0
  %1601 = vmatmul.mubr.bf16.gmra.mrb[0].mxu0 %v1567
  %v1602 = vpop.f32.mrb[0].mxu0
  %v1603 = vadd.f32 0.0, %v1602
  %v1604 = vpop.f32.mrb[0].mxu0
  %v1605 = vpop.f32.mrb[0].mxu0
  %v1606 = vadd.f32 0.0, %v1605
  %v1607 = vpop.f32.mrb[0].mxu0
  %1608 = vdwg.mxu0
  %v1609 = vadd.f32 %v1565, %v1603
  %v1610 = vadd.f32 %v1566, %v1606
  %v1611 = vtanh.pop %v1609
  %v1612 = vtanh.pop %v1610
  %v1615 = vcombine.high %v1611, %v1611
  %v1617 = vunpack.c.l.s4 1966171168
  %v1618 = vunpack.c.0.s8 %v1617
  %v1619 = vlaneseq
  %v1620 = vshrl.u32 %v1619, 7
  %v1621 = vsub.s32 %v1618, %v1620
  %v1622 = vrot.slane %v1611, %v1621
  %v1624 = vunpack.c.l.s4 1966171168
  %v1625 = vunpack.c.0.s8 %v1624
  %v1626 = vlaneseq
  %v1627 = vshrl.u32 %v1626, 7
  %v1628 = vsub.s32 %v1625, %v1627
  %v1629 = vrot.slane %v1615, %v1628
  %v1630 = vcombine.high %v1622, %v1622
  %v1631 = vcombine.high %v1629, %v1629
  %v1633 = vunpack.c.l.s4 1966171168
  %v1634 = vunpack.c.0.s8 %v1633
  %v1635 = vlaneseq
  %v1636 = vshrl.u32 %v1635, 7
  %v1637 = vsub.s32 %v1634, %v1636
  %v1638 = vrot.slane %v1622, %v1637
  %v1640 = vunpack.c.l.s4 1966171168
  %v1641 = vunpack.c.0.s8 %v1640
  %v1642 = vlaneseq
  %v1643 = vshrl.u32 %v1642, 7
  %v1644 = vsub.s32 %v1641, %v1643
  %v1645 = vrot.slane %v1629, %v1644
  %v1647 = vunpack.c.l.s4 1966171168
  %v1648 = vunpack.c.0.s8 %v1647
  %v1649 = vlaneseq
  %v1650 = vshrl.u32 %v1649, 7
  %v1651 = vsub.s32 %v1648, %v1650
  %v1652 = vrot.slane %v1630, %v1651
  %v1654 = vunpack.c.l.s4 1966171168
  %v1655 = vunpack.c.0.s8 %v1654
  %v1656 = vlaneseq
  %v1657 = vshrl.u32 %v1656, 7
  %v1658 = vsub.s32 %v1655, %v1657
  %v1659 = vrot.slane %v1631, %v1658
  %v1660 = vcombine.high %v1638, %v1638
  %v1661 = vcombine.high %v1645, %v1645
  %v1662 = vcombine.high %v1652, %v1652
  %v1663 = vcombine.high %v1659, %v1659
  %v1664 = vcombine.high %v1612, %v1612
  %v1666 = vunpack.c.l.s4 1966171168
  %v1667 = vunpack.c.0.s8 %v1666
  %v1668 = vlaneseq
  %v1669 = vshrl.u32 %v1668, 7
  %v1670 = vsub.s32 %v1667, %v1669
  %v1671 = vrot.slane %v1612, %v1670
  %v1673 = vunpack.c.l.s4 1966171168
  %v1674 = vunpack.c.0.s8 %v1673
  %v1675 = vlaneseq
  %v1676 = vshrl.u32 %v1675, 7
  %v1677 = vsub.s32 %v1674, %v1676
  %v1678 = vrot.slane %v1664, %v1677
  %v1679 = vcombine.high %v1671, %v1671
  %v1680 = vcombine.high %v1678, %v1678
  %v1682 = vunpack.c.l.s4 1966171168
  %v1683 = vunpack.c.0.s8 %v1682
  %v1684 = vlaneseq
  %v1685 = vshrl.u32 %v1684, 7
  %v1686 = vsub.s32 %v1683, %v1685
  %v1687 = vrot.slane %v1671, %v1686
  %v1689 = vunpack.c.l.s4 1966171168
  %v1690 = vunpack.c.0.s8 %v1689
  %v1691 = vlaneseq
  %v1692 = vshrl.u32 %v1691, 7
  %v1693 = vsub.s32 %v1690, %v1692
  %v1694 = vrot.slane %v1678, %v1693
  %v1696 = vunpack.c.l.s4 1966171168
  %v1697 = vunpack.c.0.s8 %v1696
  %v1698 = vlaneseq
  %v1699 = vshrl.u32 %v1698, 7
  %v1700 = vsub.s32 %v1697, %v1699
  %v1701 = vrot.slane %v1679, %v1700
  %v1703 = vunpack.c.l.s4 1966171168
  %v1704 = vunpack.c.0.s8 %v1703
  %v1705 = vlaneseq
  %v1706 = vshrl.u32 %v1705, 7
  %v1707 = vsub.s32 %v1704, %v1706
  %v1708 = vrot.slane %v1680, %v1707
  %v1709 = vcombine.high %v1687, %v1687
  %v1710 = vcombine.high %v1694, %v1694
  %v1711 = vcombine.high %v1701, %v1701
  %v1712 = vcombine.high %v1708, %v1708
  %1729 = vst [vmem:[#allocation3 + $0x7] sm:$0x1] %v1638
  %1730 = vst [vmem:[#allocation3 + $0xf] sm:$0x1] %v1652
  %1731 = vst [vmem:[#allocation3 + $0x17] sm:$0x1] %v1660
  %1732 = vst [vmem:[#allocation3 + $0x1f] sm:$0x1] %v1662
  %1733 = vst [vmem:[#allocation3 + $0x27] sm:$0x1] %v1645
  %1734 = vst [vmem:[#allocation3 + $0x2f] sm:$0x1] %v1659
  %1735 = vst [vmem:[#allocation3 + $0x37] sm:$0x1] %v1661
  %1736 = vst [vmem:[#allocation3 + $0x3f] sm:$0x1] %v1663
  %1737 = vst [vmem:[#allocation3 + $0x47] sm:$0x1] %v1687
  %1738 = vst [vmem:[#allocation3 + $0x4f] sm:$0x1] %v1701
  %1739 = vst [vmem:[#allocation3 + $0x57] sm:$0x1] %v1709
  %1740 = vst [vmem:[#allocation3 + $0x5f] sm:$0x1] %v1711
  %1741 = vst [vmem:[#allocation3 + $0x67] sm:$0x1] %v1694
  %1742 = vst [vmem:[#allocation3 + $0x6f] sm:$0x1] %v1708
  %1743 = vst [vmem:[#allocation3 + $0x77] sm:$0x1] %v1710
  %1744 = vst [vmem:[#allocation3 + $0x7f] sm:$0x1] %v1712
  %v1745 = vld [vmem:[%s4] sm:$0xff]
  %v1746 = vld [vmem:[%s4 + $0x8] sm:$0xff]
  %v1747 = vld [vmem:[%s5] sm:$0xff]
  %v1748 = vld [vmem:[%s5 + $0x8] sm:$0xff]
  %v1749 = vld [vmem:[%s6] sm:$0xff]
  %v1750 = vld [vmem:[%s6 + $0x8] sm:$0xff]
  %v1751 = vld [vmem:[%s7] sm:$0xff]
  %v1752 = vld [vmem:[%s7 + $0x8] sm:$0xff]
  %v1753 = vlaneseq
  %v1754 = vshrl.u32 %v1753, 7
  %v1755 = vsub.s32 0, %v1754
  %v1756 = vrot.slane %v1745, %v1755
  %1758 = vbcast.lane.b32.xlu0 %v1756, 256
  %v1759 = vpop.permute.xlu0 %1758
  %v1760 = vlaneseq
  %v1761 = vshrl.u32 %v1760, 7
  %v1762 = vsub.s32 1, %v1761
  %v1763 = vrot.slane %v1745, %v1762
  %1765 = vbcast.lane.b32.xlu0 %v1763, 256
  %v1766 = vpop.permute.xlu0 %1765
  %v1767 = vlaneseq
  %v1768 = vshrl.u32 %v1767, 7
  %v1769 = vsub.s32 2, %v1768
  %v1770 = vrot.slane %v1745, %v1769
  %1772 = vbcast.lane.b32.xlu0 %v1770, 256
  %v1773 = vpop.permute.xlu0 %1772
  %v1774 = vlaneseq
  %v1775 = vshrl.u32 %v1774, 7
  %v1776 = vsub.s32 3, %v1775
  %v1777 = vrot.slane %v1745, %v1776
  %1779 = vbcast.lane.b32.xlu0 %v1777, 256
  %v1780 = vpop.permute.xlu0 %1779
  %v1781 = vlaneseq
  %v1782 = vshrl.u32 %v1781, 7
  %v1783 = vsub.s32 4, %v1782
  %v1784 = vrot.slane %v1745, %v1783
  %1786 = vbcast.lane.b32.xlu0 %v1784, 256
  %v1787 = vpop.permute.xlu0 %1786
  %v1788 = vlaneseq
  %v1789 = vshrl.u32 %v1788, 7
  %v1790 = vsub.s32 5, %v1789
  %v1791 = vrot.slane %v1745, %v1790
  %1793 = vbcast.lane.b32.xlu0 %v1791, 256
  %v1794 = vpop.permute.xlu0 %1793
  %v1795 = vlaneseq
  %v1796 = vshrl.u32 %v1795, 7
  %v1797 = vsub.s32 6, %v1796
  %v1798 = vrot.slane %v1745, %v1797
  %1800 = vbcast.lane.b32.xlu0 %v1798, 256
  %v1801 = vpop.permute.xlu0 %1800
  %v1802 = vlaneseq
  %v1803 = vshrl.u32 %v1802, 7
  %v1804 = vsub.s32 7, %v1803
  %v1805 = vrot.slane %v1745, %v1804
  %1807 = vbcast.lane.b32.xlu0 %v1805, 256
  %v1808 = vpop.permute.xlu0 %1807
  %v1809 = vlaneseq
  %v1810 = vshrl.u32 %v1809, 7
  %v1811 = vsub.s32 0, %v1810
  %v1812 = vrot.slane %v1746, %v1811
  %1814 = vbcast.lane.b32.xlu0 %v1812, 256
  %v1815 = vpop.permute.xlu0 %1814
  %v1816 = vlaneseq
  %v1817 = vshrl.u32 %v1816, 7
  %v1818 = vsub.s32 1, %v1817
  %v1819 = vrot.slane %v1746, %v1818
  %1821 = vbcast.lane.b32.xlu0 %v1819, 256
  %v1822 = vpop.permute.xlu0 %1821
  %v1823 = vlaneseq
  %v1824 = vshrl.u32 %v1823, 7
  %v1825 = vsub.s32 2, %v1824
  %v1826 = vrot.slane %v1746, %v1825
  %1828 = vbcast.lane.b32.xlu0 %v1826, 256
  %v1829 = vpop.permute.xlu0 %1828
  %v1830 = vlaneseq
  %v1831 = vshrl.u32 %v1830, 7
  %v1832 = vsub.s32 3, %v1831
  %v1833 = vrot.slane %v1746, %v1832
  %1835 = vbcast.lane.b32.xlu0 %v1833, 256
  %v1836 = vpop.permute.xlu0 %1835
  %v1837 = vlaneseq
  %v1838 = vshrl.u32 %v1837, 7
  %v1839 = vsub.s32 4, %v1838
  %v1840 = vrot.slane %v1746, %v1839
  %1842 = vbcast.lane.b32.xlu0 %v1840, 256
  %v1843 = vpop.permute.xlu0 %1842
  %v1844 = vlaneseq
  %v1845 = vshrl.u32 %v1844, 7
  %v1846 = vsub.s32 5, %v1845
  %v1847 = vrot.slane %v1746, %v1846
  %1849 = vbcast.lane.b32.xlu0 %v1847, 256
  %v1850 = vpop.permute.xlu0 %1849
  %v1851 = vlaneseq
  %v1852 = vshrl.u32 %v1851, 7
  %v1853 = vsub.s32 6, %v1852
  %v1854 = vrot.slane %v1746, %v1853
  %1856 = vbcast.lane.b32.xlu0 %v1854, 256
  %v1857 = vpop.permute.xlu0 %1856
  %v1858 = vlaneseq
  %v1859 = vshrl.u32 %v1858, 7
  %v1860 = vsub.s32 7, %v1859
  %v1861 = vrot.slane %v1746, %v1860
  %1863 = vbcast.lane.b32.xlu0 %v1861, 256
  %v1864 = vpop.permute.xlu0 %1863
  %v1867 = vcombine.high %v1745, %v1745
  %v1869 = vunpack.c.l.s4 1966171168
  %v1870 = vunpack.c.0.s8 %v1869
  %v1871 = vlaneseq
  %v1872 = vshrl.u32 %v1871, 7
  %v1873 = vsub.s32 %v1870, %v1872
  %v1874 = vrot.slane %v1745, %v1873
  %v1876 = vunpack.c.l.s4 1966171168
  %v1877 = vunpack.c.0.s8 %v1876
  %v1878 = vlaneseq
  %v1879 = vshrl.u32 %v1878, 7
  %v1880 = vsub.s32 %v1877, %v1879
  %v1881 = vrot.slane %v1867, %v1880
  %v1882 = vcombine.high %v1874, %v1874
  %v1883 = vcombine.high %v1881, %v1881
  %v1885 = vunpack.c.l.s4 1966171168
  %v1886 = vunpack.c.0.s8 %v1885
  %v1887 = vlaneseq
  %v1888 = vshrl.u32 %v1887, 7
  %v1889 = vsub.s32 %v1886, %v1888
  %v1890 = vrot.slane %v1874, %v1889
  %v1892 = vunpack.c.l.s4 1966171168
  %v1893 = vunpack.c.0.s8 %v1892
  %v1894 = vlaneseq
  %v1895 = vshrl.u32 %v1894, 7
  %v1896 = vsub.s32 %v1893, %v1895
  %v1897 = vrot.slane %v1881, %v1896
  %v1899 = vunpack.c.l.s4 1966171168
  %v1900 = vunpack.c.0.s8 %v1899
  %v1901 = vlaneseq
  %v1902 = vshrl.u32 %v1901, 7
  %v1903 = vsub.s32 %v1900, %v1902
  %v1904 = vrot.slane %v1882, %v1903
  %v1906 = vunpack.c.l.s4 1966171168
  %v1907 = vunpack.c.0.s8 %v1906
  %v1908 = vlaneseq
  %v1909 = vshrl.u32 %v1908, 7
  %v1910 = vsub.s32 %v1907, %v1909
  %v1911 = vrot.slane %v1883, %v1910
  %v1912 = vcombine.high %v1890, %v1890
  %v1913 = vcombine.high %v1897, %v1897
  %v1914 = vcombine.high %v1904, %v1904
  %v1915 = vcombine.high %v1911, %v1911
  %v1916 = vcombine.high %v1746, %v1746
  %v1918 = vunpack.c.l.s4 1966171168
  %v1919 = vunpack.c.0.s8 %v1918
  %v1920 = vlaneseq
  %v1921 = vshrl.u32 %v1920, 7
  %v1922 = vsub.s32 %v1919, %v1921
  %v1923 = vrot.slane %v1746, %v1922
  %v1925 = vunpack.c.l.s4 1966171168
  %v1926 = vunpack.c.0.s8 %v1925
  %v1927 = vlaneseq
  %v1928 = vshrl.u32 %v1927, 7
  %v1929 = vsub.s32 %v1926, %v1928
  %v1930 = vrot.slane %v1916, %v1929
  %v1931 = vcombine.high %v1923, %v1923
  %v1932 = vcombine.high %v1930, %v1930
  %v1934 = vunpack.c.l.s4 1966171168
  %v1935 = vunpack.c.0.s8 %v1934
  %v1936 = vlaneseq
  %v1937 = vshrl.u32 %v1936, 7
  %v1938 = vsub.s32 %v1935, %v1937
  %v1939 = vrot.slane %v1923, %v1938
  %v1941 = vunpack.c.l.s4 1966171168
  %v1942 = vunpack.c.0.s8 %v1941
  %v1943 = vlaneseq
  %v1944 = vshrl.u32 %v1943, 7
  %v1945 = vsub.s32 %v1942, %v1944
  %v1946 = vrot.slane %v1930, %v1945
  %v1948 = vunpack.c.l.s4 1966171168
  %v1949 = vunpack.c.0.s8 %v1948
  %v1950 = vlaneseq
  %v1951 = vshrl.u32 %v1950, 7
  %v1952 = vsub.s32 %v1949, %v1951
  %v1953 = vrot.slane %v1931, %v1952
  %v1955 = vunpack.c.l.s4 1966171168
  %v1956 = vunpack.c.0.s8 %v1955
  %v1957 = vlaneseq
  %v1958 = vshrl.u32 %v1957, 7
  %v1959 = vsub.s32 %v1956, %v1958
  %v1960 = vrot.slane %v1932, %v1959
  %v1961 = vcombine.high %v1939, %v1939
  %v1962 = vcombine.high %v1946, %v1946
  %v1963 = vcombine.high %v1953, %v1953
  %v1964 = vcombine.high %v1960, %v1960
  %v1965 = vlaneseq
  %v1966 = vshrl.u32 %v1965, 7
  %v1967 = vsub.s32 0, %v1966
  %v1968 = vrot.slane %v1890, %v1967
  %v1969 = vlaneseq
  %v1970 = vshrl.u32 %v1969, 7
  %v1971 = vsub.s32 0, %v1970
  %v1972 = vrot.slane %v1904, %v1971
  %v1973 = vlaneseq
  %v1974 = vshrl.u32 %v1973, 7
  %v1975 = vsub.s32 0, %v1974
  %v1976 = vrot.slane %v1912, %v1975
  %v1977 = vlaneseq
  %v1978 = vshrl.u32 %v1977, 7
  %v1979 = vsub.s32 0, %v1978
  %v1980 = vrot.slane %v1914, %v1979
  %v1981 = vlaneseq
  %v1982 = vshrl.u32 %v1981, 7
  %v1983 = vsub.s32 0, %v1982
  %v1984 = vrot.slane %v1897, %v1983
  %v1985 = vlaneseq
  %v1986 = vshrl.u32 %v1985, 7
  %v1987 = vsub.s32 0, %v1986
  %v1988 = vrot.slane %v1911, %v1987
  %v1989 = vlaneseq
  %v1990 = vshrl.u32 %v1989, 7
  %v1991 = vsub.s32 0, %v1990
  %v1992 = vrot.slane %v1913, %v1991
  %v1993 = vlaneseq
  %v1994 = vshrl.u32 %v1993, 7
  %v1995 = vsub.s32 0, %v1994
  %v1996 = vrot.slane %v1915, %v1995
  %v1997 = vlaneseq
  %v1998 = vshrl.u32 %v1997, 7
  %v1999 = vsub.s32 0, %v1998
  %v2000 = vrot.slane %v1939, %v1999
  %v2001 = vlaneseq
  %v2002 = vshrl.u32 %v2001, 7
  %v2003 = vsub.s32 0, %v2002
  %v2004 = vrot.slane %v1953, %v2003
  %v2005 = vlaneseq
  %v2006 = vshrl.u32 %v2005, 7
  %v2007 = vsub.s32 0, %v2006
  %v2008 = vrot.slane %v1961, %v2007
  %v2009 = vlaneseq
  %v2010 = vshrl.u32 %v2009, 7
  %v2011 = vsub.s32 0, %v2010
  %v2012 = vrot.slane %v1963, %v2011
  %v2013 = vlaneseq
  %v2014 = vshrl.u32 %v2013, 7
  %v2015 = vsub.s32 0, %v2014
  %v2016 = vrot.slane %v1946, %v2015
  %v2017 = vlaneseq
  %v2018 = vshrl.u32 %v2017, 7
  %v2019 = vsub.s32 0, %v2018
  %v2020 = vrot.slane %v1960, %v2019
  %v2021 = vlaneseq
  %v2022 = vshrl.u32 %v2021, 7
  %v2023 = vsub.s32 0, %v2022
  %v2024 = vrot.slane %v1962, %v2023
  %v2025 = vlaneseq
  %v2026 = vshrl.u32 %v2025, 7
  %v2027 = vsub.s32 0, %v2026
  %v2028 = vrot.slane %v1964, %v2027
  %v2045 = vsub.f32 %v1759, %v1968
  %v2046 = vsub.f32 %v1766, %v1972
  %v2047 = vsub.f32 %v1773, %v1976
  %v2048 = vsub.f32 %v1780, %v1980
  %v2049 = vsub.f32 %v1787, %v1984
  %v2050 = vsub.f32 %v1794, %v1988
  %v2051 = vsub.f32 %v1801, %v1992
  %v2052 = vsub.f32 %v1808, %v1996
  %v2053 = vsub.f32 %v1815, %v2000
  %v2054 = vsub.f32 %v1822, %v2004
  %v2055 = vsub.f32 %v1829, %v2008
  %v2056 = vsub.f32 %v1836, %v2012
  %v2057 = vsub.f32 %v1843, %v2016
  %v2058 = vsub.f32 %v1850, %v2020
  %v2059 = vsub.f32 %v1857, %v2024
  %v2060 = vsub.f32 %v1864, %v2028
  %v2061 = vmax.f32 %v2045, 0.0
  %v2062 = vmax.f32 %v2046, 0.0
  %v2063 = vmax.f32 %v2047, 0.0
  %v2064 = vmax.f32 %v2048, 0.0
  %v2065 = vmax.f32 %v2049, 0.0
  %v2066 = vmax.f32 %v2050, 0.0
  %v2067 = vmax.f32 %v2051, 0.0
  %v2068 = vmax.f32 %v2052, 0.0
  %v2069 = vmax.f32 %v2053, 0.0
  %v2070 = vmax.f32 %v2054, 0.0
  %v2071 = vmax.f32 %v2055, 0.0
  %v2072 = vmax.f32 %v2056, 0.0
  %v2073 = vmax.f32 %v2057, 0.0
  %v2074 = vmax.f32 %v2058, 0.0
  %v2075 = vmax.f32 %v2059, 0.0
  %v2076 = vmax.f32 %v2060, 0.0
  %v2077 = vlaneseq
  %v2078 = vshrl.u32 %v2077, 7
  %v2079 = vsub.s32 0, %v2078
  %v2080 = vrot.slane %v1747, %v2079
  %2082 = vbcast.lane.b32.xlu0 %v2080, 256
  %v2083 = vpop.permute.xlu0 %2082
  %v2084 = vlaneseq
  %v2085 = vshrl.u32 %v2084, 7
  %v2086 = vsub.s32 1, %v2085
  %v2087 = vrot.slane %v1747, %v2086
  %2089 = vbcast.lane.b32.xlu0 %v2087, 256
  %v2090 = vpop.permute.xlu0 %2089
  %v2091 = vlaneseq
  %v2092 = vshrl.u32 %v2091, 7
  %v2093 = vsub.s32 2, %v2092
  %v2094 = vrot.slane %v1747, %v2093
  %2096 = vbcast.lane.b32.xlu0 %v2094, 256
  %v2097 = vpop.permute.xlu0 %2096
  %v2098 = vlaneseq
  %v2099 = vshrl.u32 %v2098, 7
  %v2100 = vsub.s32 3, %v2099
  %v2101 = vrot.slane %v1747, %v2100
  %2103 = vbcast.lane.b32.xlu0 %v2101, 256
  %v2104 = vpop.permute.xlu0 %2103
  %v2105 = vlaneseq
  %v2106 = vshrl.u32 %v2105, 7
  %v2107 = vsub.s32 4, %v2106
  %v2108 = vrot.slane %v1747, %v2107
  %2110 = vbcast.lane.b32.xlu0 %v2108, 256
  %v2111 = vpop.permute.xlu0 %2110
  %v2112 = vlaneseq
  %v2113 = vshrl.u32 %v2112, 7
  %v2114 = vsub.s32 5, %v2113
  %v2115 = vrot.slane %v1747, %v2114
  %2117 = vbcast.lane.b32.xlu0 %v2115, 256
  %v2118 = vpop.permute.xlu0 %2117
  %v2119 = vlaneseq
  %v2120 = vshrl.u32 %v2119, 7
  %v2121 = vsub.s32 6, %v2120
  %v2122 = vrot.slane %v1747, %v2121
  %2124 = vbcast.lane.b32.xlu0 %v2122, 256
  %v2125 = vpop.permute.xlu0 %2124
  %v2126 = vlaneseq
  %v2127 = vshrl.u32 %v2126, 7
  %v2128 = vsub.s32 7, %v2127
  %v2129 = vrot.slane %v1747, %v2128
  %2131 = vbcast.lane.b32.xlu0 %v2129, 256
  %v2132 = vpop.permute.xlu0 %2131
  %v2133 = vlaneseq
  %v2134 = vshrl.u32 %v2133, 7
  %v2135 = vsub.s32 0, %v2134
  %v2136 = vrot.slane %v1748, %v2135
  %2138 = vbcast.lane.b32.xlu0 %v2136, 256
  %v2139 = vpop.permute.xlu0 %2138
  %v2140 = vlaneseq
  %v2141 = vshrl.u32 %v2140, 7
  %v2142 = vsub.s32 1, %v2141
  %v2143 = vrot.slane %v1748, %v2142
  %2145 = vbcast.lane.b32.xlu0 %v2143, 256
  %v2146 = vpop.permute.xlu0 %2145
  %v2147 = vlaneseq
  %v2148 = vshrl.u32 %v2147, 7
  %v2149 = vsub.s32 2, %v2148
  %v2150 = vrot.slane %v1748, %v2149
  %2152 = vbcast.lane.b32.xlu0 %v2150, 256
  %v2153 = vpop.permute.xlu0 %2152
  %v2154 = vlaneseq
  %v2155 = vshrl.u32 %v2154, 7
  %v2156 = vsub.s32 3, %v2155
  %v2157 = vrot.slane %v1748, %v2156
  %2159 = vbcast.lane.b32.xlu0 %v2157, 256
  %v2160 = vpop.permute.xlu0 %2159
  %v2161 = vlaneseq
  %v2162 = vshrl.u32 %v2161, 7
  %v2163 = vsub.s32 4, %v2162
  %v2164 = vrot.slane %v1748, %v2163
  %2166 = vbcast.lane.b32.xlu0 %v2164, 256
  %v2167 = vpop.permute.xlu0 %2166
  %v2168 = vlaneseq
  %v2169 = vshrl.u32 %v2168, 7
  %v2170 = vsub.s32 5, %v2169
  %v2171 = vrot.slane %v1748, %v2170
  %2173 = vbcast.lane.b32.xlu0 %v2171, 256
  %v2174 = vpop.permute.xlu0 %2173
  %v2175 = vlaneseq
  %v2176 = vshrl.u32 %v2175, 7
  %v2177 = vsub.s32 6, %v2176
  %v2178 = vrot.slane %v1748, %v2177
  %2180 = vbcast.lane.b32.xlu0 %v2178, 256
  %v2181 = vpop.permute.xlu0 %2180
  %v2182 = vlaneseq
  %v2183 = vshrl.u32 %v2182, 7
  %v2184 = vsub.s32 7, %v2183
  %v2185 = vrot.slane %v1748, %v2184
  %2187 = vbcast.lane.b32.xlu0 %v2185, 256
  %v2188 = vpop.permute.xlu0 %2187
  %v2191 = vcombine.high %v1747, %v1747
  %v2193 = vunpack.c.l.s4 1966171168
  %v2194 = vunpack.c.0.s8 %v2193
  %v2195 = vlaneseq
  %v2196 = vshrl.u32 %v2195, 7
  %v2197 = vsub.s32 %v2194, %v2196
  %v2198 = vrot.slane %v1747, %v2197
  %v2200 = vunpack.c.l.s4 1966171168
  %v2201 = vunpack.c.0.s8 %v2200
  %v2202 = vlaneseq
  %v2203 = vshrl.u32 %v2202, 7
  %v2204 = vsub.s32 %v2201, %v2203
  %v2205 = vrot.slane %v2191, %v2204
  %v2206 = vcombine.high %v2198, %v2198
  %v2207 = vcombine.high %v2205, %v2205
  %v2209 = vunpack.c.l.s4 1966171168
  %v2210 = vunpack.c.0.s8 %v2209
  %v2211 = vlaneseq
  %v2212 = vshrl.u32 %v2211, 7
  %v2213 = vsub.s32 %v2210, %v2212
  %v2214 = vrot.slane %v2198, %v2213
  %v2216 = vunpack.c.l.s4 1966171168
  %v2217 = vunpack.c.0.s8 %v2216
  %v2218 = vlaneseq
  %v2219 = vshrl.u32 %v2218, 7
  %v2220 = vsub.s32 %v2217, %v2219
  %v2221 = vrot.slane %v2205, %v2220
  %v2223 = vunpack.c.l.s4 1966171168
  %v2224 = vunpack.c.0.s8 %v2223
  %v2225 = vlaneseq
  %v2226 = vshrl.u32 %v2225, 7
  %v2227 = vsub.s32 %v2224, %v2226
  %v2228 = vrot.slane %v2206, %v2227
  %v2230 = vunpack.c.l.s4 1966171168
  %v2231 = vunpack.c.0.s8 %v2230
  %v2232 = vlaneseq
  %v2233 = vshrl.u32 %v2232, 7
  %v2234 = vsub.s32 %v2231, %v2233
  %v2235 = vrot.slane %v2207, %v2234
  %v2236 = vcombine.high %v2214, %v2214
  %v2237 = vcombine.high %v2221, %v2221
  %v2238 = vcombine.high %v2228, %v2228
  %v2239 = vcombine.high %v2235, %v2235
  %v2240 = vcombine.high %v1748, %v1748
  %v2242 = vunpack.c.l.s4 1966171168
  %v2243 = vunpack.c.0.s8 %v2242
  %v2244 = vlaneseq
  %v2245 = vshrl.u32 %v2244, 7
  %v2246 = vsub.s32 %v2243, %v2245
  %v2247 = vrot.slane %v1748, %v2246
  %v2249 = vunpack.c.l.s4 1966171168
  %v2250 = vunpack.c.0.s8 %v2249
  %v2251 = vlaneseq
  %v2252 = vshrl.u32 %v2251, 7
  %v2253 = vsub.s32 %v2250, %v2252
  %v2254 = vrot.slane %v2240, %v2253
  %v2255 = vcombine.high %v2247, %v2247
  %v2256 = vcombine.high %v2254, %v2254
  %v2258 = vunpack.c.l.s4 1966171168
  %v2259 = vunpack.c.0.s8 %v2258
  %v2260 = vlaneseq
  %v2261 = vshrl.u32 %v2260, 7
  %v2262 = vsub.s32 %v2259, %v2261
  %v2263 = vrot.slane %v2247, %v2262
  %v2265 = vunpack.c.l.s4 1966171168
  %v2266 = vunpack.c.0.s8 %v2265
  %v2267 = vlaneseq
  %v2268 = vshrl.u32 %v2267, 7
  %v2269 = vsub.s32 %v2266, %v2268
  %v2270 = vrot.slane %v2254, %v2269
  %v2272 = vunpack.c.l.s4 1966171168
  %v2273 = vunpack.c.0.s8 %v2272
  %v2274 = vlaneseq
  %v2275 = vshrl.u32 %v2274, 7
  %v2276 = vsub.s32 %v2273, %v2275
  %v2277 = vrot.slane %v2255, %v2276
  %v2279 = vunpack.c.l.s4 1966171168
  %v2280 = vunpack.c.0.s8 %v2279
  %v2281 = vlaneseq
  %v2282 = vshrl.u32 %v2281, 7
  %v2283 = vsub.s32 %v2280, %v2282
  %v2284 = vrot.slane %v2256, %v2283
  %v2285 = vcombine.high %v2263, %v2263
  %v2286 = vcombine.high %v2270, %v2270
  %v2287 = vcombine.high %v2277, %v2277
  %v2288 = vcombine.high %v2284, %v2284
  %v2289 = vlaneseq
  %v2290 = vshrl.u32 %v2289, 7
  %v2291 = vsub.s32 0, %v2290
  %v2292 = vrot.slane %v2214, %v2291
  %v2293 = vlaneseq
  %v2294 = vshrl.u32 %v2293, 7
  %v2295 = vsub.s32 0, %v2294
  %v2296 = vrot.slane %v2228, %v2295
  %v2297 = vlaneseq
  %v2298 = vshrl.u32 %v2297, 7
  %v2299 = vsub.s32 0, %v2298
  %v2300 = vrot.slane %v2236, %v2299
  %v2301 = vlaneseq
  %v2302 = vshrl.u32 %v2301, 7
  %v2303 = vsub.s32 0, %v2302
  %v2304 = vrot.slane %v2238, %v2303
  %v2305 = vlaneseq
  %v2306 = vshrl.u32 %v2305, 7
  %v2307 = vsub.s32 0, %v2306
  %v2308 = vrot.slane %v2221, %v2307
  %v2309 = vlaneseq
  %v2310 = vshrl.u32 %v2309, 7
  %v2311 = vsub.s32 0, %v2310
  %v2312 = vrot.slane %v2235, %v2311
  %v2313 = vlaneseq
  %v2314 = vshrl.u32 %v2313, 7
  %v2315 = vsub.s32 0, %v2314
  %v2316 = vrot.slane %v2237, %v2315
  %v2317 = vlaneseq
  %v2318 = vshrl.u32 %v2317, 7
  %v2319 = vsub.s32 0, %v2318
  %v2320 = vrot.slane %v2239, %v2319
  %v2321 = vlaneseq
  %v2322 = vshrl.u32 %v2321, 7
  %v2323 = vsub.s32 0, %v2322
  %v2324 = vrot.slane %v2263, %v2323
  %v2325 = vlaneseq
  %v2326 = vshrl.u32 %v2325, 7
  %v2327 = vsub.s32 0, %v2326
  %v2328 = vrot.slane %v2277, %v2327
  %v2329 = vlaneseq
  %v2330 = vshrl.u32 %v2329, 7
  %v2331 = vsub.s32 0, %v2330
  %v2332 = vrot.slane %v2285, %v2331
  %v2333 = vlaneseq
  %v2334 = vshrl.u32 %v2333, 7
  %v2335 = vsub.s32 0, %v2334
  %v2336 = vrot.slane %v2287, %v2335
  %v2337 = vlaneseq
  %v2338 = vshrl.u32 %v2337, 7
  %v2339 = vsub.s32 0, %v2338
  %v2340 = vrot.slane %v2270, %v2339
  %v2341 = vlaneseq
  %v2342 = vshrl.u32 %v2341, 7
  %v2343 = vsub.s32 0, %v2342
  %v2344 = vrot.slane %v2284, %v2343
  %v2345 = vlaneseq
  %v2346 = vshrl.u32 %v2345, 7
  %v2347 = vsub.s32 0, %v2346
  %v2348 = vrot.slane %v2286, %v2347
  %v2349 = vlaneseq
  %v2350 = vshrl.u32 %v2349, 7
  %v2351 = vsub.s32 0, %v2350
  %v2352 = vrot.slane %v2288, %v2351
  %v2369 = vsub.f32 %v2083, %v2292
  %v2370 = vsub.f32 %v2090, %v2296
  %v2371 = vsub.f32 %v2097, %v2300
  %v2372 = vsub.f32 %v2104, %v2304
  %v2373 = vsub.f32 %v2111, %v2308
  %v2374 = vsub.f32 %v2118, %v2312
  %v2375 = vsub.f32 %v2125, %v2316
  %v2376 = vsub.f32 %v2132, %v2320
  %v2377 = vsub.f32 %v2139, %v2324
  %v2378 = vsub.f32 %v2146, %v2328
  %v2379 = vsub.f32 %v2153, %v2332
  %v2380 = vsub.f32 %v2160, %v2336
  %v2381 = vsub.f32 %v2167, %v2340
  %v2382 = vsub.f32 %v2174, %v2344
  %v2383 = vsub.f32 %v2181, %v2348
  %v2384 = vsub.f32 %v2188, %v2352
  %v2385 = vmul.f32 %v2369, %v2369
  %v2386 = vmul.f32 %v2370, %v2370
  %v2387 = vmul.f32 %v2371, %v2371
  %v2388 = vmul.f32 %v2372, %v2372
  %v2389 = vmul.f32 %v2373, %v2373
  %v2390 = vmul.f32 %v2374, %v2374
  %v2391 = vmul.f32 %v2375, %v2375
  %v2392 = vmul.f32 %v2376, %v2376
  %v2393 = vmul.f32 %v2377, %v2377
  %v2394 = vmul.f32 %v2378, %v2378
  %v2395 = vmul.f32 %v2379, %v2379
  %v2396 = vmul.f32 %v2380, %v2380
  %v2397 = vmul.f32 %v2381, %v2381
  %v2398 = vmul.f32 %v2382, %v2382
  %v2399 = vmul.f32 %v2383, %v2383
  %v2400 = vmul.f32 %v2384, %v2384
  %v2401 = vlaneseq
  %v2402 = vshrl.u32 %v2401, 7
  %v2403 = vsub.s32 0, %v2402
  %v2404 = vrot.slane %v1749, %v2403
  %2406 = vbcast.lane.b32.xlu0 %v2404, 256
  %v2407 = vpop.permute.xlu0 %2406
  %v2408 = vlaneseq
  %v2409 = vshrl.u32 %v2408, 7
  %v2410 = vsub.s32 1, %v2409
  %v2411 = vrot.slane %v1749, %v2410
  %2413 = vbcast.lane.b32.xlu0 %v2411, 256
  %v2414 = vpop.permute.xlu0 %2413
  %v2415 = vlaneseq
  %v2416 = vshrl.u32 %v2415, 7
  %v2417 = vsub.s32 2, %v2416
  %v2418 = vrot.slane %v1749, %v2417
  %2420 = vbcast.lane.b32.xlu0 %v2418, 256
  %v2421 = vpop.permute.xlu0 %2420
  %v2422 = vlaneseq
  %v2423 = vshrl.u32 %v2422, 7
  %v2424 = vsub.s32 3, %v2423
  %v2425 = vrot.slane %v1749, %v2424
  %2427 = vbcast.lane.b32.xlu0 %v2425, 256
  %v2428 = vpop.permute.xlu0 %2427
  %v2429 = vlaneseq
  %v2430 = vshrl.u32 %v2429, 7
  %v2431 = vsub.s32 4, %v2430
  %v2432 = vrot.slane %v1749, %v2431
  %2434 = vbcast.lane.b32.xlu0 %v2432, 256
  %v2435 = vpop.permute.xlu0 %2434
  %v2436 = vlaneseq
  %v2437 = vshrl.u32 %v2436, 7
  %v2438 = vsub.s32 5, %v2437
  %v2439 = vrot.slane %v1749, %v2438
  %2441 = vbcast.lane.b32.xlu0 %v2439, 256
  %v2442 = vpop.permute.xlu0 %2441
  %v2443 = vlaneseq
  %v2444 = vshrl.u32 %v2443, 7
  %v2445 = vsub.s32 6, %v2444
  %v2446 = vrot.slane %v1749, %v2445
  %2448 = vbcast.lane.b32.xlu0 %v2446, 256
  %v2449 = vpop.permute.xlu0 %2448
  %v2450 = vlaneseq
  %v2451 = vshrl.u32 %v2450, 7
  %v2452 = vsub.s32 7, %v2451
  %v2453 = vrot.slane %v1749, %v2452
  %2455 = vbcast.lane.b32.xlu0 %v2453, 256
  %v2456 = vpop.permute.xlu0 %2455
  %v2457 = vlaneseq
  %v2458 = vshrl.u32 %v2457, 7
  %v2459 = vsub.s32 0, %v2458
  %v2460 = vrot.slane %v1750, %v2459
  %2462 = vbcast.lane.b32.xlu0 %v2460, 256
  %v2463 = vpop.permute.xlu0 %2462
  %v2464 = vlaneseq
  %v2465 = vshrl.u32 %v2464, 7
  %v2466 = vsub.s32 1, %v2465
  %v2467 = vrot.slane %v1750, %v2466
  %2469 = vbcast.lane.b32.xlu0 %v2467, 256
  %v2470 = vpop.permute.xlu0 %2469
  %v2471 = vlaneseq
  %v2472 = vshrl.u32 %v2471, 7
  %v2473 = vsub.s32 2, %v2472
  %v2474 = vrot.slane %v1750, %v2473
  %2476 = vbcast.lane.b32.xlu0 %v2474, 256
  %v2477 = vpop.permute.xlu0 %2476
  %v2478 = vlaneseq
  %v2479 = vshrl.u32 %v2478, 7
  %v2480 = vsub.s32 3, %v2479
  %v2481 = vrot.slane %v1750, %v2480
  %2483 = vbcast.lane.b32.xlu0 %v2481, 256
  %v2484 = vpop.permute.xlu0 %2483
  %v2485 = vlaneseq
  %v2486 = vshrl.u32 %v2485, 7
  %v2487 = vsub.s32 4, %v2486
  %v2488 = vrot.slane %v1750, %v2487
  %2490 = vbcast.lane.b32.xlu0 %v2488, 256
  %v2491 = vpop.permute.xlu0 %2490
  %v2492 = vlaneseq
  %v2493 = vshrl.u32 %v2492, 7
  %v2494 = vsub.s32 5, %v2493
  %v2495 = vrot.slane %v1750, %v2494
  %2497 = vbcast.lane.b32.xlu0 %v2495, 256
  %v2498 = vpop.permute.xlu0 %2497
  %v2499 = vlaneseq
  %v2500 = vshrl.u32 %v2499, 7
  %v2501 = vsub.s32 6, %v2500
  %v2502 = vrot.slane %v1750, %v2501
  %2504 = vbcast.lane.b32.xlu0 %v2502, 256
  %v2505 = vpop.permute.xlu0 %2504
  %v2506 = vlaneseq
  %v2507 = vshrl.u32 %v2506, 7
  %v2508 = vsub.s32 7, %v2507
  %v2509 = vrot.slane %v1750, %v2508
  %2511 = vbcast.lane.b32.xlu0 %v2509, 256
  %v2512 = vpop.permute.xlu0 %2511
  %v2515 = vcombine.high %v1749, %v1749
  %v2517 = vunpack.c.l.s4 1966171168
  %v2518 = vunpack.c.0.s8 %v2517
  %v2519 = vlaneseq
  %v2520 = vshrl.u32 %v2519, 7
  %v2521 = vsub.s32 %v2518, %v2520
  %v2522 = vrot.slane %v1749, %v2521
  %v2524 = vunpack.c.l.s4 1966171168
  %v2525 = vunpack.c.0.s8 %v2524
  %v2526 = vlaneseq
  %v2527 = vshrl.u32 %v2526, 7
  %v2528 = vsub.s32 %v2525, %v2527
  %v2529 = vrot.slane %v2515, %v2528
  %v2530 = vcombine.high %v2522, %v2522
  %v2531 = vcombine.high %v2529, %v2529
  %v2533 = vunpack.c.l.s4 1966171168
  %v2534 = vunpack.c.0.s8 %v2533
  %v2535 = vlaneseq
  %v2536 = vshrl.u32 %v2535, 7
  %v2537 = vsub.s32 %v2534, %v2536
  %v2538 = vrot.slane %v2522, %v2537
  %v2540 = vunpack.c.l.s4 1966171168
  %v2541 = vunpack.c.0.s8 %v2540
  %v2542 = vlaneseq
  %v2543 = vshrl.u32 %v2542, 7
  %v2544 = vsub.s32 %v2541, %v2543
  %v2545 = vrot.slane %v2529, %v2544
  %v2547 = vunpack.c.l.s4 1966171168
  %v2548 = vunpack.c.0.s8 %v2547
  %v2549 = vlaneseq
  %v2550 = vshrl.u32 %v2549, 7
  %v2551 = vsub.s32 %v2548, %v2550
  %v2552 = vrot.slane %v2530, %v2551
  %v2554 = vunpack.c.l.s4 1966171168
  %v2555 = vunpack.c.0.s8 %v2554
  %v2556 = vlaneseq
  %v2557 = vshrl.u32 %v2556, 7
  %v2558 = vsub.s32 %v2555, %v2557
  %v2559 = vrot.slane %v2531, %v2558
  %v2560 = vcombine.high %v2538, %v2538
  %v2561 = vcombine.high %v2545, %v2545
  %v2562 = vcombine.high %v2552, %v2552
  %v2563 = vcombine.high %v2559, %v2559
  %v2564 = vcombine.high %v1750, %v1750
  %v2566 = vunpack.c.l.s4 1966171168
  %v2567 = vunpack.c.0.s8 %v2566
  %v2568 = vlaneseq
  %v2569 = vshrl.u32 %v2568, 7
  %v2570 = vsub.s32 %v2567, %v2569
  %v2571 = vrot.slane %v1750, %v2570
  %v2573 = vunpack.c.l.s4 1966171168
  %v2574 = vunpack.c.0.s8 %v2573
  %v2575 = vlaneseq
  %v2576 = vshrl.u32 %v2575, 7
  %v2577 = vsub.s32 %v2574, %v2576
  %v2578 = vrot.slane %v2564, %v2577
  %v2579 = vcombine.high %v2571, %v2571
  %v2580 = vcombine.high %v2578, %v2578
  %v2582 = vunpack.c.l.s4 1966171168
  %v2583 = vunpack.c.0.s8 %v2582
  %v2584 = vlaneseq
  %v2585 = vshrl.u32 %v2584, 7
  %v2586 = vsub.s32 %v2583, %v2585
  %v2587 = vrot.slane %v2571, %v2586
  %v2589 = vunpack.c.l.s4 1966171168
  %v2590 = vunpack.c.0.s8 %v2589
  %v2591 = vlaneseq
  %v2592 = vshrl.u32 %v2591, 7
  %v2593 = vsub.s32 %v2590, %v2592
  %v2594 = vrot.slane %v2578, %v2593
  %v2596 = vunpack.c.l.s4 1966171168
  %v2597 = vunpack.c.0.s8 %v2596
  %v2598 = vlaneseq
  %v2599 = vshrl.u32 %v2598, 7
  %v2600 = vsub.s32 %v2597, %v2599
  %v2601 = vrot.slane %v2579, %v2600
  %v2603 = vunpack.c.l.s4 1966171168
  %v2604 = vunpack.c.0.s8 %v2603
  %v2605 = vlaneseq
  %v2606 = vshrl.u32 %v2605, 7
  %v2607 = vsub.s32 %v2604, %v2606
  %v2608 = vrot.slane %v2580, %v2607
  %v2609 = vcombine.high %v2587, %v2587
  %v2610 = vcombine.high %v2594, %v2594
  %v2611 = vcombine.high %v2601, %v2601
  %v2612 = vcombine.high %v2608, %v2608
  %v2613 = vlaneseq
  %v2614 = vshrl.u32 %v2613, 7
  %v2615 = vsub.s32 0, %v2614
  %v2616 = vrot.slane %v2538, %v2615
  %v2617 = vlaneseq
  %v2618 = vshrl.u32 %v2617, 7
  %v2619 = vsub.s32 0, %v2618
  %v2620 = vrot.slane %v2552, %v2619
  %v2621 = vlaneseq
  %v2622 = vshrl.u32 %v2621, 7
  %v2623 = vsub.s32 0, %v2622
  %v2624 = vrot.slane %v2560, %v2623
  %v2625 = vlaneseq
  %v2626 = vshrl.u32 %v2625, 7
  %v2627 = vsub.s32 0, %v2626
  %v2628 = vrot.slane %v2562, %v2627
  %v2629 = vlaneseq
  %v2630 = vshrl.u32 %v2629, 7
  %v2631 = vsub.s32 0, %v2630
  %v2632 = vrot.slane %v2545, %v2631
  %v2633 = vlaneseq
  %v2634 = vshrl.u32 %v2633, 7
  %v2635 = vsub.s32 0, %v2634
  %v2636 = vrot.slane %v2559, %v2635
  %v2637 = vlaneseq
  %v2638 = vshrl.u32 %v2637, 7
  %v2639 = vsub.s32 0, %v2638
  %v2640 = vrot.slane %v2561, %v2639
  %v2641 = vlaneseq
  %v2642 = vshrl.u32 %v2641, 7
  %v2643 = vsub.s32 0, %v2642
  %v2644 = vrot.slane %v2563, %v2643
  %v2645 = vlaneseq
  %v2646 = vshrl.u32 %v2645, 7
  %v2647 = vsub.s32 0, %v2646
  %v2648 = vrot.slane %v2587, %v2647
  %v2649 = vlaneseq
  %v2650 = vshrl.u32 %v2649, 7
  %v2651 = vsub.s32 0, %v2650
  %v2652 = vrot.slane %v2601, %v2651
  %v2653 = vlaneseq
  %v2654 = vshrl.u32 %v2653, 7
  %v2655 = vsub.s32 0, %v2654
  %v2656 = vrot.slane %v2609, %v2655
  %v2657 = vlaneseq
  %v2658 = vshrl.u32 %v2657, 7
  %v2659 = vsub.s32 0, %v2658
  %v2660 = vrot.slane %v2611, %v2659
  %v2661 = vlaneseq
  %v2662 = vshrl.u32 %v2661, 7
  %v2663 = vsub.s32 0, %v2662
  %v2664 = vrot.slane %v2594, %v2663
  %v2665 = vlaneseq
  %v2666 = vshrl.u32 %v2665, 7
  %v2667 = vsub.s32 0, %v2666
  %v2668 = vrot.slane %v2608, %v2667
  %v2669 = vlaneseq
  %v2670 = vshrl.u32 %v2669, 7
  %v2671 = vsub.s32 0, %v2670
  %v2672 = vrot.slane %v2610, %v2671
  %v2673 = vlaneseq
  %v2674 = vshrl.u32 %v2673, 7
  %v2675 = vsub.s32 0, %v2674
  %v2676 = vrot.slane %v2612, %v2675
  %v2693 = vsub.f32 %v2407, %v2616
  %v2694 = vsub.f32 %v2414, %v2620
  %v2695 = vsub.f32 %v2421, %v2624
  %v2696 = vsub.f32 %v2428, %v2628
  %v2697 = vsub.f32 %v2435, %v2632
  %v2698 = vsub.f32 %v2442, %v2636
  %v2699 = vsub.f32 %v2449, %v2640
  %v2700 = vsub.f32 %v2456, %v2644
  %v2701 = vsub.f32 %v2463, %v2648
  %v2702 = vsub.f32 %v2470, %v2652
  %v2703 = vsub.f32 %v2477, %v2656
  %v2704 = vsub.f32 %v2484, %v2660
  %v2705 = vsub.f32 %v2491, %v2664
  %v2706 = vsub.f32 %v2498, %v2668
  %v2707 = vsub.f32 %v2505, %v2672
  %v2708 = vsub.f32 %v2512, %v2676
  %v2709 = vmul.f32 %v2693, %v2693
  %v2710 = vmul.f32 %v2694, %v2694
  %v2711 = vmul.f32 %v2695, %v2695
  %v2712 = vmul.f32 %v2696, %v2696
  %v2713 = vmul.f32 %v2697, %v2697
  %v2714 = vmul.f32 %v2698, %v2698
  %v2715 = vmul.f32 %v2699, %v2699
  %v2716 = vmul.f32 %v2700, %v2700
  %v2717 = vmul.f32 %v2701, %v2701
  %v2718 = vmul.f32 %v2702, %v2702
  %v2719 = vmul.f32 %v2703, %v2703
  %v2720 = vmul.f32 %v2704, %v2704
  %v2721 = vmul.f32 %v2705, %v2705
  %v2722 = vmul.f32 %v2706, %v2706
  %v2723 = vmul.f32 %v2707, %v2707
  %v2724 = vmul.f32 %v2708, %v2708
  %v2725 = vadd.f32 %v2385, %v2709
  %v2726 = vadd.f32 %v2386, %v2710
  %v2727 = vadd.f32 %v2387, %v2711
  %v2728 = vadd.f32 %v2388, %v2712
  %v2729 = vadd.f32 %v2389, %v2713
  %v2730 = vadd.f32 %v2390, %v2714
  %v2731 = vadd.f32 %v2391, %v2715
  %v2732 = vadd.f32 %v2392, %v2716
  %v2733 = vadd.f32 %v2393, %v2717
  %v2734 = vadd.f32 %v2394, %v2718
  %v2735 = vadd.f32 %v2395, %v2719
  %v2736 = vadd.f32 %v2396, %v2720
  %v2737 = vadd.f32 %v2397, %v2721
  %v2738 = vadd.f32 %v2398, %v2722
  %v2739 = vadd.f32 %v2399, %v2723
  %v2740 = vadd.f32 %v2400, %v2724
  %v2741 = vrsqrt.pop %v2725
  %v2742 = vmul.f32 %v2725, %v2741
  %vm2743 = vcmp.eq.f32.partialorder %v2725, inf
  %v2744 = vsel %vm2743, %v2725, %v2742
  %vm2745 = vcmp.eq.f32.partialorder %v2725, 0.0
  %v2746 = vand.u32 %v2725, 2147483648
  %v2747 = vsel %vm2745, %v2746, %v2744
  %v2748 = vrsqrt.pop %v2726
  %v2749 = vmul.f32 %v2726, %v2748
  %vm2750 = vcmp.eq.f32.partialorder %v2726, inf
  %v2751 = vsel %vm2750, %v2726, %v2749
  %vm2752 = vcmp.eq.f32.partialorder %v2726, 0.0
  %v2753 = vand.u32 %v2726, 2147483648
  %v2754 = vsel %vm2752, %v2753, %v2751
  %v2755 = vrsqrt.pop %v2727
  %v2756 = vmul.f32 %v2727, %v2755
  %vm2757 = vcmp.eq.f32.partialorder %v2727, inf
  %v2758 = vsel %vm2757, %v2727, %v2756
  %vm2759 = vcmp.eq.f32.partialorder %v2727, 0.0
  %v2760 = vand.u32 %v2727, 2147483648
  %v2761 = vsel %vm2759, %v2760, %v2758
  %v2762 = vrsqrt.pop %v2728
  %v2763 = vmul.f32 %v2728, %v2762
  %vm2764 = vcmp.eq.f32.partialorder %v2728, inf
  %v2765 = vsel %vm2764, %v2728, %v2763
  %vm2766 = vcmp.eq.f32.partialorder %v2728, 0.0
  %v2767 = vand.u32 %v2728, 2147483648
  %v2768 = vsel %vm2766, %v2767, %v2765
  %v2769 = vrsqrt.pop %v2729
  %v2770 = vmul.f32 %v2729, %v2769
  %vm2771 = vcmp.eq.f32.partialorder %v2729, inf
  %v2772 = vsel %vm2771, %v2729, %v2770
  %vm2773 = vcmp.eq.f32.partialorder %v2729, 0.0
  %v2774 = vand.u32 %v2729, 2147483648
  %v2775 = vsel %vm2773, %v2774, %v2772
  %v2776 = vrsqrt.pop %v2730
  %v2777 = vmul.f32 %v2730, %v2776
  %vm2778 = vcmp.eq.f32.partialorder %v2730, inf
  %v2779 = vsel %vm2778, %v2730, %v2777
  %vm2780 = vcmp.eq.f32.partialorder %v2730, 0.0
  %v2781 = vand.u32 %v2730, 2147483648
  %v2782 = vsel %vm2780, %v2781, %v2779
  %v2783 = vrsqrt.pop %v2731
  %v2784 = vmul.f32 %v2731, %v2783
  %vm2785 = vcmp.eq.f32.partialorder %v2731, inf
  %v2786 = vsel %vm2785, %v2731, %v2784
  %vm2787 = vcmp.eq.f32.partialorder %v2731, 0.0
  %v2788 = vand.u32 %v2731, 2147483648
  %v2789 = vsel %vm2787, %v2788, %v2786
  %v2790 = vrsqrt.pop %v2732
  %v2791 = vmul.f32 %v2732, %v2790
  %vm2792 = vcmp.eq.f32.partialorder %v2732, inf
  %v2793 = vsel %vm2792, %v2732, %v2791
  %vm2794 = vcmp.eq.f32.partialorder %v2732, 0.0
  %v2795 = vand.u32 %v2732, 2147483648
  %v2796 = vsel %vm2794, %v2795, %v2793
  %v2797 = vrsqrt.pop %v2733
  %v2798 = vmul.f32 %v2733, %v2797
  %vm2799 = vcmp.eq.f32.partialorder %v2733, inf
  %v2800 = vsel %vm2799, %v2733, %v2798
  %vm2801 = vcmp.eq.f32.partialorder %v2733, 0.0
  %v2802 = vand.u32 %v2733, 2147483648
  %v2803 = vsel %vm2801, %v2802, %v2800
  %v2804 = vrsqrt.pop %v2734
  %v2805 = vmul.f32 %v2734, %v2804
  %vm2806 = vcmp.eq.f32.partialorder %v2734, inf
  %v2807 = vsel %vm2806, %v2734, %v2805
  %vm2808 = vcmp.eq.f32.partialorder %v2734, 0.0
  %v2809 = vand.u32 %v2734, 2147483648
  %v2810 = vsel %vm2808, %v2809, %v2807
  %v2811 = vrsqrt.pop %v2735
  %v2812 = vmul.f32 %v2735, %v2811
  %vm2813 = vcmp.eq.f32.partialorder %v2735, inf
  %v2814 = vsel %vm2813, %v2735, %v2812
  %vm2815 = vcmp.eq.f32.partialorder %v2735, 0.0
  %v2816 = vand.u32 %v2735, 2147483648
  %v2817 = vsel %vm2815, %v2816, %v2814
  %v2818 = vrsqrt.pop %v2736
  %v2819 = vmul.f32 %v2736, %v2818
  %vm2820 = vcmp.eq.f32.partialorder %v2736, inf
  %v2821 = vsel %vm2820, %v2736, %v2819
  %vm2822 = vcmp.eq.f32.partialorder %v2736, 0.0
  %v2823 = vand.u32 %v2736, 2147483648
  %v2824 = vsel %vm2822, %v2823, %v2821
  %v2825 = vrsqrt.pop %v2737
  %v2826 = vmul.f32 %v2737, %v2825
  %vm2827 = vcmp.eq.f32.partialorder %v2737, inf
  %v2828 = vsel %vm2827, %v2737, %v2826
  %vm2829 = vcmp.eq.f32.partialorder %v2737, 0.0
  %v2830 = vand.u32 %v2737, 2147483648
  %v2831 = vsel %vm2829, %v2830, %v2828
  %v2832 = vrsqrt.pop %v2738
  %v2833 = vmul.f32 %v2738, %v2832
  %vm2834 = vcmp.eq.f32.partialorder %v2738, inf
  %v2835 = vsel %vm2834, %v2738, %v2833
  %vm2836 = vcmp.eq.f32.partialorder %v2738, 0.0
  %v2837 = vand.u32 %v2738, 2147483648
  %v2838 = vsel %vm2836, %v2837, %v2835
  %v2839 = vrsqrt.pop %v2739
  %v2840 = vmul.f32 %v2739, %v2839
  %vm2841 = vcmp.eq.f32.partialorder %v2739, inf
  %v2842 = vsel %vm2841, %v2739, %v2840
  %vm2843 = vcmp.eq.f32.partialorder %v2739, 0.0
  %v2844 = vand.u32 %v2739, 2147483648
  %v2845 = vsel %vm2843, %v2844, %v2842
  %v2846 = vrsqrt.pop %v2740
  %v2847 = vmul.f32 %v2740, %v2846
  %vm2848 = vcmp.eq.f32.partialorder %v2740, inf
  %v2849 = vsel %vm2848, %v2740, %v2847
  %vm2850 = vcmp.eq.f32.partialorder %v2740, 0.0
  %v2851 = vand.u32 %v2740, 2147483648
  %v2852 = vsel %vm2850, %v2851, %v2849
  %v2853 = vmul.f32 %v2061, 7.2722054e-05
  %v2854 = vmul.f32 %v2062, 7.2722054e-05
  %v2855 = vmul.f32 %v2063, 7.2722054e-05
  %v2856 = vmul.f32 %v2064, 7.2722054e-05
  %v2857 = vmul.f32 %v2065, 7.2722054e-05
  %v2858 = vmul.f32 %v2066, 7.2722054e-05
  %v2859 = vmul.f32 %v2067, 7.2722054e-05
  %v2860 = vmul.f32 %v2068, 7.2722054e-05
  %v2861 = vmul.f32 %v2069, 7.2722054e-05
  %v2862 = vmul.f32 %v2070, 7.2722054e-05
  %v2863 = vmul.f32 %v2071, 7.2722054e-05
  %v2864 = vmul.f32 %v2072, 7.2722054e-05
  %v2865 = vmul.f32 %v2073, 7.2722054e-05
  %v2866 = vmul.f32 %v2074, 7.2722054e-05
  %v2867 = vmul.f32 %v2075, 7.2722054e-05
  %v2868 = vmul.f32 %v2076, 7.2722054e-05
  %v2869 = vand.u32 2147483647, %v2853
  %vm2870 = vcmp.le.f32.partialorder %v2869, 0.7853982
  %vm2871 = vcmp.lt.s32.totalorder %v2853, 0
  %v2872 = vand.u32 %v2853, 2139095040
  %v2873 = vshrl.u32 %v2872, 23
  %v2874 = vsub.s32 %v2873, 127
  %v2875 = vand.u32 2147483647, %v2853
  %v2876 = vand.u32 %v2875, 8388607
  %v2877 = vor.u32 %v2876, 8388608
  %v2878 = vsub.s32 0, %v2877
  %v2879 = vadd.s32 %v2874, 1
  %vm2880 = vcmp.gt.s32.totalorder %v2879, 0
  %v2881 = vsel %vm2880, %v2879, 0
  %v2882 = vshrl.u32 %v2881, 5
  %v2883 = vand.u32 %v2881, 31
  %v2884 = vsub.s32 32, %v2883
  %v2885 = vshrl.u32 683565275, %v2884
  %v2886 = vshll.u32 683565275, %v2883
  %v2887 = vshrl.u32 2475754826, %v2884
  %v2888 = vor.u32 %v2886, %v2887
  %v2889 = vshll.u32 2475754826, %v2883
  %v2890 = vshrl.u32 2131351028, %v2884
  %v2891 = vor.u32 %v2889, %v2890
  %v2892 = vshll.u32 2131351028, %v2883
  %v2893 = vshrl.u32 2102212464, %v2884
  %v2894 = vor.u32 %v2892, %v2893
  %v2895 = vshll.u32 2102212464, %v2883
  %v2896 = vshrl.u32 920167782, %v2884
  %v2897 = vor.u32 %v2895, %v2896
  %v2898 = vshll.u32 920167782, %v2883
  %v2899 = vshrl.u32 1326507024, %v2884
  %v2900 = vor.u32 %v2898, %v2899
  %vm2901 = vcmp.lt.s32.totalorder %v2882, 1
  %vm2902 = vcmp.lt.s32.totalorder %v2882, 2
  %vm2903 = vcmp.lt.s32.totalorder %v2882, 3
  %vm2904 = vcmp.lt.s32.totalorder %v2882, 4
  %v2905 = vsel %vm2901, %v2885, %v2888
  %v2906 = vsel %vm2904, %v2894, 2102212464
  %v2907 = vsel %vm2903, %v2891, %v2906
  %v2908 = vsel %vm2902, %v2905, %v2907
  %v2909 = vsel %vm2901, %v2888, %v2891
  %v2910 = vsel %vm2904, %v2897, 920167782
  %v2911 = vsel %vm2903, %v2894, %v2910
  %v2912 = vsel %vm2902, %v2909, %v2911
  %v2913 = vsel %vm2901, %v2891, %v2894
  %v2914 = vsel %vm2904, %v2900, 1326507024
  %v2915 = vsel %vm2903, %v2897, %v2914
  %v2916 = vsel %vm2902, %v2913, %v2915
  %v2917 = vshll.u32 %v2877, 8
  %v2918 = vmul.u32.u64.compose %v2917, %v2916
  %v2919 = vextract.low.u32 %v2918
  %v2920 = vextract.high.u32 %v2918
  %v2921 = vmul.u32.u64.compose %v2917, %v2912
  %v2922 = vextract.low.u32 %v2921
  %v2923 = vextract.high.u32 %v2921
  %v2924 = vmul.u32 %v2917, %v2908
  %v2925 = vadd.s32 %v2920, %v2922
  %vm2926 = vc.u32 %v2920, %v2922
  %v2927 = vadd.s32 %v2923, 1
  %v2928 = vsel %vm2926, %v2927, %v2923
  %v2929 = vadd.s32 %v2924, %v2928
  %v2930 = vadd.s32 %v2929, 536870912
  %v2931 = vshrl.u32 %v2930, 30
  %v2932 = vshll.u32 %v2931, 30
  %v2933 = vsub.s32 %v2929, %v2932
  %vm2934 = vcmp.lt.s32.totalorder %v2933, 0
  %v2935 = vsub.s32 0, %v2933
  %v2936 = vsel %vm2934, %v2935, %v2933
  %v2937 = vclz %v2936
  %v2938 = vsub.s32 %v2937, 2
  %vm2939 = vcmp.gt.s32.totalorder 0, %v2938
  %v2940 = vsel %vm2939, 0, %v2938
  %v2941 = vsub.s32 32, %v2940
  %v2942 = vshll.u32 %v2933, %v2940
  %v2943 = vshrl.u32 %v2925, %v2941
  %v2944 = vor.u32 %v2942, %v2943
  %v2945 = vsub.s32 4294967266, %v2940
  %v2946 = vadd.s32 %v2945, 127
  %v2947 = vshll.u32 %v2946, 23
  %v2948 = vor.u32 4788187, %v2947
  %v2949 = vand.u32 2147483647, %v2948
  %v2951 = vcvt.s32.f32 %v2944
  %v2952 = vmul.f32 %v2951, %v2949
  %v2953 = vxor.u32 %v2952, 2147483648
  %v2954 = vsel %vm2871, %v2953, %v2952
  %v2955 = vsub.s32 4, %v2931
  %v2956 = vsel %vm2871, %v2955, %v2931
  %v2957 = vsel %vm2870, %v2853, %v2954
  %v2958 = vsel %vm2870, 0, %v2956
  %v2959 = vcosq.f32.pop %v2957
  %v2960 = vsinq.f32.pop %v2957
  %vm2961 = vweird.f32 %v2853
  %v2962 = vand.u32 %v2958, 3
  %vm2963 = vcmp.lt.s32.totalorder %v2962, 2
  %vm2964 = vcmp.eq.s32.totalorder %v2962, 0
  %v2965 = vxor.u32 %v2960, 2147483648
  %v2966 = vsel %vm2964, %v2959, %v2965
  %vm2967 = vcmp.eq.s32.totalorder %v2962, 2
  %v2968 = vxor.u32 %v2959, 2147483648
  %v2969 = vsel %vm2967, %v2968, %v2960
  %v2970 = vsel %vm2963, %v2966, %v2969
  %v2971 = vsel %vm2961, nan, %v2970
  %v2972 = vand.u32 2147483647, %v2854
  %vm2973 = vcmp.le.f32.partialorder %v2972, 0.7853982
  %vm2974 = vcmp.lt.s32.totalorder %v2854, 0
  %v2975 = vand.u32 %v2854, 2139095040
  %v2976 = vshrl.u32 %v2975, 23
  %v2977 = vsub.s32 %v2976, 127
  %v2978 = vand.u32 2147483647, %v2854
  %v2979 = vand.u32 %v2978, 8388607
  %v2980 = vor.u32 %v2979, 8388608
  %v2981 = vsub.s32 0, %v2980
  %v2982 = vadd.s32 %v2977, 1
  %vm2983 = vcmp.gt.s32.totalorder %v2982, 0
  %v2984 = vsel %vm2983, %v2982, 0
  %v2985 = vshrl.u32 %v2984, 5
  %v2986 = vand.u32 %v2984, 31
  %v2987 = vsub.s32 32, %v2986
  %v2988 = vshrl.u32 683565275, %v2987
  %v2989 = vshll.u32 683565275, %v2986
  %v2990 = vshrl.u32 2475754826, %v2987
  %v2991 = vor.u32 %v2989, %v2990
  %v2992 = vshll.u32 2475754826, %v2986
  %v2993 = vshrl.u32 2131351028, %v2987
  %v2994 = vor.u32 %v2992, %v2993
  %v2995 = vshll.u32 2131351028, %v2986
  %v2996 = vshrl.u32 2102212464, %v2987
  %v2997 = vor.u32 %v2995, %v2996
  %v2998 = vshll.u32 2102212464, %v2986
  %v2999 = vshrl.u32 920167782, %v2987
  %v3000 = vor.u32 %v2998, %v2999
  %v3001 = vshll.u32 920167782, %v2986
  %v3002 = vshrl.u32 1326507024, %v2987
  %v3003 = vor.u32 %v3001, %v3002
  %vm3004 = vcmp.lt.s32.totalorder %v2985, 1
  %vm3005 = vcmp.lt.s32.totalorder %v2985, 2
  %vm3006 = vcmp.lt.s32.totalorder %v2985, 3
  %vm3007 = vcmp.lt.s32.totalorder %v2985, 4
  %v3008 = vsel %vm3004, %v2988, %v2991
  %v3009 = vsel %vm3007, %v2997, 2102212464
  %v3010 = vsel %vm3006, %v2994, %v3009
  %v3011 = vsel %vm3005, %v3008, %v3010
  %v3012 = vsel %vm3004, %v2991, %v2994
  %v3013 = vsel %vm3007, %v3000, 920167782
  %v3014 = vsel %vm3006, %v2997, %v3013
  %v3015 = vsel %vm3005, %v3012, %v3014
  %v3016 = vsel %vm3004, %v2994, %v2997
  %v3017 = vsel %vm3007, %v3003, 1326507024
  %v3018 = vsel %vm3006, %v3000, %v3017
  %v3019 = vsel %vm3005, %v3016, %v3018
  %v3020 = vshll.u32 %v2980, 8
  %v3021 = vmul.u32.u64.compose %v3020, %v3019
  %v3022 = vextract.low.u32 %v3021
  %v3023 = vextract.high.u32 %v3021
  %v3024 = vmul.u32.u64.compose %v3020, %v3015
  %v3025 = vextract.low.u32 %v3024
  %v3026 = vextract.high.u32 %v3024
  %v3027 = vmul.u32 %v3020, %v3011
  %v3028 = vadd.s32 %v3023, %v3025
  %vm3029 = vc.u32 %v3023, %v3025
  %v3030 = vadd.s32 %v3026, 1
  %v3031 = vsel %vm3029, %v3030, %v3026
  %v3032 = vadd.s32 %v3027, %v3031
  %v3033 = vadd.s32 %v3032, 536870912
  %v3034 = vshrl.u32 %v3033, 30
  %v3035 = vshll.u32 %v3034, 30
  %v3036 = vsub.s32 %v3032, %v3035
  %vm3037 = vcmp.lt.s32.totalorder %v3036, 0
  %v3038 = vsub.s32 0, %v3036
  %v3039 = vsel %vm3037, %v3038, %v3036
  %v3040 = vclz %v3039
  %v3041 = vsub.s32 %v3040, 2
  %vm3042 = vcmp.gt.s32.totalorder 0, %v3041
  %v3043 = vsel %vm3042, 0, %v3041
  %v3044 = vsub.s32 32, %v3043
  %v3045 = vshll.u32 %v3036, %v3043
  %v3046 = vshrl.u32 %v3028, %v3044
  %v3047 = vor.u32 %v3045, %v3046
  %v3048 = vsub.s32 4294967266, %v3043
  %v3049 = vadd.s32 %v3048, 127
  %v3050 = vshll.u32 %v3049, 23
  %v3051 = vor.u32 4788187, %v3050
  %v3052 = vand.u32 2147483647, %v3051
  %v3054 = vcvt.s32.f32 %v3047
  %v3055 = vmul.f32 %v3054, %v3052
  %v3056 = vxor.u32 %v3055, 2147483648
  %v3057 = vsel %vm2974, %v3056, %v3055
  %v3058 = vsub.s32 4, %v3034
  %v3059 = vsel %vm2974, %v3058, %v3034
  %v3060 = vsel %vm2973, %v2854, %v3057
  %v3061 = vsel %vm2973, 0, %v3059
  %v3062 = vcosq.f32.pop %v3060
  %v3063 = vsinq.f32.pop %v3060
  %vm3064 = vweird.f32 %v2854
  %v3065 = vand.u32 %v3061, 3
  %vm3066 = vcmp.lt.s32.totalorder %v3065, 2
  %vm3067 = vcmp.eq.s32.totalorder %v3065, 0
  %v3068 = vxor.u32 %v3063, 2147483648
  %v3069 = vsel %vm3067, %v3062, %v3068
  %vm3070 = vcmp.eq.s32.totalorder %v3065, 2
  %v3071 = vxor.u32 %v3062, 2147483648
  %v3072 = vsel %vm3070, %v3071, %v3063
  %v3073 = vsel %vm3066, %v3069, %v3072
  %v3074 = vsel %vm3064, nan, %v3073
  %v3075 = vand.u32 2147483647, %v2855
  %vm3076 = vcmp.le.f32.partialorder %v3075, 0.7853982
  %vm3077 = vcmp.lt.s32.totalorder %v2855, 0
  %v3078 = vand.u32 %v2855, 2139095040
  %v3079 = vshrl.u32 %v3078, 23
  %v3080 = vsub.s32 %v3079, 127
  %v3081 = vand.u32 2147483647, %v2855
  %v3082 = vand.u32 %v3081, 8388607
  %v3083 = vor.u32 %v3082, 8388608
  %v3084 = vsub.s32 0, %v3083
  %v3085 = vadd.s32 %v3080, 1
  %vm3086 = vcmp.gt.s32.totalorder %v3085, 0
  %v3087 = vsel %vm3086, %v3085, 0
  %v3088 = vshrl.u32 %v3087, 5
  %v3089 = vand.u32 %v3087, 31
  %v3090 = vsub.s32 32, %v3089
  %v3091 = vshrl.u32 683565275, %v3090
  %v3092 = vshll.u32 683565275, %v3089
  %v3093 = vshrl.u32 2475754826, %v3090
  %v3094 = vor.u32 %v3092, %v3093
  %v3095 = vshll.u32 2475754826, %v3089
  %v3096 = vshrl.u32 2131351028, %v3090
  %v3097 = vor.u32 %v3095, %v3096
  %v3098 = vshll.u32 2131351028, %v3089
  %v3099 = vshrl.u32 2102212464, %v3090
  %v3100 = vor.u32 %v3098, %v3099
  %v3101 = vshll.u32 2102212464, %v3089
  %v3102 = vshrl.u32 920167782, %v3090
  %v3103 = vor.u32 %v3101, %v3102
  %v3104 = vshll.u32 920167782, %v3089
  %v3105 = vshrl.u32 1326507024, %v3090
  %v3106 = vor.u32 %v3104, %v3105
  %vm3107 = vcmp.lt.s32.totalorder %v3088, 1
  %vm3108 = vcmp.lt.s32.totalorder %v3088, 2
  %vm3109 = vcmp.lt.s32.totalorder %v3088, 3
  %vm3110 = vcmp.lt.s32.totalorder %v3088, 4
  %v3111 = vsel %vm3107, %v3091, %v3094
  %v3112 = vsel %vm3110, %v3100, 2102212464
  %v3113 = vsel %vm3109, %v3097, %v3112
  %v3114 = vsel %vm3108, %v3111, %v3113
  %v3115 = vsel %vm3107, %v3094, %v3097
  %v3116 = vsel %vm3110, %v3103, 920167782
  %v3117 = vsel %vm3109, %v3100, %v3116
  %v3118 = vsel %vm3108, %v3115, %v3117
  %v3119 = vsel %vm3107, %v3097, %v3100
  %v3120 = vsel %vm3110, %v3106, 1326507024
  %v3121 = vsel %vm3109, %v3103, %v3120
  %v3122 = vsel %vm3108, %v3119, %v3121
  %v3123 = vshll.u32 %v3083, 8
  %v3124 = vmul.u32.u64.compose %v3123, %v3122
  %v3125 = vextract.low.u32 %v3124
  %v3126 = vextract.high.u32 %v3124
  %v3127 = vmul.u32.u64.compose %v3123, %v3118
  %v3128 = vextract.low.u32 %v3127
  %v3129 = vextract.high.u32 %v3127
  %v3130 = vmul.u32 %v3123, %v3114
  %v3131 = vadd.s32 %v3126, %v3128
  %vm3132 = vc.u32 %v3126, %v3128
  %v3133 = vadd.s32 %v3129, 1
  %v3134 = vsel %vm3132, %v3133, %v3129
  %v3135 = vadd.s32 %v3130, %v3134
  %v3136 = vadd.s32 %v3135, 536870912
  %v3137 = vshrl.u32 %v3136, 30
  %v3138 = vshll.u32 %v3137, 30
  %v3139 = vsub.s32 %v3135, %v3138
  %vm3140 = vcmp.lt.s32.totalorder %v3139, 0
  %v3141 = vsub.s32 0, %v3139
  %v3142 = vsel %vm3140, %v3141, %v3139
  %v3143 = vclz %v3142
  %v3144 = vsub.s32 %v3143, 2
  %vm3145 = vcmp.gt.s32.totalorder 0, %v3144
  %v3146 = vsel %vm3145, 0, %v3144
  %v3147 = vsub.s32 32, %v3146
  %v3148 = vshll.u32 %v3139, %v3146
  %v3149 = vshrl.u32 %v3131, %v3147
  %v3150 = vor.u32 %v3148, %v3149
  %v3151 = vsub.s32 4294967266, %v3146
  %v3152 = vadd.s32 %v3151, 127
  %v3153 = vshll.u32 %v3152, 23
  %v3154 = vor.u32 4788187, %v3153
  %v3155 = vand.u32 2147483647, %v3154
  %v3157 = vcvt.s32.f32 %v3150
  %v3158 = vmul.f32 %v3157, %v3155
  %v3159 = vxor.u32 %v3158, 2147483648
  %v3160 = vsel %vm3077, %v3159, %v3158
  %v3161 = vsub.s32 4, %v3137
  %v3162 = vsel %vm3077, %v3161, %v3137
  %v3163 = vsel %vm3076, %v2855, %v3160
  %v3164 = vsel %vm3076, 0, %v3162
  %v3165 = vcosq.f32.pop %v3163
  %v3166 = vsinq.f32.pop %v3163
  %vm3167 = vweird.f32 %v2855
  %v3168 = vand.u32 %v3164, 3
  %vm3169 = vcmp.lt.s32.totalorder %v3168, 2
  %vm3170 = vcmp.eq.s32.totalorder %v3168, 0
  %v3171 = vxor.u32 %v3166, 2147483648
  %v3172 = vsel %vm3170, %v3165, %v3171
  %vm3173 = vcmp.eq.s32.totalorder %v3168, 2
  %v3174 = vxor.u32 %v3165, 2147483648
  %v3175 = vsel %vm3173, %v3174, %v3166
  %v3176 = vsel %vm3169, %v3172, %v3175
  %v3177 = vsel %vm3167, nan, %v3176
  %v3178 = vand.u32 2147483647, %v2856
  %vm3179 = vcmp.le.f32.partialorder %v3178, 0.7853982
  %vm3180 = vcmp.lt.s32.totalorder %v2856, 0
  %v3181 = vand.u32 %v2856, 2139095040
  %v3182 = vshrl.u32 %v3181, 23
  %v3183 = vsub.s32 %v3182, 127
  %v3184 = vand.u32 2147483647, %v2856
  %v3185 = vand.u32 %v3184, 8388607
  %v3186 = vor.u32 %v3185, 8388608
  %v3187 = vsub.s32 0, %v3186
  %v3188 = vadd.s32 %v3183, 1
  %vm3189 = vcmp.gt.s32.totalorder %v3188, 0
  %v3190 = vsel %vm3189, %v3188, 0
  %v3191 = vshrl.u32 %v3190, 5
  %v3192 = vand.u32 %v3190, 31
  %v3193 = vsub.s32 32, %v3192
  %v3194 = vshrl.u32 683565275, %v3193
  %v3195 = vshll.u32 683565275, %v3192
  %v3196 = vshrl.u32 2475754826, %v3193
  %v3197 = vor.u32 %v3195, %v3196
  %v3198 = vshll.u32 2475754826, %v3192
  %v3199 = vshrl.u32 2131351028, %v3193
  %v3200 = vor.u32 %v3198, %v3199
  %v3201 = vshll.u32 2131351028, %v3192
  %v3202 = vshrl.u32 2102212464, %v3193
  %v3203 = vor.u32 %v3201, %v3202
  %v3204 = vshll.u32 2102212464, %v3192
  %v3205 = vshrl.u32 920167782, %v3193
  %v3206 = vor.u32 %v3204, %v3205
  %v3207 = vshll.u32 920167782, %v3192
  %v3208 = vshrl.u32 1326507024, %v3193
  %v3209 = vor.u32 %v3207, %v3208
  %vm3210 = vcmp.lt.s32.totalorder %v3191, 1
  %vm3211 = vcmp.lt.s32.totalorder %v3191, 2
  %vm3212 = vcmp.lt.s32.totalorder %v3191, 3
  %vm3213 = vcmp.lt.s32.totalorder %v3191, 4
  %v3214 = vsel %vm3210, %v3194, %v3197
  %v3215 = vsel %vm3213, %v3203, 2102212464
  %v3216 = vsel %vm3212, %v3200, %v3215
  %v3217 = vsel %vm3211, %v3214, %v3216
  %v3218 = vsel %vm3210, %v3197, %v3200
  %v3219 = vsel %vm3213, %v3206, 920167782
  %v3220 = vsel %vm3212, %v3203, %v3219
  %v3221 = vsel %vm3211, %v3218, %v3220
  %v3222 = vsel %vm3210, %v3200, %v3203
  %v3223 = vsel %vm3213, %v3209, 1326507024
  %v3224 = vsel %vm3212, %v3206, %v3223
  %v3225 = vsel %vm3211, %v3222, %v3224
  %v3226 = vshll.u32 %v3186, 8
  %v3227 = vmul.u32.u64.compose %v3226, %v3225
  %v3228 = vextract.low.u32 %v3227
  %v3229 = vextract.high.u32 %v3227
  %v3230 = vmul.u32.u64.compose %v3226, %v3221
  %v3231 = vextract.low.u32 %v3230
  %v3232 = vextract.high.u32 %v3230
  %v3233 = vmul.u32 %v3226, %v3217
  %v3234 = vadd.s32 %v3229, %v3231
  %vm3235 = vc.u32 %v3229, %v3231
  %v3236 = vadd.s32 %v3232, 1
  %v3237 = vsel %vm3235, %v3236, %v3232
  %v3238 = vadd.s32 %v3233, %v3237
  %v3239 = vadd.s32 %v3238, 536870912
  %v3240 = vshrl.u32 %v3239, 30
  %v3241 = vshll.u32 %v3240, 30
  %v3242 = vsub.s32 %v3238, %v3241
  %vm3243 = vcmp.lt.s32.totalorder %v3242, 0
  %v3244 = vsub.s32 0, %v3242
  %v3245 = vsel %vm3243, %v3244, %v3242
  %v3246 = vclz %v3245
  %v3247 = vsub.s32 %v3246, 2
  %vm3248 = vcmp.gt.s32.totalorder 0, %v3247
  %v3249 = vsel %vm3248, 0, %v3247
  %v3250 = vsub.s32 32, %v3249
  %v3251 = vshll.u32 %v3242, %v3249
  %v3252 = vshrl.u32 %v3234, %v3250
  %v3253 = vor.u32 %v3251, %v3252
  %v3254 = vsub.s32 4294967266, %v3249
  %v3255 = vadd.s32 %v3254, 127
  %v3256 = vshll.u32 %v3255, 23
  %v3257 = vor.u32 4788187, %v3256
  %v3258 = vand.u32 2147483647, %v3257
  %v3260 = vcvt.s32.f32 %v3253
  %v3261 = vmul.f32 %v3260, %v3258
  %v3262 = vxor.u32 %v3261, 2147483648
  %v3263 = vsel %vm3180, %v3262, %v3261
  %v3264 = vsub.s32 4, %v3240
  %v3265 = vsel %vm3180, %v3264, %v3240
  %v3266 = vsel %vm3179, %v2856, %v3263
  %v3267 = vsel %vm3179, 0, %v3265
  %v3268 = vcosq.f32.pop %v3266
  %v3269 = vsinq.f32.pop %v3266
  %vm3270 = vweird.f32 %v2856
  %v3271 = vand.u32 %v3267, 3
  %vm3272 = vcmp.lt.s32.totalorder %v3271, 2
  %vm3273 = vcmp.eq.s32.totalorder %v3271, 0
  %v3274 = vxor.u32 %v3269, 2147483648
  %v3275 = vsel %vm3273, %v3268, %v3274
  %vm3276 = vcmp.eq.s32.totalorder %v3271, 2
  %v3277 = vxor.u32 %v3268, 2147483648
  %v3278 = vsel %vm3276, %v3277, %v3269
  %v3279 = vsel %vm3272, %v3275, %v3278
  %v3280 = vsel %vm3270, nan, %v3279
  %v3281 = vand.u32 2147483647, %v2857
  %vm3282 = vcmp.le.f32.partialorder %v3281, 0.7853982
  %vm3283 = vcmp.lt.s32.totalorder %v2857, 0
  %v3284 = vand.u32 %v2857, 2139095040
  %v3285 = vshrl.u32 %v3284, 23
  %v3286 = vsub.s32 %v3285, 127
  %v3287 = vand.u32 2147483647, %v2857
  %v3288 = vand.u32 %v3287, 8388607
  %v3289 = vor.u32 %v3288, 8388608
  %v3290 = vsub.s32 0, %v3289
  %v3291 = vadd.s32 %v3286, 1
  %vm3292 = vcmp.gt.s32.totalorder %v3291, 0
  %v3293 = vsel %vm3292, %v3291, 0
  %v3294 = vshrl.u32 %v3293, 5
  %v3295 = vand.u32 %v3293, 31
  %v3296 = vsub.s32 32, %v3295
  %v3297 = vshrl.u32 683565275, %v3296
  %v3298 = vshll.u32 683565275, %v3295
  %v3299 = vshrl.u32 2475754826, %v3296
  %v3300 = vor.u32 %v3298, %v3299
  %v3301 = vshll.u32 2475754826, %v3295
  %v3302 = vshrl.u32 2131351028, %v3296
  %v3303 = vor.u32 %v3301, %v3302
  %v3304 = vshll.u32 2131351028, %v3295
  %v3305 = vshrl.u32 2102212464, %v3296
  %v3306 = vor.u32 %v3304, %v3305
  %v3307 = vshll.u32 2102212464, %v3295
  %v3308 = vshrl.u32 920167782, %v3296
  %v3309 = vor.u32 %v3307, %v3308
  %v3310 = vshll.u32 920167782, %v3295
  %v3311 = vshrl.u32 1326507024, %v3296
  %v3312 = vor.u32 %v3310, %v3311
  %vm3313 = vcmp.lt.s32.totalorder %v3294, 1
  %vm3314 = vcmp.lt.s32.totalorder %v3294, 2
  %vm3315 = vcmp.lt.s32.totalorder %v3294, 3
  %vm3316 = vcmp.lt.s32.totalorder %v3294, 4
  %v3317 = vsel %vm3313, %v3297, %v3300
  %v3318 = vsel %vm3316, %v3306, 2102212464
  %v3319 = vsel %vm3315, %v3303, %v3318
  %v3320 = vsel %vm3314, %v3317, %v3319
  %v3321 = vsel %vm3313, %v3300, %v3303
  %v3322 = vsel %vm3316, %v3309, 920167782
  %v3323 = vsel %vm3315, %v3306, %v3322
  %v3324 = vsel %vm3314, %v3321, %v3323
  %v3325 = vsel %vm3313, %v3303, %v3306
  %v3326 = vsel %vm3316, %v3312, 1326507024
  %v3327 = vsel %vm3315, %v3309, %v3326
  %v3328 = vsel %vm3314, %v3325, %v3327
  %v3329 = vshll.u32 %v3289, 8
  %v3330 = vmul.u32.u64.compose %v3329, %v3328
  %v3331 = vextract.low.u32 %v3330
  %v3332 = vextract.high.u32 %v3330
  %v3333 = vmul.u32.u64.compose %v3329, %v3324
  %v3334 = vextract.low.u32 %v3333
  %v3335 = vextract.high.u32 %v3333
  %v3336 = vmul.u32 %v3329, %v3320
  %v3337 = vadd.s32 %v3332, %v3334
  %vm3338 = vc.u32 %v3332, %v3334
  %v3339 = vadd.s32 %v3335, 1
  %v3340 = vsel %vm3338, %v3339, %v3335
  %v3341 = vadd.s32 %v3336, %v3340
  %v3342 = vadd.s32 %v3341, 536870912
  %v3343 = vshrl.u32 %v3342, 30
  %v3344 = vshll.u32 %v3343, 30
  %v3345 = vsub.s32 %v3341, %v3344
  %vm3346 = vcmp.lt.s32.totalorder %v3345, 0
  %v3347 = vsub.s32 0, %v3345
  %v3348 = vsel %vm3346, %v3347, %v3345
  %v3349 = vclz %v3348
  %v3350 = vsub.s32 %v3349, 2
  %vm3351 = vcmp.gt.s32.totalorder 0, %v3350
  %v3352 = vsel %vm3351, 0, %v3350
  %v3353 = vsub.s32 32, %v3352
  %v3354 = vshll.u32 %v3345, %v3352
  %v3355 = vshrl.u32 %v3337, %v3353
  %v3356 = vor.u32 %v3354, %v3355
  %v3357 = vsub.s32 4294967266, %v3352
  %v3358 = vadd.s32 %v3357, 127
  %v3359 = vshll.u32 %v3358, 23
  %v3360 = vor.u32 4788187, %v3359
  %v3361 = vand.u32 2147483647, %v3360
  %v3363 = vcvt.s32.f32 %v3356
  %v3364 = vmul.f32 %v3363, %v3361
  %v3365 = vxor.u32 %v3364, 2147483648
  %v3366 = vsel %vm3283, %v3365, %v3364
  %v3367 = vsub.s32 4, %v3343
  %v3368 = vsel %vm3283, %v3367, %v3343
  %v3369 = vsel %vm3282, %v2857, %v3366
  %v3370 = vsel %vm3282, 0, %v3368
  %v3371 = vcosq.f32.pop %v3369
  %v3372 = vsinq.f32.pop %v3369
  %vm3373 = vweird.f32 %v2857
  %v3374 = vand.u32 %v3370, 3
  %vm3375 = vcmp.lt.s32.totalorder %v3374, 2
  %vm3376 = vcmp.eq.s32.totalorder %v3374, 0
  %v3377 = vxor.u32 %v3372, 2147483648
  %v3378 = vsel %vm3376, %v3371, %v3377
  %vm3379 = vcmp.eq.s32.totalorder %v3374, 2
  %v3380 = vxor.u32 %v3371, 2147483648
  %v3381 = vsel %vm3379, %v3380, %v3372
  %v3382 = vsel %vm3375, %v3378, %v3381
  %v3383 = vsel %vm3373, nan, %v3382
  %v3384 = vand.u32 2147483647, %v2858
  %vm3385 = vcmp.le.f32.partialorder %v3384, 0.7853982
  %vm3386 = vcmp.lt.s32.totalorder %v2858, 0
  %v3387 = vand.u32 %v2858, 2139095040
  %v3388 = vshrl.u32 %v3387, 23
  %v3389 = vsub.s32 %v3388, 127
  %v3390 = vand.u32 2147483647, %v2858
  %v3391 = vand.u32 %v3390, 8388607
  %v3392 = vor.u32 %v3391, 8388608
  %v3393 = vsub.s32 0, %v3392
  %v3394 = vadd.s32 %v3389, 1
  %vm3395 = vcmp.gt.s32.totalorder %v3394, 0
  %v3396 = vsel %vm3395, %v3394, 0
  %v3397 = vshrl.u32 %v3396, 5
  %v3398 = vand.u32 %v3396, 31
  %v3399 = vsub.s32 32, %v3398
  %v3400 = vshrl.u32 683565275, %v3399
  %v3401 = vshll.u32 683565275, %v3398
  %v3402 = vshrl.u32 2475754826, %v3399
  %v3403 = vor.u32 %v3401, %v3402
  %v3404 = vshll.u32 2475754826, %v3398
  %v3405 = vshrl.u32 2131351028, %v3399
  %v3406 = vor.u32 %v3404, %v3405
  %v3407 = vshll.u32 2131351028, %v3398
  %v3408 = vshrl.u32 2102212464, %v3399
  %v3409 = vor.u32 %v3407, %v3408
  %v3410 = vshll.u32 2102212464, %v3398
  %v3411 = vshrl.u32 920167782, %v3399
  %v3412 = vor.u32 %v3410, %v3411
  %v3413 = vshll.u32 920167782, %v3398
  %v3414 = vshrl.u32 1326507024, %v3399
  %v3415 = vor.u32 %v3413, %v3414
  %vm3416 = vcmp.lt.s32.totalorder %v3397, 1
  %vm3417 = vcmp.lt.s32.totalorder %v3397, 2
  %vm3418 = vcmp.lt.s32.totalorder %v3397, 3
  %vm3419 = vcmp.lt.s32.totalorder %v3397, 4
  %v3420 = vsel %vm3416, %v3400, %v3403
  %v3421 = vsel %vm3419, %v3409, 2102212464
  %v3422 = vsel %vm3418, %v3406, %v3421
  %v3423 = vsel %vm3417, %v3420, %v3422
  %v3424 = vsel %vm3416, %v3403, %v3406
  %v3425 = vsel %vm3419, %v3412, 920167782
  %v3426 = vsel %vm3418, %v3409, %v3425
  %v3427 = vsel %vm3417, %v3424, %v3426
  %v3428 = vsel %vm3416, %v3406, %v3409
  %v3429 = vsel %vm3419, %v3415, 1326507024
  %v3430 = vsel %vm3418, %v3412, %v3429
  %v3431 = vsel %vm3417, %v3428, %v3430
  %v3432 = vshll.u32 %v3392, 8
  %v3433 = vmul.u32.u64.compose %v3432, %v3431
  %v3434 = vextract.low.u32 %v3433
  %v3435 = vextract.high.u32 %v3433
  %v3436 = vmul.u32.u64.compose %v3432, %v3427
  %v3437 = vextract.low.u32 %v3436
  %v3438 = vextract.high.u32 %v3436
  %v3439 = vmul.u32 %v3432, %v3423
  %v3440 = vadd.s32 %v3435, %v3437
  %vm3441 = vc.u32 %v3435, %v3437
  %v3442 = vadd.s32 %v3438, 1
  %v3443 = vsel %vm3441, %v3442, %v3438
  %v3444 = vadd.s32 %v3439, %v3443
  %v3445 = vadd.s32 %v3444, 536870912
  %v3446 = vshrl.u32 %v3445, 30
  %v3447 = vshll.u32 %v3446, 30
  %v3448 = vsub.s32 %v3444, %v3447
  %vm3449 = vcmp.lt.s32.totalorder %v3448, 0
  %v3450 = vsub.s32 0, %v3448
  %v3451 = vsel %vm3449, %v3450, %v3448
  %v3452 = vclz %v3451
  %v3453 = vsub.s32 %v3452, 2
  %vm3454 = vcmp.gt.s32.totalorder 0, %v3453
  %v3455 = vsel %vm3454, 0, %v3453
  %v3456 = vsub.s32 32, %v3455
  %v3457 = vshll.u32 %v3448, %v3455
  %v3458 = vshrl.u32 %v3440, %v3456
  %v3459 = vor.u32 %v3457, %v3458
  %v3460 = vsub.s32 4294967266, %v3455
  %v3461 = vadd.s32 %v3460, 127
  %v3462 = vshll.u32 %v3461, 23
  %v3463 = vor.u32 4788187, %v3462
  %v3464 = vand.u32 2147483647, %v3463
  %v3466 = vcvt.s32.f32 %v3459
  %v3467 = vmul.f32 %v3466, %v3464
  %v3468 = vxor.u32 %v3467, 2147483648
  %v3469 = vsel %vm3386, %v3468, %v3467
  %v3470 = vsub.s32 4, %v3446
  %v3471 = vsel %vm3386, %v3470, %v3446
  %v3472 = vsel %vm3385, %v2858, %v3469
  %v3473 = vsel %vm3385, 0, %v3471
  %v3474 = vcosq.f32.pop %v3472
  %v3475 = vsinq.f32.pop %v3472
  %vm3476 = vweird.f32 %v2858
  %v3477 = vand.u32 %v3473, 3
  %vm3478 = vcmp.lt.s32.totalorder %v3477, 2
  %vm3479 = vcmp.eq.s32.totalorder %v3477, 0
  %v3480 = vxor.u32 %v3475, 2147483648
  %v3481 = vsel %vm3479, %v3474, %v3480
  %vm3482 = vcmp.eq.s32.totalorder %v3477, 2
  %v3483 = vxor.u32 %v3474, 2147483648
  %v3484 = vsel %vm3482, %v3483, %v3475
  %v3485 = vsel %vm3478, %v3481, %v3484
  %v3486 = vsel %vm3476, nan, %v3485
  %v3487 = vand.u32 2147483647, %v2859
  %vm3488 = vcmp.le.f32.partialorder %v3487, 0.7853982
  %vm3489 = vcmp.lt.s32.totalorder %v2859, 0
  %v3490 = vand.u32 %v2859, 2139095040
  %v3491 = vshrl.u32 %v3490, 23
  %v3492 = vsub.s32 %v3491, 127
  %v3493 = vand.u32 2147483647, %v2859
  %v3494 = vand.u32 %v3493, 8388607
  %v3495 = vor.u32 %v3494, 8388608
  %v3496 = vsub.s32 0, %v3495
  %v3497 = vadd.s32 %v3492, 1
  %vm3498 = vcmp.gt.s32.totalorder %v3497, 0
  %v3499 = vsel %vm3498, %v3497, 0
  %v3500 = vshrl.u32 %v3499, 5
  %v3501 = vand.u32 %v3499, 31
  %v3502 = vsub.s32 32, %v3501
  %v3503 = vshrl.u32 683565275, %v3502
  %v3504 = vshll.u32 683565275, %v3501
  %v3505 = vshrl.u32 2475754826, %v3502
  %v3506 = vor.u32 %v3504, %v3505
  %v3507 = vshll.u32 2475754826, %v3501
  %v3508 = vshrl.u32 2131351028, %v3502
  %v3509 = vor.u32 %v3507, %v3508
  %v3510 = vshll.u32 2131351028, %v3501
  %v3511 = vshrl.u32 2102212464, %v3502
  %v3512 = vor.u32 %v3510, %v3511
  %v3513 = vshll.u32 2102212464, %v3501
  %v3514 = vshrl.u32 920167782, %v3502
  %v3515 = vor.u32 %v3513, %v3514
  %v3516 = vshll.u32 920167782, %v3501
  %v3517 = vshrl.u32 1326507024, %v3502
  %v3518 = vor.u32 %v3516, %v3517
  %vm3519 = vcmp.lt.s32.totalorder %v3500, 1
  %vm3520 = vcmp.lt.s32.totalorder %v3500, 2
  %vm3521 = vcmp.lt.s32.totalorder %v3500, 3
  %vm3522 = vcmp.lt.s32.totalorder %v3500, 4
  %v3523 = vsel %vm3519, %v3503, %v3506
  %v3524 = vsel %vm3522, %v3512, 2102212464
  %v3525 = vsel %vm3521, %v3509, %v3524
  %v3526 = vsel %vm3520, %v3523, %v3525
  %v3527 = vsel %vm3519, %v3506, %v3509
  %v3528 = vsel %vm3522, %v3515, 920167782
  %v3529 = vsel %vm3521, %v3512, %v3528
  %v3530 = vsel %vm3520, %v3527, %v3529
  %v3531 = vsel %vm3519, %v3509, %v3512
  %v3532 = vsel %vm3522, %v3518, 1326507024
  %v3533 = vsel %vm3521, %v3515, %v3532
  %v3534 = vsel %vm3520, %v3531, %v3533
  %v3535 = vshll.u32 %v3495, 8
  %v3536 = vmul.u32.u64.compose %v3535, %v3534
  %v3537 = vextract.low.u32 %v3536
  %v3538 = vextract.high.u32 %v3536
  %v3539 = vmul.u32.u64.compose %v3535, %v3530
  %v3540 = vextract.low.u32 %v3539
  %v3541 = vextract.high.u32 %v3539
  %v3542 = vmul.u32 %v3535, %v3526
  %v3543 = vadd.s32 %v3538, %v3540
  %vm3544 = vc.u32 %v3538, %v3540
  %v3545 = vadd.s32 %v3541, 1
  %v3546 = vsel %vm3544, %v3545, %v3541
  %v3547 = vadd.s32 %v3542, %v3546
  %v3548 = vadd.s32 %v3547, 536870912
  %v3549 = vshrl.u32 %v3548, 30
  %v3550 = vshll.u32 %v3549, 30
  %v3551 = vsub.s32 %v3547, %v3550
  %vm3552 = vcmp.lt.s32.totalorder %v3551, 0
  %v3553 = vsub.s32 0, %v3551
  %v3554 = vsel %vm3552, %v3553, %v3551
  %v3555 = vclz %v3554
  %v3556 = vsub.s32 %v3555, 2
  %vm3557 = vcmp.gt.s32.totalorder 0, %v3556
  %v3558 = vsel %vm3557, 0, %v3556
  %v3559 = vsub.s32 32, %v3558
  %v3560 = vshll.u32 %v3551, %v3558
  %v3561 = vshrl.u32 %v3543, %v3559
  %v3562 = vor.u32 %v3560, %v3561
  %v3563 = vsub.s32 4294967266, %v3558
  %v3564 = vadd.s32 %v3563, 127
  %v3565 = vshll.u32 %v3564, 23
  %v3566 = vor.u32 4788187, %v3565
  %v3567 = vand.u32 2147483647, %v3566
  %v3569 = vcvt.s32.f32 %v3562
  %v3570 = vmul.f32 %v3569, %v3567
  %v3571 = vxor.u32 %v3570, 2147483648
  %v3572 = vsel %vm3489, %v3571, %v3570
  %v3573 = vsub.s32 4, %v3549
  %v3574 = vsel %vm3489, %v3573, %v3549
  %v3575 = vsel %vm3488, %v2859, %v3572
  %v3576 = vsel %vm3488, 0, %v3574
  %v3577 = vcosq.f32.pop %v3575
  %v3578 = vsinq.f32.pop %v3575
  %vm3579 = vweird.f32 %v2859
  %v3580 = vand.u32 %v3576, 3
  %vm3581 = vcmp.lt.s32.totalorder %v3580, 2
  %vm3582 = vcmp.eq.s32.totalorder %v3580, 0
  %v3583 = vxor.u32 %v3578, 2147483648
  %v3584 = vsel %vm3582, %v3577, %v3583
  %vm3585 = vcmp.eq.s32.totalorder %v3580, 2
  %v3586 = vxor.u32 %v3577, 2147483648
  %v3587 = vsel %vm3585, %v3586, %v3578
  %v3588 = vsel %vm3581, %v3584, %v3587
  %v3589 = vsel %vm3579, nan, %v3588
  %v3590 = vand.u32 2147483647, %v2860
  %vm3591 = vcmp.le.f32.partialorder %v3590, 0.7853982
  %vm3592 = vcmp.lt.s32.totalorder %v2860, 0
  %v3593 = vand.u32 %v2860, 2139095040
  %v3594 = vshrl.u32 %v3593, 23
  %v3595 = vsub.s32 %v3594, 127
  %v3596 = vand.u32 2147483647, %v2860
  %v3597 = vand.u32 %v3596, 8388607
  %v3598 = vor.u32 %v3597, 8388608
  %v3599 = vsub.s32 0, %v3598
  %v3600 = vadd.s32 %v3595, 1
  %vm3601 = vcmp.gt.s32.totalorder %v3600, 0
  %v3602 = vsel %vm3601, %v3600, 0
  %v3603 = vshrl.u32 %v3602, 5
  %v3604 = vand.u32 %v3602, 31
  %v3605 = vsub.s32 32, %v3604
  %v3606 = vshrl.u32 683565275, %v3605
  %v3607 = vshll.u32 683565275, %v3604
  %v3608 = vshrl.u32 2475754826, %v3605
  %v3609 = vor.u32 %v3607, %v3608
  %v3610 = vshll.u32 2475754826, %v3604
  %v3611 = vshrl.u32 2131351028, %v3605
  %v3612 = vor.u32 %v3610, %v3611
  %v3613 = vshll.u32 2131351028, %v3604
  %v3614 = vshrl.u32 2102212464, %v3605
  %v3615 = vor.u32 %v3613, %v3614
  %v3616 = vshll.u32 2102212464, %v3604
  %v3617 = vshrl.u32 920167782, %v3605
  %v3618 = vor.u32 %v3616, %v3617
  %v3619 = vshll.u32 920167782, %v3604
  %v3620 = vshrl.u32 1326507024, %v3605
  %v3621 = vor.u32 %v3619, %v3620
  %vm3622 = vcmp.lt.s32.totalorder %v3603, 1
  %vm3623 = vcmp.lt.s32.totalorder %v3603, 2
  %vm3624 = vcmp.lt.s32.totalorder %v3603, 3
  %vm3625 = vcmp.lt.s32.totalorder %v3603, 4
  %v3626 = vsel %vm3622, %v3606, %v3609
  %v3627 = vsel %vm3625, %v3615, 2102212464
  %v3628 = vsel %vm3624, %v3612, %v3627
  %v3629 = vsel %vm3623, %v3626, %v3628
  %v3630 = vsel %vm3622, %v3609, %v3612
  %v3631 = vsel %vm3625, %v3618, 920167782
  %v3632 = vsel %vm3624, %v3615, %v3631
  %v3633 = vsel %vm3623, %v3630, %v3632
  %v3634 = vsel %vm3622, %v3612, %v3615
  %v3635 = vsel %vm3625, %v3621, 1326507024
  %v3636 = vsel %vm3624, %v3618, %v3635
  %v3637 = vsel %vm3623, %v3634, %v3636
  %v3638 = vshll.u32 %v3598, 8
  %v3639 = vmul.u32.u64.compose %v3638, %v3637
  %v3640 = vextract.low.u32 %v3639
  %v3641 = vextract.high.u32 %v3639
  %v3642 = vmul.u32.u64.compose %v3638, %v3633
  %v3643 = vextract.low.u32 %v3642
  %v3644 = vextract.high.u32 %v3642
  %v3645 = vmul.u32 %v3638, %v3629
  %v3646 = vadd.s32 %v3641, %v3643
  %vm3647 = vc.u32 %v3641, %v3643
  %v3648 = vadd.s32 %v3644, 1
  %v3649 = vsel %vm3647, %v3648, %v3644
  %v3650 = vadd.s32 %v3645, %v3649
  %v3651 = vadd.s32 %v3650, 536870912
  %v3652 = vshrl.u32 %v3651, 30
  %v3653 = vshll.u32 %v3652, 30
  %v3654 = vsub.s32 %v3650, %v3653
  %vm3655 = vcmp.lt.s32.totalorder %v3654, 0
  %v3656 = vsub.s32 0, %v3654
  %v3657 = vsel %vm3655, %v3656, %v3654
  %v3658 = vclz %v3657
  %v3659 = vsub.s32 %v3658, 2
  %vm3660 = vcmp.gt.s32.totalorder 0, %v3659
  %v3661 = vsel %vm3660, 0, %v3659
  %v3662 = vsub.s32 32, %v3661
  %v3663 = vshll.u32 %v3654, %v3661
  %v3664 = vshrl.u32 %v3646, %v3662
  %v3665 = vor.u32 %v3663, %v3664
  %v3666 = vsub.s32 4294967266, %v3661
  %v3667 = vadd.s32 %v3666, 127
  %v3668 = vshll.u32 %v3667, 23
  %v3669 = vor.u32 4788187, %v3668
  %v3670 = vand.u32 2147483647, %v3669
  %v3672 = vcvt.s32.f32 %v3665
  %v3673 = vmul.f32 %v3672, %v3670
  %v3674 = vxor.u32 %v3673, 2147483648
  %v3675 = vsel %vm3592, %v3674, %v3673
  %v3676 = vsub.s32 4, %v3652
  %v3677 = vsel %vm3592, %v3676, %v3652
  %v3678 = vsel %vm3591, %v2860, %v3675
  %v3679 = vsel %vm3591, 0, %v3677
  %v3680 = vcosq.f32.pop %v3678
  %v3681 = vsinq.f32.pop %v3678
  %vm3682 = vweird.f32 %v2860
  %v3683 = vand.u32 %v3679, 3
  %vm3684 = vcmp.lt.s32.totalorder %v3683, 2
  %vm3685 = vcmp.eq.s32.totalorder %v3683, 0
  %v3686 = vxor.u32 %v3681, 2147483648
  %v3687 = vsel %vm3685, %v3680, %v3686
  %vm3688 = vcmp.eq.s32.totalorder %v3683, 2
  %v3689 = vxor.u32 %v3680, 2147483648
  %v3690 = vsel %vm3688, %v3689, %v3681
  %v3691 = vsel %vm3684, %v3687, %v3690
  %v3692 = vsel %vm3682, nan, %v3691
  %v3693 = vand.u32 2147483647, %v2861
  %vm3694 = vcmp.le.f32.partialorder %v3693, 0.7853982
  %vm3695 = vcmp.lt.s32.totalorder %v2861, 0
  %v3696 = vand.u32 %v2861, 2139095040
  %v3697 = vshrl.u32 %v3696, 23
  %v3698 = vsub.s32 %v3697, 127
  %v3699 = vand.u32 2147483647, %v2861
  %v3700 = vand.u32 %v3699, 8388607
  %v3701 = vor.u32 %v3700, 8388608
  %v3702 = vsub.s32 0, %v3701
  %v3703 = vadd.s32 %v3698, 1
  %vm3704 = vcmp.gt.s32.totalorder %v3703, 0
  %v3705 = vsel %vm3704, %v3703, 0
  %v3706 = vshrl.u32 %v3705, 5
  %v3707 = vand.u32 %v3705, 31
  %v3708 = vsub.s32 32, %v3707
  %v3709 = vshrl.u32 683565275, %v3708
  %v3710 = vshll.u32 683565275, %v3707
  %v3711 = vshrl.u32 2475754826, %v3708
  %v3712 = vor.u32 %v3710, %v3711
  %v3713 = vshll.u32 2475754826, %v3707
  %v3714 = vshrl.u32 2131351028, %v3708
  %v3715 = vor.u32 %v3713, %v3714
  %v3716 = vshll.u32 2131351028, %v3707
  %v3717 = vshrl.u32 2102212464, %v3708
  %v3718 = vor.u32 %v3716, %v3717
  %v3719 = vshll.u32 2102212464, %v3707
  %v3720 = vshrl.u32 920167782, %v3708
  %v3721 = vor.u32 %v3719, %v3720
  %v3722 = vshll.u32 920167782, %v3707
  %v3723 = vshrl.u32 1326507024, %v3708
  %v3724 = vor.u32 %v3722, %v3723
  %vm3725 = vcmp.lt.s32.totalorder %v3706, 1
  %vm3726 = vcmp.lt.s32.totalorder %v3706, 2
  %vm3727 = vcmp.lt.s32.totalorder %v3706, 3
  %vm3728 = vcmp.lt.s32.totalorder %v3706, 4
  %v3729 = vsel %vm3725, %v3709, %v3712
  %v3730 = vsel %vm3728, %v3718, 2102212464
  %v3731 = vsel %vm3727, %v3715, %v3730
  %v3732 = vsel %vm3726, %v3729, %v3731
  %v3733 = vsel %vm3725, %v3712, %v3715
  %v3734 = vsel %vm3728, %v3721, 920167782
  %v3735 = vsel %vm3727, %v3718, %v3734
  %v3736 = vsel %vm3726, %v3733, %v3735
  %v3737 = vsel %vm3725, %v3715, %v3718
  %v3738 = vsel %vm3728, %v3724, 1326507024
  %v3739 = vsel %vm3727, %v3721, %v3738
  %v3740 = vsel %vm3726, %v3737, %v3739
  %v3741 = vshll.u32 %v3701, 8
  %v3742 = vmul.u32.u64.compose %v3741, %v3740
  %v3743 = vextract.low.u32 %v3742
  %v3744 = vextract.high.u32 %v3742
  %v3745 = vmul.u32.u64.compose %v3741, %v3736
  %v3746 = vextract.low.u32 %v3745
  %v3747 = vextract.high.u32 %v3745
  %v3748 = vmul.u32 %v3741, %v3732
  %v3749 = vadd.s32 %v3744, %v3746
  %vm3750 = vc.u32 %v3744, %v3746
  %v3751 = vadd.s32 %v3747, 1
  %v3752 = vsel %vm3750, %v3751, %v3747
  %v3753 = vadd.s32 %v3748, %v3752
  %v3754 = vadd.s32 %v3753, 536870912
  %v3755 = vshrl.u32 %v3754, 30
  %v3756 = vshll.u32 %v3755, 30
  %v3757 = vsub.s32 %v3753, %v3756
  %vm3758 = vcmp.lt.s32.totalorder %v3757, 0
  %v3759 = vsub.s32 0, %v3757
  %v3760 = vsel %vm3758, %v3759, %v3757
  %v3761 = vclz %v3760
  %v3762 = vsub.s32 %v3761, 2
  %vm3763 = vcmp.gt.s32.totalorder 0, %v3762
  %v3764 = vsel %vm3763, 0, %v3762
  %v3765 = vsub.s32 32, %v3764
  %v3766 = vshll.u32 %v3757, %v3764
  %v3767 = vshrl.u32 %v3749, %v3765
  %v3768 = vor.u32 %v3766, %v3767
  %v3769 = vsub.s32 4294967266, %v3764
  %v3770 = vadd.s32 %v3769, 127
  %v3771 = vshll.u32 %v3770, 23
  %v3772 = vor.u32 4788187, %v3771
  %v3773 = vand.u32 2147483647, %v3772
  %v3775 = vcvt.s32.f32 %v3768
  %v3776 = vmul.f32 %v3775, %v3773
  %v3777 = vxor.u32 %v3776, 2147483648
  %v3778 = vsel %vm3695, %v3777, %v3776
  %v3779 = vsub.s32 4, %v3755
  %v3780 = vsel %vm3695, %v3779, %v3755
  %v3781 = vsel %vm3694, %v2861, %v3778
  %v3782 = vsel %vm3694, 0, %v3780
  %v3783 = vcosq.f32.pop %v3781
  %v3784 = vsinq.f32.pop %v3781
  %vm3785 = vweird.f32 %v2861
  %v3786 = vand.u32 %v3782, 3
  %vm3787 = vcmp.lt.s32.totalorder %v3786, 2
  %vm3788 = vcmp.eq.s32.totalorder %v3786, 0
  %v3789 = vxor.u32 %v3784, 2147483648
  %v3790 = vsel %vm3788, %v3783, %v3789
  %vm3791 = vcmp.eq.s32.totalorder %v3786, 2
  %v3792 = vxor.u32 %v3783, 2147483648
  %v3793 = vsel %vm3791, %v3792, %v3784
  %v3794 = vsel %vm3787, %v3790, %v3793
  %v3795 = vsel %vm3785, nan, %v3794
  %v3796 = vand.u32 2147483647, %v2862
  %vm3797 = vcmp.le.f32.partialorder %v3796, 0.7853982
  %vm3798 = vcmp.lt.s32.totalorder %v2862, 0
  %v3799 = vand.u32 %v2862, 2139095040
  %v3800 = vshrl.u32 %v3799, 23
  %v3801 = vsub.s32 %v3800, 127
  %v3802 = vand.u32 2147483647, %v2862
  %v3803 = vand.u32 %v3802, 8388607
  %v3804 = vor.u32 %v3803, 8388608
  %v3805 = vsub.s32 0, %v3804
  %v3806 = vadd.s32 %v3801, 1
  %vm3807 = vcmp.gt.s32.totalorder %v3806, 0
  %v3808 = vsel %vm3807, %v3806, 0
  %v3809 = vshrl.u32 %v3808, 5
  %v3810 = vand.u32 %v3808, 31
  %v3811 = vsub.s32 32, %v3810
  %v3812 = vshrl.u32 683565275, %v3811
  %v3813 = vshll.u32 683565275, %v3810
  %v3814 = vshrl.u32 2475754826, %v3811
  %v3815 = vor.u32 %v3813, %v3814
  %v3816 = vshll.u32 2475754826, %v3810
  %v3817 = vshrl.u32 2131351028, %v3811
  %v3818 = vor.u32 %v3816, %v3817
  %v3819 = vshll.u32 2131351028, %v3810
  %v3820 = vshrl.u32 2102212464, %v3811
  %v3821 = vor.u32 %v3819, %v3820
  %v3822 = vshll.u32 2102212464, %v3810
  %v3823 = vshrl.u32 920167782, %v3811
  %v3824 = vor.u32 %v3822, %v3823
  %v3825 = vshll.u32 920167782, %v3810
  %v3826 = vshrl.u32 1326507024, %v3811
  %v3827 = vor.u32 %v3825, %v3826
  %vm3828 = vcmp.lt.s32.totalorder %v3809, 1
  %vm3829 = vcmp.lt.s32.totalorder %v3809, 2
  %vm3830 = vcmp.lt.s32.totalorder %v3809, 3
  %vm3831 = vcmp.lt.s32.totalorder %v3809, 4
  %v3832 = vsel %vm3828, %v3812, %v3815
  %v3833 = vsel %vm3831, %v3821, 2102212464
  %v3834 = vsel %vm3830, %v3818, %v3833
  %v3835 = vsel %vm3829, %v3832, %v3834
  %v3836 = vsel %vm3828, %v3815, %v3818
  %v3837 = vsel %vm3831, %v3824, 920167782
  %v3838 = vsel %vm3830, %v3821, %v3837
  %v3839 = vsel %vm3829, %v3836, %v3838
  %v3840 = vsel %vm3828, %v3818, %v3821
  %v3841 = vsel %vm3831, %v3827, 1326507024
  %v3842 = vsel %vm3830, %v3824, %v3841
  %v3843 = vsel %vm3829, %v3840, %v3842
  %v3844 = vshll.u32 %v3804, 8
  %v3845 = vmul.u32.u64.compose %v3844, %v3843
  %v3846 = vextract.low.u32 %v3845
  %v3847 = vextract.high.u32 %v3845
  %v3848 = vmul.u32.u64.compose %v3844, %v3839
  %v3849 = vextract.low.u32 %v3848
  %v3850 = vextract.high.u32 %v3848
  %v3851 = vmul.u32 %v3844, %v3835
  %v3852 = vadd.s32 %v3847, %v3849
  %vm3853 = vc.u32 %v3847, %v3849
  %v3854 = vadd.s32 %v3850, 1
  %v3855 = vsel %vm3853, %v3854, %v3850
  %v3856 = vadd.s32 %v3851, %v3855
  %v3857 = vadd.s32 %v3856, 536870912
  %v3858 = vshrl.u32 %v3857, 30
  %v3859 = vshll.u32 %v3858, 30
  %v3860 = vsub.s32 %v3856, %v3859
  %vm3861 = vcmp.lt.s32.totalorder %v3860, 0
  %v3862 = vsub.s32 0, %v3860
  %v3863 = vsel %vm3861, %v3862, %v3860
  %v3864 = vclz %v3863
  %v3865 = vsub.s32 %v3864, 2
  %vm3866 = vcmp.gt.s32.totalorder 0, %v3865
  %v3867 = vsel %vm3866, 0, %v3865
  %v3868 = vsub.s32 32, %v3867
  %v3869 = vshll.u32 %v3860, %v3867
  %v3870 = vshrl.u32 %v3852, %v3868
  %v3871 = vor.u32 %v3869, %v3870
  %v3872 = vsub.s32 4294967266, %v3867
  %v3873 = vadd.s32 %v3872, 127
  %v3874 = vshll.u32 %v3873, 23
  %v3875 = vor.u32 4788187, %v3874
  %v3876 = vand.u32 2147483647, %v3875
  %v3878 = vcvt.s32.f32 %v3871
  %v3879 = vmul.f32 %v3878, %v3876
  %v3880 = vxor.u32 %v3879, 2147483648
  %v3881 = vsel %vm3798, %v3880, %v3879
  %v3882 = vsub.s32 4, %v3858
  %v3883 = vsel %vm3798, %v3882, %v3858
  %v3884 = vsel %vm3797, %v2862, %v3881
  %v3885 = vsel %vm3797, 0, %v3883
  %v3886 = vcosq.f32.pop %v3884
  %v3887 = vsinq.f32.pop %v3884
  %vm3888 = vweird.f32 %v2862
  %v3889 = vand.u32 %v3885, 3
  %vm3890 = vcmp.lt.s32.totalorder %v3889, 2
  %vm3891 = vcmp.eq.s32.totalorder %v3889, 0
  %v3892 = vxor.u32 %v3887, 2147483648
  %v3893 = vsel %vm3891, %v3886, %v3892
  %vm3894 = vcmp.eq.s32.totalorder %v3889, 2
  %v3895 = vxor.u32 %v3886, 2147483648
  %v3896 = vsel %vm3894, %v3895, %v3887
  %v3897 = vsel %vm3890, %v3893, %v3896
  %v3898 = vsel %vm3888, nan, %v3897
  %v3899 = vand.u32 2147483647, %v2863
  %vm3900 = vcmp.le.f32.partialorder %v3899, 0.7853982
  %vm3901 = vcmp.lt.s32.totalorder %v2863, 0
  %v3902 = vand.u32 %v2863, 2139095040
  %v3903 = vshrl.u32 %v3902, 23
  %v3904 = vsub.s32 %v3903, 127
  %v3905 = vand.u32 2147483647, %v2863
  %v3906 = vand.u32 %v3905, 8388607
  %v3907 = vor.u32 %v3906, 8388608
  %v3908 = vsub.s32 0, %v3907
  %v3909 = vadd.s32 %v3904, 1
  %vm3910 = vcmp.gt.s32.totalorder %v3909, 0
  %v3911 = vsel %vm3910, %v3909, 0
  %v3912 = vshrl.u32 %v3911, 5
  %v3913 = vand.u32 %v3911, 31
  %v3914 = vsub.s32 32, %v3913
  %v3915 = vshrl.u32 683565275, %v3914
  %v3916 = vshll.u32 683565275, %v3913
  %v3917 = vshrl.u32 2475754826, %v3914
  %v3918 = vor.u32 %v3916, %v3917
  %v3919 = vshll.u32 2475754826, %v3913
  %v3920 = vshrl.u32 2131351028, %v3914
  %v3921 = vor.u32 %v3919, %v3920
  %v3922 = vshll.u32 2131351028, %v3913
  %v3923 = vshrl.u32 2102212464, %v3914
  %v3924 = vor.u32 %v3922, %v3923
  %v3925 = vshll.u32 2102212464, %v3913
  %v3926 = vshrl.u32 920167782, %v3914
  %v3927 = vor.u32 %v3925, %v3926
  %v3928 = vshll.u32 920167782, %v3913
  %v3929 = vshrl.u32 1326507024, %v3914
  %v3930 = vor.u32 %v3928, %v3929
  %vm3931 = vcmp.lt.s32.totalorder %v3912, 1
  %vm3932 = vcmp.lt.s32.totalorder %v3912, 2
  %vm3933 = vcmp.lt.s32.totalorder %v3912, 3
  %vm3934 = vcmp.lt.s32.totalorder %v3912, 4
  %v3935 = vsel %vm3931, %v3915, %v3918
  %v3936 = vsel %vm3934, %v3924, 2102212464
  %v3937 = vsel %vm3933, %v3921, %v3936
  %v3938 = vsel %vm3932, %v3935, %v3937
  %v3939 = vsel %vm3931, %v3918, %v3921
  %v3940 = vsel %vm3934, %v3927, 920167782
  %v3941 = vsel %vm3933, %v3924, %v3940
  %v3942 = vsel %vm3932, %v3939, %v3941
  %v3943 = vsel %vm3931, %v3921, %v3924
  %v3944 = vsel %vm3934, %v3930, 1326507024
  %v3945 = vsel %vm3933, %v3927, %v3944
  %v3946 = vsel %vm3932, %v3943, %v3945
  %v3947 = vshll.u32 %v3907, 8
  %v3948 = vmul.u32.u64.compose %v3947, %v3946
  %v3949 = vextract.low.u32 %v3948
  %v3950 = vextract.high.u32 %v3948
  %v3951 = vmul.u32.u64.compose %v3947, %v3942
  %v3952 = vextract.low.u32 %v3951
  %v3953 = vextract.high.u32 %v3951
  %v3954 = vmul.u32 %v3947, %v3938
  %v3955 = vadd.s32 %v3950, %v3952
  %vm3956 = vc.u32 %v3950, %v3952
  %v3957 = vadd.s32 %v3953, 1
  %v3958 = vsel %vm3956, %v3957, %v3953
  %v3959 = vadd.s32 %v3954, %v3958
  %v3960 = vadd.s32 %v3959, 536870912
  %v3961 = vshrl.u32 %v3960, 30
  %v3962 = vshll.u32 %v3961, 30
  %v3963 = vsub.s32 %v3959, %v3962
  %vm3964 = vcmp.lt.s32.totalorder %v3963, 0
  %v3965 = vsub.s32 0, %v3963
  %v3966 = vsel %vm3964, %v3965, %v3963
  %v3967 = vclz %v3966
  %v3968 = vsub.s32 %v3967, 2
  %vm3969 = vcmp.gt.s32.totalorder 0, %v3968
  %v3970 = vsel %vm3969, 0, %v3968
  %v3971 = vsub.s32 32, %v3970
  %v3972 = vshll.u32 %v3963, %v3970
  %v3973 = vshrl.u32 %v3955, %v3971
  %v3974 = vor.u32 %v3972, %v3973
  %v3975 = vsub.s32 4294967266, %v3970
  %v3976 = vadd.s32 %v3975, 127
  %v3977 = vshll.u32 %v3976, 23
  %v3978 = vor.u32 4788187, %v3977
  %v3979 = vand.u32 2147483647, %v3978
  %v3981 = vcvt.s32.f32 %v3974
  %v3982 = vmul.f32 %v3981, %v3979
  %v3983 = vxor.u32 %v3982, 2147483648
  %v3984 = vsel %vm3901, %v3983, %v3982
  %v3985 = vsub.s32 4, %v3961
  %v3986 = vsel %vm3901, %v3985, %v3961
  %v3987 = vsel %vm3900, %v2863, %v3984
  %v3988 = vsel %vm3900, 0, %v3986
  %v3989 = vcosq.f32.pop %v3987
  %v3990 = vsinq.f32.pop %v3987
  %vm3991 = vweird.f32 %v2863
  %v3992 = vand.u32 %v3988, 3
  %vm3993 = vcmp.lt.s32.totalorder %v3992, 2
  %vm3994 = vcmp.eq.s32.totalorder %v3992, 0
  %v3995 = vxor.u32 %v3990, 2147483648
  %v3996 = vsel %vm3994, %v3989, %v3995
  %vm3997 = vcmp.eq.s32.totalorder %v3992, 2
  %v3998 = vxor.u32 %v3989, 2147483648
  %v3999 = vsel %vm3997, %v3998, %v3990
  %v4000 = vsel %vm3993, %v3996, %v3999
  %v4001 = vsel %vm3991, nan, %v4000
  %v4002 = vand.u32 2147483647, %v2864
  %vm4003 = vcmp.le.f32.partialorder %v4002, 0.7853982
  %vm4004 = vcmp.lt.s32.totalorder %v2864, 0
  %v4005 = vand.u32 %v2864, 2139095040
  %v4006 = vshrl.u32 %v4005, 23
  %v4007 = vsub.s32 %v4006, 127
  %v4008 = vand.u32 2147483647, %v2864
  %v4009 = vand.u32 %v4008, 8388607
  %v4010 = vor.u32 %v4009, 8388608
  %v4011 = vsub.s32 0, %v4010
  %v4012 = vadd.s32 %v4007, 1
  %vm4013 = vcmp.gt.s32.totalorder %v4012, 0
  %v4014 = vsel %vm4013, %v4012, 0
  %v4015 = vshrl.u32 %v4014, 5
  %v4016 = vand.u32 %v4014, 31
  %v4017 = vsub.s32 32, %v4016
  %v4018 = vshrl.u32 683565275, %v4017
  %v4019 = vshll.u32 683565275, %v4016
  %v4020 = vshrl.u32 2475754826, %v4017
  %v4021 = vor.u32 %v4019, %v4020
  %v4022 = vshll.u32 2475754826, %v4016
  %v4023 = vshrl.u32 2131351028, %v4017
  %v4024 = vor.u32 %v4022, %v4023
  %v4025 = vshll.u32 2131351028, %v4016
  %v4026 = vshrl.u32 2102212464, %v4017
  %v4027 = vor.u32 %v4025, %v4026
  %v4028 = vshll.u32 2102212464, %v4016
  %v4029 = vshrl.u32 920167782, %v4017
  %v4030 = vor.u32 %v4028, %v4029
  %v4031 = vshll.u32 920167782, %v4016
  %v4032 = vshrl.u32 1326507024, %v4017
  %v4033 = vor.u32 %v4031, %v4032
  %vm4034 = vcmp.lt.s32.totalorder %v4015, 1
  %vm4035 = vcmp.lt.s32.totalorder %v4015, 2
  %vm4036 = vcmp.lt.s32.totalorder %v4015, 3
  %vm4037 = vcmp.lt.s32.totalorder %v4015, 4
  %v4038 = vsel %vm4034, %v4018, %v4021
  %v4039 = vsel %vm4037, %v4027, 2102212464
  %v4040 = vsel %vm4036, %v4024, %v4039
  %v4041 = vsel %vm4035, %v4038, %v4040
  %v4042 = vsel %vm4034, %v4021, %v4024
  %v4043 = vsel %vm4037, %v4030, 920167782
  %v4044 = vsel %vm4036, %v4027, %v4043
  %v4045 = vsel %vm4035, %v4042, %v4044
  %v4046 = vsel %vm4034, %v4024, %v4027
  %v4047 = vsel %vm4037, %v4033, 1326507024
  %v4048 = vsel %vm4036, %v4030, %v4047
  %v4049 = vsel %vm4035, %v4046, %v4048
  %v4050 = vshll.u32 %v4010, 8
  %v4051 = vmul.u32.u64.compose %v4050, %v4049
  %v4052 = vextract.low.u32 %v4051
  %v4053 = vextract.high.u32 %v4051
  %v4054 = vmul.u32.u64.compose %v4050, %v4045
  %v4055 = vextract.low.u32 %v4054
  %v4056 = vextract.high.u32 %v4054
  %v4057 = vmul.u32 %v4050, %v4041
  %v4058 = vadd.s32 %v4053, %v4055
  %vm4059 = vc.u32 %v4053, %v4055
  %v4060 = vadd.s32 %v4056, 1
  %v4061 = vsel %vm4059, %v4060, %v4056
  %v4062 = vadd.s32 %v4057, %v4061
  %v4063 = vadd.s32 %v4062, 536870912
  %v4064 = vshrl.u32 %v4063, 30
  %v4065 = vshll.u32 %v4064, 30
  %v4066 = vsub.s32 %v4062, %v4065
  %vm4067 = vcmp.lt.s32.totalorder %v4066, 0
  %v4068 = vsub.s32 0, %v4066
  %v4069 = vsel %vm4067, %v4068, %v4066
  %v4070 = vclz %v4069
  %v4071 = vsub.s32 %v4070, 2
  %vm4072 = vcmp.gt.s32.totalorder 0, %v4071
  %v4073 = vsel %vm4072, 0, %v4071
  %v4074 = vsub.s32 32, %v4073
  %v4075 = vshll.u32 %v4066, %v4073
  %v4076 = vshrl.u32 %v4058, %v4074
  %v4077 = vor.u32 %v4075, %v4076
  %v4078 = vsub.s32 4294967266, %v4073
  %v4079 = vadd.s32 %v4078, 127
  %v4080 = vshll.u32 %v4079, 23
  %v4081 = vor.u32 4788187, %v4080
  %v4082 = vand.u32 2147483647, %v4081
  %v4084 = vcvt.s32.f32 %v4077
  %v4085 = vmul.f32 %v4084, %v4082
  %v4086 = vxor.u32 %v4085, 2147483648
  %v4087 = vsel %vm4004, %v4086, %v4085
  %v4088 = vsub.s32 4, %v4064
  %v4089 = vsel %vm4004, %v4088, %v4064
  %v4090 = vsel %vm4003, %v2864, %v4087
  %v4091 = vsel %vm4003, 0, %v4089
  %v4092 = vcosq.f32.pop %v4090
  %v4093 = vsinq.f32.pop %v4090
  %vm4094 = vweird.f32 %v2864
  %v4095 = vand.u32 %v4091, 3
  %vm4096 = vcmp.lt.s32.totalorder %v4095, 2
  %vm4097 = vcmp.eq.s32.totalorder %v4095, 0
  %v4098 = vxor.u32 %v4093, 2147483648
  %v4099 = vsel %vm4097, %v4092, %v4098
  %vm4100 = vcmp.eq.s32.totalorder %v4095, 2
  %v4101 = vxor.u32 %v4092, 2147483648
  %v4102 = vsel %vm4100, %v4101, %v4093
  %v4103 = vsel %vm4096, %v4099, %v4102
  %v4104 = vsel %vm4094, nan, %v4103
  %v4105 = vand.u32 2147483647, %v2865
  %vm4106 = vcmp.le.f32.partialorder %v4105, 0.7853982
  %vm4107 = vcmp.lt.s32.totalorder %v2865, 0
  %v4108 = vand.u32 %v2865, 2139095040
  %v4109 = vshrl.u32 %v4108, 23
  %v4110 = vsub.s32 %v4109, 127
  %v4111 = vand.u32 2147483647, %v2865
  %v4112 = vand.u32 %v4111, 8388607
  %v4113 = vor.u32 %v4112, 8388608
  %v4114 = vsub.s32 0, %v4113
  %v4115 = vadd.s32 %v4110, 1
  %vm4116 = vcmp.gt.s32.totalorder %v4115, 0
  %v4117 = vsel %vm4116, %v4115, 0
  %v4118 = vshrl.u32 %v4117, 5
  %v4119 = vand.u32 %v4117, 31
  %v4120 = vsub.s32 32, %v4119
  %v4121 = vshrl.u32 683565275, %v4120
  %v4122 = vshll.u32 683565275, %v4119
  %v4123 = vshrl.u32 2475754826, %v4120
  %v4124 = vor.u32 %v4122, %v4123
  %v4125 = vshll.u32 2475754826, %v4119
  %v4126 = vshrl.u32 2131351028, %v4120
  %v4127 = vor.u32 %v4125, %v4126
  %v4128 = vshll.u32 2131351028, %v4119
  %v4129 = vshrl.u32 2102212464, %v4120
  %v4130 = vor.u32 %v4128, %v4129
  %v4131 = vshll.u32 2102212464, %v4119
  %v4132 = vshrl.u32 920167782, %v4120
  %v4133 = vor.u32 %v4131, %v4132
  %v4134 = vshll.u32 920167782, %v4119
  %v4135 = vshrl.u32 1326507024, %v4120
  %v4136 = vor.u32 %v4134, %v4135
  %vm4137 = vcmp.lt.s32.totalorder %v4118, 1
  %vm4138 = vcmp.lt.s32.totalorder %v4118, 2
  %vm4139 = vcmp.lt.s32.totalorder %v4118, 3
  %vm4140 = vcmp.lt.s32.totalorder %v4118, 4
  %v4141 = vsel %vm4137, %v4121, %v4124
  %v4142 = vsel %vm4140, %v4130, 2102212464
  %v4143 = vsel %vm4139, %v4127, %v4142
  %v4144 = vsel %vm4138, %v4141, %v4143
  %v4145 = vsel %vm4137, %v4124, %v4127
  %v4146 = vsel %vm4140, %v4133, 920167782
  %v4147 = vsel %vm4139, %v4130, %v4146
  %v4148 = vsel %vm4138, %v4145, %v4147
  %v4149 = vsel %vm4137, %v4127, %v4130
  %v4150 = vsel %vm4140, %v4136, 1326507024
  %v4151 = vsel %vm4139, %v4133, %v4150
  %v4152 = vsel %vm4138, %v4149, %v4151
  %v4153 = vshll.u32 %v4113, 8
  %v4154 = vmul.u32.u64.compose %v4153, %v4152
  %v4155 = vextract.low.u32 %v4154
  %v4156 = vextract.high.u32 %v4154
  %v4157 = vmul.u32.u64.compose %v4153, %v4148
  %v4158 = vextract.low.u32 %v4157
  %v4159 = vextract.high.u32 %v4157
  %v4160 = vmul.u32 %v4153, %v4144
  %v4161 = vadd.s32 %v4156, %v4158
  %vm4162 = vc.u32 %v4156, %v4158
  %v4163 = vadd.s32 %v4159, 1
  %v4164 = vsel %vm4162, %v4163, %v4159
  %v4165 = vadd.s32 %v4160, %v4164
  %v4166 = vadd.s32 %v4165, 536870912
  %v4167 = vshrl.u32 %v4166, 30
  %v4168 = vshll.u32 %v4167, 30
  %v4169 = vsub.s32 %v4165, %v4168
  %vm4170 = vcmp.lt.s32.totalorder %v4169, 0
  %v4171 = vsub.s32 0, %v4169
  %v4172 = vsel %vm4170, %v4171, %v4169
  %v4173 = vclz %v4172
  %v4174 = vsub.s32 %v4173, 2
  %vm4175 = vcmp.gt.s32.totalorder 0, %v4174
  %v4176 = vsel %vm4175, 0, %v4174
  %v4177 = vsub.s32 32, %v4176
  %v4178 = vshll.u32 %v4169, %v4176
  %v4179 = vshrl.u32 %v4161, %v4177
  %v4180 = vor.u32 %v4178, %v4179
  %v4181 = vsub.s32 4294967266, %v4176
  %v4182 = vadd.s32 %v4181, 127
  %v4183 = vshll.u32 %v4182, 23
  %v4184 = vor.u32 4788187, %v4183
  %v4185 = vand.u32 2147483647, %v4184
  %v4187 = vcvt.s32.f32 %v4180
  %v4188 = vmul.f32 %v4187, %v4185
  %v4189 = vxor.u32 %v4188, 2147483648
  %v4190 = vsel %vm4107, %v4189, %v4188
  %v4191 = vsub.s32 4, %v4167
  %v4192 = vsel %vm4107, %v4191, %v4167
  %v4193 = vsel %vm4106, %v2865, %v4190
  %v4194 = vsel %vm4106, 0, %v4192
  %v4195 = vcosq.f32.pop %v4193
  %v4196 = vsinq.f32.pop %v4193
  %vm4197 = vweird.f32 %v2865
  %v4198 = vand.u32 %v4194, 3
  %vm4199 = vcmp.lt.s32.totalorder %v4198, 2
  %vm4200 = vcmp.eq.s32.totalorder %v4198, 0
  %v4201 = vxor.u32 %v4196, 2147483648
  %v4202 = vsel %vm4200, %v4195, %v4201
  %vm4203 = vcmp.eq.s32.totalorder %v4198, 2
  %v4204 = vxor.u32 %v4195, 2147483648
  %v4205 = vsel %vm4203, %v4204, %v4196
  %v4206 = vsel %vm4199, %v4202, %v4205
  %v4207 = vsel %vm4197, nan, %v4206
  %v4208 = vand.u32 2147483647, %v2866
  %vm4209 = vcmp.le.f32.partialorder %v4208, 0.7853982
  %vm4210 = vcmp.lt.s32.totalorder %v2866, 0
  %v4211 = vand.u32 %v2866, 2139095040
  %v4212 = vshrl.u32 %v4211, 23
  %v4213 = vsub.s32 %v4212, 127
  %v4214 = vand.u32 2147483647, %v2866
  %v4215 = vand.u32 %v4214, 8388607
  %v4216 = vor.u32 %v4215, 8388608
  %v4217 = vsub.s32 0, %v4216
  %v4218 = vadd.s32 %v4213, 1
  %vm4219 = vcmp.gt.s32.totalorder %v4218, 0
  %v4220 = vsel %vm4219, %v4218, 0
  %v4221 = vshrl.u32 %v4220, 5
  %v4222 = vand.u32 %v4220, 31
  %v4223 = vsub.s32 32, %v4222
  %v4224 = vshrl.u32 683565275, %v4223
  %v4225 = vshll.u32 683565275, %v4222
  %v4226 = vshrl.u32 2475754826, %v4223
  %v4227 = vor.u32 %v4225, %v4226
  %v4228 = vshll.u32 2475754826, %v4222
  %v4229 = vshrl.u32 2131351028, %v4223
  %v4230 = vor.u32 %v4228, %v4229
  %v4231 = vshll.u32 2131351028, %v4222
  %v4232 = vshrl.u32 2102212464, %v4223
  %v4233 = vor.u32 %v4231, %v4232
  %v4234 = vshll.u32 2102212464, %v4222
  %v4235 = vshrl.u32 920167782, %v4223
  %v4236 = vor.u32 %v4234, %v4235
  %v4237 = vshll.u32 920167782, %v4222
  %v4238 = vshrl.u32 1326507024, %v4223
  %v4239 = vor.u32 %v4237, %v4238
  %vm4240 = vcmp.lt.s32.totalorder %v4221, 1
  %vm4241 = vcmp.lt.s32.totalorder %v4221, 2
  %vm4242 = vcmp.lt.s32.totalorder %v4221, 3
  %vm4243 = vcmp.lt.s32.totalorder %v4221, 4
  %v4244 = vsel %vm4240, %v4224, %v4227
  %v4245 = vsel %vm4243, %v4233, 2102212464
  %v4246 = vsel %vm4242, %v4230, %v4245
  %v4247 = vsel %vm4241, %v4244, %v4246
  %v4248 = vsel %vm4240, %v4227, %v4230
  %v4249 = vsel %vm4243, %v4236, 920167782
  %v4250 = vsel %vm4242, %v4233, %v4249
  %v4251 = vsel %vm4241, %v4248, %v4250
  %v4252 = vsel %vm4240, %v4230, %v4233
  %v4253 = vsel %vm4243, %v4239, 1326507024
  %v4254 = vsel %vm4242, %v4236, %v4253
  %v4255 = vsel %vm4241, %v4252, %v4254
  %v4256 = vshll.u32 %v4216, 8
  %v4257 = vmul.u32.u64.compose %v4256, %v4255
  %v4258 = vextract.low.u32 %v4257
  %v4259 = vextract.high.u32 %v4257
  %v4260 = vmul.u32.u64.compose %v4256, %v4251
  %v4261 = vextract.low.u32 %v4260
  %v4262 = vextract.high.u32 %v4260
  %v4263 = vmul.u32 %v4256, %v4247
  %v4264 = vadd.s32 %v4259, %v4261
  %vm4265 = vc.u32 %v4259, %v4261
  %v4266 = vadd.s32 %v4262, 1
  %v4267 = vsel %vm4265, %v4266, %v4262
  %v4268 = vadd.s32 %v4263, %v4267
  %v4269 = vadd.s32 %v4268, 536870912
  %v4270 = vshrl.u32 %v4269, 30
  %v4271 = vshll.u32 %v4270, 30
  %v4272 = vsub.s32 %v4268, %v4271
  %vm4273 = vcmp.lt.s32.totalorder %v4272, 0
  %v4274 = vsub.s32 0, %v4272
  %v4275 = vsel %vm4273, %v4274, %v4272
  %v4276 = vclz %v4275
  %v4277 = vsub.s32 %v4276, 2
  %vm4278 = vcmp.gt.s32.totalorder 0, %v4277
  %v4279 = vsel %vm4278, 0, %v4277
  %v4280 = vsub.s32 32, %v4279
  %v4281 = vshll.u32 %v4272, %v4279
  %v4282 = vshrl.u32 %v4264, %v4280
  %v4283 = vor.u32 %v4281, %v4282
  %v4284 = vsub.s32 4294967266, %v4279
  %v4285 = vadd.s32 %v4284, 127
  %v4286 = vshll.u32 %v4285, 23
  %v4287 = vor.u32 4788187, %v4286
  %v4288 = vand.u32 2147483647, %v4287
  %v4290 = vcvt.s32.f32 %v4283
  %v4291 = vmul.f32 %v4290, %v4288
  %v4292 = vxor.u32 %v4291, 2147483648
  %v4293 = vsel %vm4210, %v4292, %v4291
  %v4294 = vsub.s32 4, %v4270
  %v4295 = vsel %vm4210, %v4294, %v4270
  %v4296 = vsel %vm4209, %v2866, %v4293
  %v4297 = vsel %vm4209, 0, %v4295
  %v4298 = vcosq.f32.pop %v4296
  %v4299 = vsinq.f32.pop %v4296
  %vm4300 = vweird.f32 %v2866
  %v4301 = vand.u32 %v4297, 3
  %vm4302 = vcmp.lt.s32.totalorder %v4301, 2
  %vm4303 = vcmp.eq.s32.totalorder %v4301, 0
  %v4304 = vxor.u32 %v4299, 2147483648
  %v4305 = vsel %vm4303, %v4298, %v4304
  %vm4306 = vcmp.eq.s32.totalorder %v4301, 2
  %v4307 = vxor.u32 %v4298, 2147483648
  %v4308 = vsel %vm4306, %v4307, %v4299
  %v4309 = vsel %vm4302, %v4305, %v4308
  %v4310 = vsel %vm4300, nan, %v4309
  %v4311 = vand.u32 2147483647, %v2867
  %vm4312 = vcmp.le.f32.partialorder %v4311, 0.7853982
  %vm4313 = vcmp.lt.s32.totalorder %v2867, 0
  %v4314 = vand.u32 %v2867, 2139095040
  %v4315 = vshrl.u32 %v4314, 23
  %v4316 = vsub.s32 %v4315, 127
  %v4317 = vand.u32 2147483647, %v2867
  %v4318 = vand.u32 %v4317, 8388607
  %v4319 = vor.u32 %v4318, 8388608
  %v4320 = vsub.s32 0, %v4319
  %v4321 = vadd.s32 %v4316, 1
  %vm4322 = vcmp.gt.s32.totalorder %v4321, 0
  %v4323 = vsel %vm4322, %v4321, 0
  %v4324 = vshrl.u32 %v4323, 5
  %v4325 = vand.u32 %v4323, 31
  %v4326 = vsub.s32 32, %v4325
  %v4327 = vshrl.u32 683565275, %v4326
  %v4328 = vshll.u32 683565275, %v4325
  %v4329 = vshrl.u32 2475754826, %v4326
  %v4330 = vor.u32 %v4328, %v4329
  %v4331 = vshll.u32 2475754826, %v4325
  %v4332 = vshrl.u32 2131351028, %v4326
  %v4333 = vor.u32 %v4331, %v4332
  %v4334 = vshll.u32 2131351028, %v4325
  %v4335 = vshrl.u32 2102212464, %v4326
  %v4336 = vor.u32 %v4334, %v4335
  %v4337 = vshll.u32 2102212464, %v4325
  %v4338 = vshrl.u32 920167782, %v4326
  %v4339 = vor.u32 %v4337, %v4338
  %v4340 = vshll.u32 920167782, %v4325
  %v4341 = vshrl.u32 1326507024, %v4326
  %v4342 = vor.u32 %v4340, %v4341
  %vm4343 = vcmp.lt.s32.totalorder %v4324, 1
  %vm4344 = vcmp.lt.s32.totalorder %v4324, 2
  %vm4345 = vcmp.lt.s32.totalorder %v4324, 3
  %vm4346 = vcmp.lt.s32.totalorder %v4324, 4
  %v4347 = vsel %vm4343, %v4327, %v4330
  %v4348 = vsel %vm4346, %v4336, 2102212464
  %v4349 = vsel %vm4345, %v4333, %v4348
  %v4350 = vsel %vm4344, %v4347, %v4349
  %v4351 = vsel %vm4343, %v4330, %v4333
  %v4352 = vsel %vm4346, %v4339, 920167782
  %v4353 = vsel %vm4345, %v4336, %v4352
  %v4354 = vsel %vm4344, %v4351, %v4353
  %v4355 = vsel %vm4343, %v4333, %v4336
  %v4356 = vsel %vm4346, %v4342, 1326507024
  %v4357 = vsel %vm4345, %v4339, %v4356
  %v4358 = vsel %vm4344, %v4355, %v4357
  %v4359 = vshll.u32 %v4319, 8
  %v4360 = vmul.u32.u64.compose %v4359, %v4358
  %v4361 = vextract.low.u32 %v4360
  %v4362 = vextract.high.u32 %v4360
  %v4363 = vmul.u32.u64.compose %v4359, %v4354
  %v4364 = vextract.low.u32 %v4363
  %v4365 = vextract.high.u32 %v4363
  %v4366 = vmul.u32 %v4359, %v4350
  %v4367 = vadd.s32 %v4362, %v4364
  %vm4368 = vc.u32 %v4362, %v4364
  %v4369 = vadd.s32 %v4365, 1
  %v4370 = vsel %vm4368, %v4369, %v4365
  %v4371 = vadd.s32 %v4366, %v4370
  %v4372 = vadd.s32 %v4371, 536870912
  %v4373 = vshrl.u32 %v4372, 30
  %v4374 = vshll.u32 %v4373, 30
  %v4375 = vsub.s32 %v4371, %v4374
  %vm4376 = vcmp.lt.s32.totalorder %v4375, 0
  %v4377 = vsub.s32 0, %v4375
  %v4378 = vsel %vm4376, %v4377, %v4375
  %v4379 = vclz %v4378
  %v4380 = vsub.s32 %v4379, 2
  %vm4381 = vcmp.gt.s32.totalorder 0, %v4380
  %v4382 = vsel %vm4381, 0, %v4380
  %v4383 = vsub.s32 32, %v4382
  %v4384 = vshll.u32 %v4375, %v4382
  %v4385 = vshrl.u32 %v4367, %v4383
  %v4386 = vor.u32 %v4384, %v4385
  %v4387 = vsub.s32 4294967266, %v4382
  %v4388 = vadd.s32 %v4387, 127
  %v4389 = vshll.u32 %v4388, 23
  %v4390 = vor.u32 4788187, %v4389
  %v4391 = vand.u32 2147483647, %v4390
  %v4393 = vcvt.s32.f32 %v4386
  %v4394 = vmul.f32 %v4393, %v4391
  %v4395 = vxor.u32 %v4394, 2147483648
  %v4396 = vsel %vm4313, %v4395, %v4394
  %v4397 = vsub.s32 4, %v4373
  %v4398 = vsel %vm4313, %v4397, %v4373
  %v4399 = vsel %vm4312, %v2867, %v4396
  %v4400 = vsel %vm4312, 0, %v4398
  %v4401 = vcosq.f32.pop %v4399
  %v4402 = vsinq.f32.pop %v4399
  %vm4403 = vweird.f32 %v2867
  %v4404 = vand.u32 %v4400, 3
  %vm4405 = vcmp.lt.s32.totalorder %v4404, 2
  %vm4406 = vcmp.eq.s32.totalorder %v4404, 0
  %v4407 = vxor.u32 %v4402, 2147483648
  %v4408 = vsel %vm4406, %v4401, %v4407
  %vm4409 = vcmp.eq.s32.totalorder %v4404, 2
  %v4410 = vxor.u32 %v4401, 2147483648
  %v4411 = vsel %vm4409, %v4410, %v4402
  %v4412 = vsel %vm4405, %v4408, %v4411
  %v4413 = vsel %vm4403, nan, %v4412
  %v4414 = vand.u32 2147483647, %v2868
  %vm4415 = vcmp.le.f32.partialorder %v4414, 0.7853982
  %vm4416 = vcmp.lt.s32.totalorder %v2868, 0
  %v4417 = vand.u32 %v2868, 2139095040
  %v4418 = vshrl.u32 %v4417, 23
  %v4419 = vsub.s32 %v4418, 127
  %v4420 = vand.u32 2147483647, %v2868
  %v4421 = vand.u32 %v4420, 8388607
  %v4422 = vor.u32 %v4421, 8388608
  %v4423 = vsub.s32 0, %v4422
  %v4424 = vadd.s32 %v4419, 1
  %vm4425 = vcmp.gt.s32.totalorder %v4424, 0
  %v4426 = vsel %vm4425, %v4424, 0
  %v4427 = vshrl.u32 %v4426, 5
  %v4428 = vand.u32 %v4426, 31
  %v4429 = vsub.s32 32, %v4428
  %v4430 = vshrl.u32 683565275, %v4429
  %v4431 = vshll.u32 683565275, %v4428
  %v4432 = vshrl.u32 2475754826, %v4429
  %v4433 = vor.u32 %v4431, %v4432
  %v4434 = vshll.u32 2475754826, %v4428
  %v4435 = vshrl.u32 2131351028, %v4429
  %v4436 = vor.u32 %v4434, %v4435
  %v4437 = vshll.u32 2131351028, %v4428
  %v4438 = vshrl.u32 2102212464, %v4429
  %v4439 = vor.u32 %v4437, %v4438
  %v4440 = vshll.u32 2102212464, %v4428
  %v4441 = vshrl.u32 920167782, %v4429
  %v4442 = vor.u32 %v4440, %v4441
  %v4443 = vshll.u32 920167782, %v4428
  %v4444 = vshrl.u32 1326507024, %v4429
  %v4445 = vor.u32 %v4443, %v4444
  %vm4446 = vcmp.lt.s32.totalorder %v4427, 1
  %vm4447 = vcmp.lt.s32.totalorder %v4427, 2
  %vm4448 = vcmp.lt.s32.totalorder %v4427, 3
  %vm4449 = vcmp.lt.s32.totalorder %v4427, 4
  %v4450 = vsel %vm4446, %v4430, %v4433
  %v4451 = vsel %vm4449, %v4439, 2102212464
  %v4452 = vsel %vm4448, %v4436, %v4451
  %v4453 = vsel %vm4447, %v4450, %v4452
  %v4454 = vsel %vm4446, %v4433, %v4436
  %v4455 = vsel %vm4449, %v4442, 920167782
  %v4456 = vsel %vm4448, %v4439, %v4455
  %v4457 = vsel %vm4447, %v4454, %v4456
  %v4458 = vsel %vm4446, %v4436, %v4439
  %v4459 = vsel %vm4449, %v4445, 1326507024
  %v4460 = vsel %vm4448, %v4442, %v4459
  %v4461 = vsel %vm4447, %v4458, %v4460
  %v4462 = vshll.u32 %v4422, 8
  %v4463 = vmul.u32.u64.compose %v4462, %v4461
  %v4464 = vextract.low.u32 %v4463
  %v4465 = vextract.high.u32 %v4463
  %v4466 = vmul.u32.u64.compose %v4462, %v4457
  %v4467 = vextract.low.u32 %v4466
  %v4468 = vextract.high.u32 %v4466
  %v4469 = vmul.u32 %v4462, %v4453
  %v4470 = vadd.s32 %v4465, %v4467
  %vm4471 = vc.u32 %v4465, %v4467
  %v4472 = vadd.s32 %v4468, 1
  %v4473 = vsel %vm4471, %v4472, %v4468
  %v4474 = vadd.s32 %v4469, %v4473
  %v4475 = vadd.s32 %v4474, 536870912
  %v4476 = vshrl.u32 %v4475, 30
  %v4477 = vshll.u32 %v4476, 30
  %v4478 = vsub.s32 %v4474, %v4477
  %vm4479 = vcmp.lt.s32.totalorder %v4478, 0
  %v4480 = vsub.s32 0, %v4478
  %v4481 = vsel %vm4479, %v4480, %v4478
  %v4482 = vclz %v4481
  %v4483 = vsub.s32 %v4482, 2
  %vm4484 = vcmp.gt.s32.totalorder 0, %v4483
  %v4485 = vsel %vm4484, 0, %v4483
  %v4486 = vsub.s32 32, %v4485
  %v4487 = vshll.u32 %v4478, %v4485
  %v4488 = vshrl.u32 %v4470, %v4486
  %v4489 = vor.u32 %v4487, %v4488
  %v4490 = vsub.s32 4294967266, %v4485
  %v4491 = vadd.s32 %v4490, 127
  %v4492 = vshll.u32 %v4491, 23
  %v4493 = vor.u32 4788187, %v4492
  %v4494 = vand.u32 2147483647, %v4493
  %v4496 = vcvt.s32.f32 %v4489
  %v4497 = vmul.f32 %v4496, %v4494
  %v4498 = vxor.u32 %v4497, 2147483648
  %v4499 = vsel %vm4416, %v4498, %v4497
  %v4500 = vsub.s32 4, %v4476
  %v4501 = vsel %vm4416, %v4500, %v4476
  %v4502 = vsel %vm4415, %v2868, %v4499
  %v4503 = vsel %vm4415, 0, %v4501
  %v4504 = vcosq.f32.pop %v4502
  %v4505 = vsinq.f32.pop %v4502
  %vm4506 = vweird.f32 %v2868
  %v4507 = vand.u32 %v4503, 3
  %vm4508 = vcmp.lt.s32.totalorder %v4507, 2
  %vm4509 = vcmp.eq.s32.totalorder %v4507, 0
  %v4510 = vxor.u32 %v4505, 2147483648
  %v4511 = vsel %vm4509, %v4504, %v4510
  %vm4512 = vcmp.eq.s32.totalorder %v4507, 2
  %v4513 = vxor.u32 %v4504, 2147483648
  %v4514 = vsel %vm4512, %v4513, %v4505
  %v4515 = vsel %vm4508, %v4511, %v4514
  %v4516 = vsel %vm4506, nan, %v4515
  %v4517 = vadd.f32 %v2971, 1.0
  %v4518 = vadd.f32 %v3074, 1.0
  %v4519 = vadd.f32 %v3177, 1.0
  %v4520 = vadd.f32 %v3280, 1.0
  %v4521 = vadd.f32 %v3383, 1.0
  %v4522 = vadd.f32 %v3486, 1.0
  %v4523 = vadd.f32 %v3589, 1.0
  %v4524 = vadd.f32 %v3692, 1.0
  %v4525 = vadd.f32 %v3795, 1.0
  %v4526 = vadd.f32 %v3898, 1.0
  %v4527 = vadd.f32 %v4001, 1.0
  %v4528 = vadd.f32 %v4104, 1.0
  %v4529 = vadd.f32 %v4207, 1.0
  %v4530 = vadd.f32 %v4310, 1.0
  %v4531 = vadd.f32 %v4413, 1.0
  %v4532 = vadd.f32 %v4516, 1.0
  %v4533 = vmul.f32 %v4517, 0.5
  %v4534 = vmul.f32 %v4518, 0.5
  %v4535 = vmul.f32 %v4519, 0.5
  %v4536 = vmul.f32 %v4520, 0.5
  %v4537 = vmul.f32 %v4521, 0.5
  %v4538 = vmul.f32 %v4522, 0.5
  %v4539 = vmul.f32 %v4523, 0.5
  %v4540 = vmul.f32 %v4524, 0.5
  %v4541 = vmul.f32 %v4525, 0.5
  %v4542 = vmul.f32 %v4526, 0.5
  %v4543 = vmul.f32 %v4527, 0.5
  %v4544 = vmul.f32 %v4528, 0.5
  %v4545 = vmul.f32 %v4529, 0.5
  %v4546 = vmul.f32 %v4530, 0.5
  %v4547 = vmul.f32 %v4531, 0.5
  %v4548 = vmul.f32 %v4532, 0.5
  %v4549 = vmul.f32 %v2061, 1.1574074e-06
  %v4550 = vmul.f32 %v2062, 1.1574074e-06
  %v4551 = vmul.f32 %v2063, 1.1574074e-06
  %v4552 = vmul.f32 %v2064, 1.1574074e-06
  %v4553 = vmul.f32 %v2065, 1.1574074e-06
  %v4554 = vmul.f32 %v2066, 1.1574074e-06
  %v4555 = vmul.f32 %v2067, 1.1574074e-06
  %v4556 = vmul.f32 %v2068, 1.1574074e-06
  %v4557 = vmul.f32 %v2069, 1.1574074e-06
  %v4558 = vmul.f32 %v2070, 1.1574074e-06
  %v4559 = vmul.f32 %v2071, 1.1574074e-06
  %v4560 = vmul.f32 %v2072, 1.1574074e-06
  %v4561 = vmul.f32 %v2073, 1.1574074e-06
  %v4562 = vmul.f32 %v2074, 1.1574074e-06
  %v4563 = vmul.f32 %v2075, 1.1574074e-06
  %v4564 = vmul.f32 %v2076, 1.1574074e-06
  %v4565 = vadd.f32 %v4549, %v2747
  %v4566 = vadd.f32 %v4550, %v2754
  %v4567 = vadd.f32 %v4551, %v2761
  %v4568 = vadd.f32 %v4552, %v2768
  %v4569 = vadd.f32 %v4553, %v2775
  %v4570 = vadd.f32 %v4554, %v2782
  %v4571 = vadd.f32 %v4555, %v2789
  %v4572 = vadd.f32 %v4556, %v2796
  %v4573 = vadd.f32 %v4557, %v2803
  %v4574 = vadd.f32 %v4558, %v2810
  %v4575 = vadd.f32 %v4559, %v2817
  %v4576 = vadd.f32 %v4560, %v2824
  %v4577 = vadd.f32 %v4561, %v2831
  %v4578 = vadd.f32 %v4562, %v2838
  %v4579 = vadd.f32 %v4563, %v2845
  %v4580 = vadd.f32 %v4564, %v2852
  %v4581 = vsub.f32 0.0, %v4565
  %v4582 = vsub.f32 0.0, %v4566
  %v4583 = vsub.f32 0.0, %v4567
  %v4584 = vsub.f32 0.0, %v4568
  %v4585 = vsub.f32 0.0, %v4569
  %v4586 = vsub.f32 0.0, %v4570
  %v4587 = vsub.f32 0.0, %v4571
  %v4588 = vsub.f32 0.0, %v4572
  %v4589 = vsub.f32 0.0, %v4573
  %v4590 = vsub.f32 0.0, %v4574
  %v4591 = vsub.f32 0.0, %v4575
  %v4592 = vsub.f32 0.0, %v4576
  %v4593 = vsub.f32 0.0, %v4577
  %v4594 = vsub.f32 0.0, %v4578
  %v4595 = vsub.f32 0.0, %v4579
  %v4596 = vsub.f32 0.0, %v4580
  %v4597 = vmul.f32 %v4581, 1.442695
  %v4598 = vpow.pop %v4597
  %v4599 = vmul.f32 %v4582, 1.442695
  %v4600 = vpow.pop %v4599
  %v4601 = vmul.f32 %v4583, 1.442695
  %v4602 = vpow.pop %v4601
  %v4603 = vmul.f32 %v4584, 1.442695
  %v4604 = vpow.pop %v4603
  %v4605 = vmul.f32 %v4585, 1.442695
  %v4606 = vpow.pop %v4605
  %v4607 = vmul.f32 %v4586, 1.442695
  %v4608 = vpow.pop %v4607
  %v4609 = vmul.f32 %v4587, 1.442695
  %v4610 = vpow.pop %v4609
  %v4611 = vmul.f32 %v4588, 1.442695
  %v4612 = vpow.pop %v4611
  %v4613 = vmul.f32 %v4589, 1.442695
  %v4614 = vpow.pop %v4613
  %v4615 = vmul.f32 %v4590, 1.442695
  %v4616 = vpow.pop %v4615
  %v4617 = vmul.f32 %v4591, 1.442695
  %v4618 = vpow.pop %v4617
  %v4619 = vmul.f32 %v4592, 1.442695
  %v4620 = vpow.pop %v4619
  %v4621 = vmul.f32 %v4593, 1.442695
  %v4622 = vpow.pop %v4621
  %v4623 = vmul.f32 %v4594, 1.442695
  %v4624 = vpow.pop %v4623
  %v4625 = vmul.f32 %v4595, 1.442695
  %v4626 = vpow.pop %v4625
  %v4627 = vmul.f32 %v4596, 1.442695
  %v4628 = vpow.pop %v4627
  %v4629 = vmul.f32 %v4533, %v4598
  %v4630 = vmul.f32 %v4534, %v4600
  %v4631 = vmul.f32 %v4535, %v4602
  %v4632 = vmul.f32 %v4536, %v4604
  %v4633 = vmul.f32 %v4537, %v4606
  %v4634 = vmul.f32 %v4538, %v4608
  %v4635 = vmul.f32 %v4539, %v4610
  %v4636 = vmul.f32 %v4540, %v4612
  %v4637 = vmul.f32 %v4541, %v4614
  %v4638 = vmul.f32 %v4542, %v4616
  %v4639 = vmul.f32 %v4543, %v4618
  %v4640 = vmul.f32 %v4544, %v4620
  %v4641 = vmul.f32 %v4545, %v4622
  %v4642 = vmul.f32 %v4546, %v4624
  %v4643 = vmul.f32 %v4547, %v4626
  %v4644 = vmul.f32 %v4548, %v4628
  %v4645 = vadd.f32 %v4629, 1e-10
  %v4646 = vadd.f32 %v4630, 1e-10
  %v4647 = vadd.f32 %v4631, 1e-10
  %v4648 = vadd.f32 %v4632, 1e-10
  %v4649 = vadd.f32 %v4633, 1e-10
  %v4650 = vadd.f32 %v4634, 1e-10
  %v4651 = vadd.f32 %v4635, 1e-10
  %v4652 = vadd.f32 %v4636, 1e-10
  %v4653 = vadd.f32 %v4637, 1e-10
  %v4654 = vadd.f32 %v4638, 1e-10
  %v4655 = vadd.f32 %v4639, 1e-10
  %v4656 = vadd.f32 %v4640, 1e-10
  %v4657 = vadd.f32 %v4641, 1e-10
  %v4658 = vadd.f32 %v4642, 1e-10
  %v4659 = vadd.f32 %v4643, 1e-10
  %v4660 = vadd.f32 %v4644, 1e-10
  %v4661 = vlaneseq
  %v4662 = vshrl.u32 %v4661, 7
  %v4663 = vlaneseq
  %v4664 = vand.u32 %v4663, 127
  %vm4665 = vcmp.le.s32.totalorder %v4664, %v4662
  %v4666 = vsel %vm4665, 1, 0
  %vm4667 = vcmp.eq.s32.totalorder %v4666, 1
  %v4668 = vsel %vm4667, %v4645, 0.0
  %v4669 = vsel %vm4667, %v4646, 0.0
  %v4670 = vsel %vm4667, %v4647, 0.0
  %v4671 = vsel %vm4667, %v4648, 0.0
  %v4672 = vsel %vm4667, %v4649, 0.0
  %v4673 = vsel %vm4667, %v4650, 0.0
  %v4674 = vsel %vm4667, %v4651, 0.0
  %v4675 = vsel %vm4667, %v4652, 0.0
  %v4676 = vsel %vm4667, %v4653, 0.0
  %v4677 = vsel %vm4667, %v4654, 0.0
  %v4678 = vsel %vm4667, %v4655, 0.0
  %v4679 = vsel %vm4667, %v4656, 0.0
  %v4680 = vsel %vm4667, %v4657, 0.0
  %v4681 = vsel %vm4667, %v4658, 0.0
  %v4682 = vsel %vm4667, %v4659, 0.0
  %v4683 = vsel %vm4667, %v4660, 0.0
  %vm4684 = vcmask 64512
  %v4685 = vsel %vm4684, %v4668, 0.0
  %4686 = vadd.xlane.f32.xlu0 %v4685
  %v4687 = vpop.xlane.xlu0 %4686
  %v4688 = vsel %vm4684, %v4669, 0.0
  %4689 = vadd.xlane.f32.xlu0 %v4688
  %v4690 = vpop.xlane.xlu0 %4689
  %v4691 = vsel %vm4684, %v4670, 0.0
  %4692 = vadd.xlane.f32.xlu0 %v4691
  %v4693 = vpop.xlane.xlu0 %4692
  %v4694 = vsel %vm4684, %v4671, 0.0
  %4695 = vadd.xlane.f32.xlu0 %v4694
  %v4696 = vpop.xlane.xlu0 %4695
  %v4697 = vsel %vm4684, %v4672, 0.0
  %4698 = vadd.xlane.f32.xlu0 %v4697
  %v4699 = vpop.xlane.xlu0 %4698
  %v4700 = vsel %vm4684, %v4673, 0.0
  %4701 = vadd.xlane.f32.xlu0 %v4700
  %v4702 = vpop.xlane.xlu0 %4701
  %v4703 = vsel %vm4684, %v4674, 0.0
  %4704 = vadd.xlane.f32.xlu0 %v4703
  %v4705 = vpop.xlane.xlu0 %4704
  %v4706 = vsel %vm4684, %v4675, 0.0
  %4707 = vadd.xlane.f32.xlu0 %v4706
  %v4708 = vpop.xlane.xlu0 %4707
  %v4709 = vsel %vm4684, %v4676, 0.0
  %4710 = vadd.xlane.f32.xlu0 %v4709
  %v4711 = vpop.xlane.xlu0 %4710
  %v4712 = vsel %vm4684, %v4677, 0.0
  %4713 = vadd.xlane.f32.xlu0 %v4712
  %v4714 = vpop.xlane.xlu0 %4713
  %v4715 = vsel %vm4684, %v4678, 0.0
  %4716 = vadd.xlane.f32.xlu0 %v4715
  %v4717 = vpop.xlane.xlu0 %4716
  %v4718 = vsel %vm4684, %v4679, 0.0
  %4719 = vadd.xlane.f32.xlu0 %v4718
  %v4720 = vpop.xlane.xlu0 %4719
  %v4721 = vsel %vm4684, %v4680, 0.0
  %4722 = vadd.xlane.f32.xlu0 %v4721
  %v4723 = vpop.xlane.xlu0 %4722
  %v4724 = vsel %vm4684, %v4681, 0.0
  %4725 = vadd.xlane.f32.xlu0 %v4724
  %v4726 = vpop.xlane.xlu0 %4725
  %v4727 = vsel %vm4684, %v4682, 0.0
  %4728 = vadd.xlane.f32.xlu0 %v4727
  %v4729 = vpop.xlane.xlu0 %4728
  %v4730 = vsel %vm4684, %v4683, 0.0
  %4731 = vadd.xlane.f32.xlu0 %v4730
  %v4732 = vpop.xlane.xlu0 %4731
  %v4733 = vmax.f32 %v4687, 1e-10
  %v4734 = vmax.f32 %v4690, 1e-10
  %v4735 = vmax.f32 %v4693, 1e-10
  %v4736 = vmax.f32 %v4696, 1e-10
  %v4737 = vmax.f32 %v4699, 1e-10
  %v4738 = vmax.f32 %v4702, 1e-10
  %v4739 = vmax.f32 %v4705, 1e-10
  %v4740 = vmax.f32 %v4708, 1e-10
  %v4741 = vmax.f32 %v4711, 1e-10
  %v4742 = vmax.f32 %v4714, 1e-10
  %v4743 = vmax.f32 %v4717, 1e-10
  %v4744 = vmax.f32 %v4720, 1e-10
  %v4745 = vmax.f32 %v4723, 1e-10
  %v4746 = vmax.f32 %v4726, 1e-10
  %v4747 = vmax.f32 %v4729, 1e-10
  %v4748 = vmax.f32 %v4732, 1e-10
  %v4749 = vrcp.pop %v4733
  %v4750 = vmul.f32 1.0, %v4749
  %v4751 = vrcp.pop %v4734
  %v4752 = vmul.f32 1.0, %v4751
  %v4753 = vrcp.pop %v4735
  %v4754 = vmul.f32 1.0, %v4753
  %v4755 = vrcp.pop %v4736
  %v4756 = vmul.f32 1.0, %v4755
  %v4757 = vrcp.pop %v4737
  %v4758 = vmul.f32 1.0, %v4757
  %v4759 = vrcp.pop %v4738
  %v4760 = vmul.f32 1.0, %v4759
  %v4761 = vrcp.pop %v4739
  %v4762 = vmul.f32 1.0, %v4761
  %v4763 = vrcp.pop %v4740
  %v4764 = vmul.f32 1.0, %v4763
  %v4765 = vrcp.pop %v4741
  %v4766 = vmul.f32 1.0, %v4765
  %v4767 = vrcp.pop %v4742
  %v4768 = vmul.f32 1.0, %v4767
  %v4769 = vrcp.pop %v4743
  %v4770 = vmul.f32 1.0, %v4769
  %v4771 = vrcp.pop %v4744
  %v4772 = vmul.f32 1.0, %v4771
  %v4773 = vrcp.pop %v4745
  %v4774 = vmul.f32 1.0, %v4773
  %v4775 = vrcp.pop %v4746
  %v4776 = vmul.f32 1.0, %v4775
  %v4777 = vrcp.pop %v4747
  %v4778 = vmul.f32 1.0, %v4777
  %v4779 = vrcp.pop %v4748
  %v4780 = vmul.f32 1.0, %v4779
  %v4781 = vld [vmem:[#allocation3] sm:$0xff]
  %v4782 = vld [vmem:[#allocation3 + $0x8] sm:$0xff]
  %v4783 = vld [vmem:[#allocation3 + $0x10] sm:$0xff]
  %v4784 = vld [vmem:[#allocation3 + $0x18] sm:$0xff]
  %v4785 = vld [vmem:[#allocation3 + $0x20] sm:$0xff]
  %v4786 = vld [vmem:[#allocation3 + $0x28] sm:$0xff]
  %v4787 = vld [vmem:[#allocation3 + $0x30] sm:$0xff]
  %v4788 = vld [vmem:[#allocation3 + $0x38] sm:$0xff]
  %v4789 = vld [vmem:[#allocation3 + $0x40] sm:$0xff]
  %v4790 = vld [vmem:[#allocation3 + $0x48] sm:$0xff]
  %v4791 = vld [vmem:[#allocation3 + $0x50] sm:$0xff]
  %v4792 = vld [vmem:[#allocation3 + $0x58] sm:$0xff]
  %v4793 = vld [vmem:[#allocation3 + $0x60] sm:$0xff]
  %v4794 = vld [vmem:[#allocation3 + $0x68] sm:$0xff]
  %v4795 = vld [vmem:[#allocation3 + $0x70] sm:$0xff]
  %v4796 = vld [vmem:[#allocation3 + $0x78] sm:$0xff]
  %v4797 = vpack.c.bf16 %v4781, %v4781
  %v4798 = vpack.c.bf16 %v4782, %v4782
  %v4799 = vpack.c.bf16 %v4783, %v4783
  %v4800 = vpack.c.bf16 %v4784, %v4784
  %v4801 = vpack.c.bf16 %v4785, %v4785
  %v4802 = vpack.c.bf16 %v4786, %v4786
  %v4803 = vpack.c.bf16 %v4787, %v4787
  %v4804 = vpack.c.bf16 %v4788, %v4788
  %v4805 = vpack.c.bf16 %v4789, %v4789
  %v4806 = vpack.c.bf16 %v4790, %v4790
  %v4807 = vpack.c.bf16 %v4791, %v4791
  %v4808 = vpack.c.bf16 %v4792, %v4792
  %v4809 = vpack.c.bf16 %v4793, %v4793
  %v4810 = vpack.c.bf16 %v4794, %v4794
  %v4811 = vpack.c.bf16 %v4795, %v4795
  %v4812 = vpack.c.bf16 %v4796, %v4796
  %v4813 = vmul.f32 %v4668, %v4750
  %v4814 = vmul.f32 %v4669, %v4752
  %v4815 = vmul.f32 %v4670, %v4754
  %v4816 = vmul.f32 %v4671, %v4756
  %v4817 = vmul.f32 %v4672, %v4758
  %v4818 = vmul.f32 %v4673, %v4760
  %v4819 = vmul.f32 %v4674, %v4762
  %v4820 = vmul.f32 %v4675, %v4764
  %v4821 = vmul.f32 %v4676, %v4766
  %v4822 = vmul.f32 %v4677, %v4768
  %v4823 = vmul.f32 %v4678, %v4770
  %v4824 = vmul.f32 %v4679, %v4772
  %v4825 = vmul.f32 %v4680, %v4774
  %v4826 = vmul.f32 %v4681, %v4776
  %v4827 = vmul.f32 %v4682, %v4778
  %v4828 = vmul.f32 %v4683, %v4780
  %v4831 = vcombine.high %v1751, %v1751
  %v4833 = vunpack.c.l.s4 1966171168
  %v4834 = vunpack.c.0.s8 %v4833
  %v4835 = vlaneseq
  %v4836 = vshrl.u32 %v4835, 7
  %v4837 = vsub.s32 %v4834, %v4836
  %v4838 = vrot.slane %v1751, %v4837
  %v4840 = vunpack.c.l.s4 1966171168
  %v4841 = vunpack.c.0.s8 %v4840
  %v4842 = vlaneseq
  %v4843 = vshrl.u32 %v4842, 7
  %v4844 = vsub.s32 %v4841, %v4843
  %v4845 = vrot.slane %v4831, %v4844
  %v4846 = vcombine.high %v4838, %v4838
  %v4847 = vcombine.high %v4845, %v4845
  %v4849 = vunpack.c.l.s4 1966171168
  %v4850 = vunpack.c.0.s8 %v4849
  %v4851 = vlaneseq
  %v4852 = vshrl.u32 %v4851, 7
  %v4853 = vsub.s32 %v4850, %v4852
  %v4854 = vrot.slane %v4838, %v4853
  %v4856 = vunpack.c.l.s4 1966171168
  %v4857 = vunpack.c.0.s8 %v4856
  %v4858 = vlaneseq
  %v4859 = vshrl.u32 %v4858, 7
  %v4860 = vsub.s32 %v4857, %v4859
  %v4861 = vrot.slane %v4845, %v4860
  %v4863 = vunpack.c.l.s4 1966171168
  %v4864 = vunpack.c.0.s8 %v4863
  %v4865 = vlaneseq
  %v4866 = vshrl.u32 %v4865, 7
  %v4867 = vsub.s32 %v4864, %v4866
  %v4868 = vrot.slane %v4846, %v4867
  %v4870 = vunpack.c.l.s4 1966171168
  %v4871 = vunpack.c.0.s8 %v4870
  %v4872 = vlaneseq
  %v4873 = vshrl.u32 %v4872, 7
  %v4874 = vsub.s32 %v4871, %v4873
  %v4875 = vrot.slane %v4847, %v4874
  %v4876 = vcombine.high %v4854, %v4854
  %v4877 = vcombine.high %v4861, %v4861
  %v4878 = vcombine.high %v4868, %v4868
  %v4879 = vcombine.high %v4875, %v4875
  %v4880 = vcombine.high %v1752, %v1752
  %v4882 = vunpack.c.l.s4 1966171168
  %v4883 = vunpack.c.0.s8 %v4882
  %v4884 = vlaneseq
  %v4885 = vshrl.u32 %v4884, 7
  %v4886 = vsub.s32 %v4883, %v4885
  %v4887 = vrot.slane %v1752, %v4886
  %v4889 = vunpack.c.l.s4 1966171168
  %v4890 = vunpack.c.0.s8 %v4889
  %v4891 = vlaneseq
  %v4892 = vshrl.u32 %v4891, 7
  %v4893 = vsub.s32 %v4890, %v4892
  %v4894 = vrot.slane %v4880, %v4893
  %v4895 = vcombine.high %v4887, %v4887
  %v4896 = vcombine.high %v4894, %v4894
  %v4898 = vunpack.c.l.s4 1966171168
  %v4899 = vunpack.c.0.s8 %v4898
  %v4900 = vlaneseq
  %v4901 = vshrl.u32 %v4900, 7
  %v4902 = vsub.s32 %v4899, %v4901
  %v4903 = vrot.slane %v4887, %v4902
  %v4905 = vunpack.c.l.s4 1966171168
  %v4906 = vunpack.c.0.s8 %v4905
  %v4907 = vlaneseq
  %v4908 = vshrl.u32 %v4907, 7
  %v4909 = vsub.s32 %v4906, %v4908
  %v4910 = vrot.slane %v4894, %v4909
  %v4912 = vunpack.c.l.s4 1966171168
  %v4913 = vunpack.c.0.s8 %v4912
  %v4914 = vlaneseq
  %v4915 = vshrl.u32 %v4914, 7
  %v4916 = vsub.s32 %v4913, %v4915
  %v4917 = vrot.slane %v4895, %v4916
  %v4919 = vunpack.c.l.s4 1966171168
  %v4920 = vunpack.c.0.s8 %v4919
  %v4921 = vlaneseq
  %v4922 = vshrl.u32 %v4921, 7
  %v4923 = vsub.s32 %v4920, %v4922
  %v4924 = vrot.slane %v4896, %v4923
  %v4925 = vcombine.high %v4903, %v4903
  %v4926 = vcombine.high %v4910, %v4910
  %v4927 = vcombine.high %v4917, %v4917
  %v4928 = vcombine.high %v4924, %v4924
  %v4929 = vlaneseq
  %v4930 = vshrl.u32 %v4929, 7
  %v4931 = vsub.s32 0, %v4930
  %v4932 = vrot.slane %v4854, %v4931
  %v4933 = vlaneseq
  %v4934 = vshrl.u32 %v4933, 7
  %v4935 = vsub.s32 0, %v4934
  %v4936 = vrot.slane %v4868, %v4935
  %v4937 = vlaneseq
  %v4938 = vshrl.u32 %v4937, 7
  %v4939 = vsub.s32 0, %v4938
  %v4940 = vrot.slane %v4876, %v4939
  %v4941 = vlaneseq
  %v4942 = vshrl.u32 %v4941, 7
  %v4943 = vsub.s32 0, %v4942
  %v4944 = vrot.slane %v4878, %v4943
  %v4945 = vlaneseq
  %v4946 = vshrl.u32 %v4945, 7
  %v4947 = vsub.s32 0, %v4946
  %v4948 = vrot.slane %v4861, %v4947
  %v4949 = vlaneseq
  %v4950 = vshrl.u32 %v4949, 7
  %v4951 = vsub.s32 0, %v4950
  %v4952 = vrot.slane %v4875, %v4951
  %v4953 = vlaneseq
  %v4954 = vshrl.u32 %v4953, 7
  %v4955 = vsub.s32 0, %v4954
  %v4956 = vrot.slane %v4877, %v4955
  %v4957 = vlaneseq
  %v4958 = vshrl.u32 %v4957, 7
  %v4959 = vsub.s32 0, %v4958
  %v4960 = vrot.slane %v4879, %v4959
  %v4961 = vlaneseq
  %v4962 = vshrl.u32 %v4961, 7
  %v4963 = vsub.s32 0, %v4962
  %v4964 = vrot.slane %v4903, %v4963
  %v4965 = vlaneseq
  %v4966 = vshrl.u32 %v4965, 7
  %v4967 = vsub.s32 0, %v4966
  %v4968 = vrot.slane %v4917, %v4967
  %v4969 = vlaneseq
  %v4970 = vshrl.u32 %v4969, 7
  %v4971 = vsub.s32 0, %v4970
  %v4972 = vrot.slane %v4925, %v4971
  %v4973 = vlaneseq
  %v4974 = vshrl.u32 %v4973, 7
  %v4975 = vsub.s32 0, %v4974
  %v4976 = vrot.slane %v4927, %v4975
  %v4977 = vlaneseq
  %v4978 = vshrl.u32 %v4977, 7
  %v4979 = vsub.s32 0, %v4978
  %v4980 = vrot.slane %v4910, %v4979
  %v4981 = vlaneseq
  %v4982 = vshrl.u32 %v4981, 7
  %v4983 = vsub.s32 0, %v4982
  %v4984 = vrot.slane %v4924, %v4983
  %v4985 = vlaneseq
  %v4986 = vshrl.u32 %v4985, 7
  %v4987 = vsub.s32 0, %v4986
  %v4988 = vrot.slane %v4926, %v4987
  %v4989 = vlaneseq
  %v4990 = vshrl.u32 %v4989, 7
  %v4991 = vsub.s32 0, %v4990
  %v4992 = vrot.slane %v4928, %v4991
  %v5009 = vmul.f32 %v4813, %v4932
  %v5010 = vmul.f32 %v4814, %v4936
  %v5011 = vmul.f32 %v4815, %v4940
  %v5012 = vmul.f32 %v4816, %v4944
  %v5013 = vmul.f32 %v4817, %v4948
  %v5014 = vmul.f32 %v4818, %v4952
  %v5015 = vmul.f32 %v4819, %v4956
  %v5016 = vmul.f32 %v4820, %v4960
  %v5017 = vmul.f32 %v4821, %v4964
  %v5018 = vmul.f32 %v4822, %v4968
  %v5019 = vmul.f32 %v4823, %v4972
  %v5020 = vmul.f32 %v4824, %v4976
  %v5021 = vmul.f32 %v4825, %v4980
  %v5022 = vmul.f32 %v4826, %v4984
  %v5023 = vmul.f32 %v4827, %v4988
  %v5024 = vmul.f32 %v4828, %v4992
  %v5025 = vpack.c.bf16 %v5009, %v5009
  %v5026 = vpack.c.bf16 %v5010, %v5010
  %v5027 = vpack.c.bf16 %v5011, %v5011
  %v5028 = vpack.c.bf16 %v5012, %v5012
  %v5029 = vpack.c.bf16 %v5013, %v5013
  %v5030 = vpack.c.bf16 %v5014, %v5014
  %v5031 = vpack.c.bf16 %v5015, %v5015
  %v5032 = vpack.c.bf16 %v5016, %v5016
  %v5033 = vpack.c.bf16 %v5017, %v5017
  %v5034 = vpack.c.bf16 %v5018, %v5018
  %v5035 = vpack.c.bf16 %v5019, %v5019
  %v5036 = vpack.c.bf16 %v5020, %v5020
  %v5037 = vpack.c.bf16 %v5021, %v5021
  %v5038 = vpack.c.bf16 %v5022, %v5022
  %v5039 = vpack.c.bf16 %v5023, %v5023
  %v5040 = vpack.c.bf16 %v5024, %v5024
  %v5042 = vsel %vm4684, %v5025, 0
  %vm5044 = vcmask 1043456
  %v5046 = vsel %vm5044, %v4797, 0
  %5048 = vmatprep.subr.bf16.mxu0 0
  %5049 = vmatpush1.bf16.msra.mxu0 %v5046
  %5050 = vmatprep.subr.bf16.mxu0 0
  %5051 = vmatpush1.bf16.msra.mxu0 0
  %5052 = vmatprep.subr.bf16.mxu0 0
  %5053 = vmatpush1.bf16.msra.mxu0 0
  %5054 = vmatprep.subr.bf16.mxu0 0
  %5055 = vmatpush1.bf16.msra.mxu0 0
  %5056 = vmatprep.subr.bf16.mxu0 0
  %5057 = vmatpush1.bf16.msra.mxu0 0
  %5058 = vmatprep.subr.bf16.mxu0 0
  %5059 = vmatpush1.bf16.msra.mxu0 0
  %5060 = vmatprep.subr.bf16.mxu0 0
  %5061 = vmatpush1.bf16.msra.mxu0 0
  %5062 = vmatprep.subr.bf16.mxu0 0
  %5063 = vmatpush1.bf16.msra.mxu0 0
  %5064 = vmatprep.subr.bf16.mxu0 0
  %5065 = vmatpush1.bf16.msra.mxu0 0
  %5066 = vmatprep.subr.bf16.mxu0 0
  %5067 = vmatpush1.bf16.msra.mxu0 0
  %5068 = vmatprep.subr.bf16.mxu0 0
  %5069 = vmatpush1.bf16.msra.mxu0 0
  %5070 = vmatprep.subr.bf16.mxu0 0
  %5071 = vmatpush1.bf16.msra.mxu0 0
  %5072 = vmatprep.subr.bf16.mxu0 0
  %5073 = vmatpush1.bf16.msra.mxu0 0
  %5074 = vmatprep.subr.bf16.mxu0 0
  %5075 = vmatpush1.bf16.msra.mxu0 0
  %5076 = vmatprep.subr.bf16.mxu0 0
  %5077 = vmatpush1.bf16.msra.mxu0 0
  %5078 = vmatprep.subr.bf16.mxu0 0
  %5079 = vmatpush1.bf16.msra.mxu0 0
  %5080 = vmatprep.mubr.bf16.mxu0 0
  %5081 = vmatmul.mubr.bf16.gmra.mrb[0].mxu0 %v5042
  %v5082 = vpop.f32.mrb[0].mxu0
  %v5083 = vadd.f32 0.0, %v5082
  %v5084 = vpop.f32.mrb[0].mxu0
  %v5085 = vpop.f32.mrb[0].mxu0
  %v5086 = vpop.f32.mrb[0].mxu0
  %5087 = vdwg.mxu0
  %v5089 = vsel %vm4684, %v5026, 0
  %v5092 = vsel %vm5044, %v4798, 0
  %5094 = vmatprep.subr.bf16.mxu0 0
  %5095 = vmatpush1.bf16.msra.mxu0 %v5092
  %5096 = vmatprep.subr.bf16.mxu0 0
  %5097 = vmatpush1.bf16.msra.mxu0 0
  %5098 = vmatprep.subr.bf16.mxu0 0
  %5099 = vmatpush1.bf16.msra.mxu0 0
  %5100 = vmatprep.subr.bf16.mxu0 0
  %5101 = vmatpush1.bf16.msra.mxu0 0
  %5102 = vmatprep.subr.bf16.mxu0 0
  %5103 = vmatpush1.bf16.msra.mxu0 0
  %5104 = vmatprep.subr.bf16.mxu0 0
  %5105 = vmatpush1.bf16.msra.mxu0 0
  %5106 = vmatprep.subr.bf16.mxu0 0
  %5107 = vmatpush1.bf16.msra.mxu0 0
  %5108 = vmatprep.subr.bf16.mxu0 0
  %5109 = vmatpush1.bf16.msra.mxu0 0
  %5110 = vmatprep.subr.bf16.mxu0 0
  %5111 = vmatpush1.bf16.msra.mxu0 0
  %5112 = vmatprep.subr.bf16.mxu0 0
  %5113 = vmatpush1.bf16.msra.mxu0 0
  %5114 = vmatprep.subr.bf16.mxu0 0
  %5115 = vmatpush1.bf16.msra.mxu0 0
  %5116 = vmatprep.subr.bf16.mxu0 0
  %5117 = vmatpush1.bf16.msra.mxu0 0
  %5118 = vmatprep.subr.bf16.mxu0 0
  %5119 = vmatpush1.bf16.msra.mxu0 0
  %5120 = vmatprep.subr.bf16.mxu0 0
  %5121 = vmatpush1.bf16.msra.mxu0 0
  %5122 = vmatprep.subr.bf16.mxu0 0
  %5123 = vmatpush1.bf16.msra.mxu0 0
  %5124 = vmatprep.subr.bf16.mxu0 0
  %5125 = vmatpush1.bf16.msra.mxu0 0
  %5126 = vmatprep.mubr.bf16.mxu0 0
  %5127 = vmatmul.mubr.bf16.gmra.mrb[0].mxu0 %v5089
  %v5128 = vpop.f32.mrb[0].mxu0
  %v5129 = vadd.f32 0.0, %v5128
  %v5130 = vpop.f32.mrb[0].mxu0
  %v5131 = vpop.f32.mrb[0].mxu0
  %v5132 = vpop.f32.mrb[0].mxu0
  %5133 = vdwg.mxu0
  %v5135 = vsel %vm4684, %v5027, 0
  %v5138 = vsel %vm5044, %v4799, 0
  %5140 = vmatprep.subr.bf16.mxu0 0
  %5141 = vmatpush1.bf16.msra.mxu0 %v5138
  %5142 = vmatprep.subr.bf16.mxu0 0
  %5143 = vmatpush1.bf16.msra.mxu0 0
  %5144 = vmatprep.subr.bf16.mxu0 0
  %5145 = vmatpush1.bf16.msra.mxu0 0
  %5146 = vmatprep.subr.bf16.mxu0 0
  %5147 = vmatpush1.bf16.msra.mxu0 0
  %5148 = vmatprep.subr.bf16.mxu0 0
  %5149 = vmatpush1.bf16.msra.mxu0 0
  %5150 = vmatprep.subr.bf16.mxu0 0
  %5151 = vmatpush1.bf16.msra.mxu0 0
  %5152 = vmatprep.subr.bf16.mxu0 0
  %5153 = vmatpush1.bf16.msra.mxu0 0
  %5154 = vmatprep.subr.bf16.mxu0 0
  %5155 = vmatpush1.bf16.msra.mxu0 0
  %5156 = vmatprep.subr.bf16.mxu0 0
  %5157 = vmatpush1.bf16.msra.mxu0 0
  %5158 = vmatprep.subr.bf16.mxu0 0
  %5159 = vmatpush1.bf16.msra.mxu0 0
  %5160 = vmatprep.subr.bf16.mxu0 0
  %5161 = vmatpush1.bf16.msra.mxu0 0
  %5162 = vmatprep.subr.bf16.mxu0 0
  %5163 = vmatpush1.bf16.msra.mxu0 0
  %5164 = vmatprep.subr.bf16.mxu0 0
  %5165 = vmatpush1.bf16.msra.mxu0 0
  %5166 = vmatprep.subr.bf16.mxu0 0
  %5167 = vmatpush1.bf16.msra.mxu0 0
  %5168 = vmatprep.subr.bf16.mxu0 0
  %5169 = vmatpush1.bf16.msra.mxu0 0
  %5170 = vmatprep.subr.bf16.mxu0 0
  %5171 = vmatpush1.bf16.msra.mxu0 0
  %5172 = vmatprep.mubr.bf16.mxu0 0
  %5173 = vmatmul.mubr.bf16.gmra.mrb[0].mxu0 %v5135
  %v5174 = vpop.f32.mrb[0].mxu0
  %v5175 = vadd.f32 0.0, %v5174
  %v5176 = vpop.f32.mrb[0].mxu0
  %v5177 = vpop.f32.mrb[0].mxu0
  %v5178 = vpop.f32.mrb[0].mxu0
  %5179 = vdwg.mxu0
  %v5181 = vsel %vm4684, %v5028, 0
  %v5184 = vsel %vm5044, %v4800, 0
  %5186 = vmatprep.subr.bf16.mxu0 0
  %5187 = vmatpush1.bf16.msra.mxu0 %v5184
  %5188 = vmatprep.subr.bf16.mxu0 0
  %5189 = vmatpush1.bf16.msra.mxu0 0
  %5190 = vmatprep.subr.bf16.mxu0 0
  %5191 = vmatpush1.bf16.msra.mxu0 0
  %5192 = vmatprep.subr.bf16.mxu0 0
  %5193 = vmatpush1.bf16.msra.mxu0 0
  %5194 = vmatprep.subr.bf16.mxu0 0
  %5195 = vmatpush1.bf16.msra.mxu0 0
  %5196 = vmatprep.subr.bf16.mxu0 0
  %5197 = vmatpush1.bf16.msra.mxu0 0
  %5198 = vmatprep.subr.bf16.mxu0 0
  %5199 = vmatpush1.bf16.msra.mxu0 0
  %5200 = vmatprep.subr.bf16.mxu0 0
  %5201 = vmatpush1.bf16.msra.mxu0 0
  %5202 = vmatprep.subr.bf16.mxu0 0
  %5203 = vmatpush1.bf16.msra.mxu0 0
  %5204 = vmatprep.subr.bf16.mxu0 0
  %5205 = vmatpush1.bf16.msra.mxu0 0
  %5206 = vmatprep.subr.bf16.mxu0 0
  %5207 = vmatpush1.bf16.msra.mxu0 0
  %5208 = vmatprep.subr.bf16.mxu0 0
  %5209 = vmatpush1.bf16.msra.mxu0 0
  %5210 = vmatprep.subr.bf16.mxu0 0
  %5211 = vmatpush1.bf16.msra.mxu0 0
  %5212 = vmatprep.subr.bf16.mxu0 0
  %5213 = vmatpush1.bf16.msra.mxu0 0
  %5214 = vmatprep.subr.bf16.mxu0 0
  %5215 = vmatpush1.bf16.msra.mxu0 0
  %5216 = vmatprep.subr.bf16.mxu0 0
  %5217 = vmatpush1.bf16.msra.mxu0 0
  %5218 = vmatprep.mubr.bf16.mxu0 0
  %5219 = vmatmul.mubr.bf16.gmra.mrb[0].mxu0 %v5181
  %v5220 = vpop.f32.mrb[0].mxu0
  %v5221 = vadd.f32 0.0, %v5220
  %v5222 = vpop.f32.mrb[0].mxu0
  %v5223 = vpop.f32.mrb[0].mxu0
  %v5224 = vpop.f32.mrb[0].mxu0
  %5225 = vdwg.mxu0
  %v5227 = vsel %vm4684, %v5029, 0
  %v5230 = vsel %vm5044, %v4801, 0
  %5232 = vmatprep.subr.bf16.mxu0 0
  %5233 = vmatpush1.bf16.msra.mxu0 %v5230
  %5234 = vmatprep.subr.bf16.mxu0 0
  %5235 = vmatpush1.bf16.msra.mxu0 0
  %5236 = vmatprep.subr.bf16.mxu0 0
  %5237 = vmatpush1.bf16.msra.mxu0 0
  %5238 = vmatprep.subr.bf16.mxu0 0
  %5239 = vmatpush1.bf16.msra.mxu0 0
  %5240 = vmatprep.subr.bf16.mxu0 0
  %5241 = vmatpush1.bf16.msra.mxu0 0
  %5242 = vmatprep.subr.bf16.mxu0 0
  %5243 = vmatpush1.bf16.msra.mxu0 0
  %5244 = vmatprep.subr.bf16.mxu0 0
  %5245 = vmatpush1.bf16.msra.mxu0 0
  %5246 = vmatprep.subr.bf16.mxu0 0
  %5247 = vmatpush1.bf16.msra.mxu0 0
  %5248 = vmatprep.subr.bf16.mxu0 0
  %5249 = vmatpush1.bf16.msra.mxu0 0
  %5250 = vmatprep.subr.bf16.mxu0 0
  %5251 = vmatpush1.bf16.msra.mxu0 0
  %5252 = vmatprep.subr.bf16.mxu0 0
  %5253 = vmatpush1.bf16.msra.mxu0 0
  %5254 = vmatprep.subr.bf16.mxu0 0
  %5255 = vmatpush1.bf16.msra.mxu0 0
  %5256 = vmatprep.subr.bf16.mxu0 0
  %5257 = vmatpush1.bf16.msra.mxu0 0
  %5258 = vmatprep.subr.bf16.mxu0 0
  %5259 = vmatpush1.bf16.msra.mxu0 0
  %5260 = vmatprep.subr.bf16.mxu0 0
  %5261 = vmatpush1.bf16.msra.mxu0 0
  %5262 = vmatprep.subr.bf16.mxu0 0
  %5263 = vmatpush1.bf16.msra.mxu0 0
  %5264 = vmatprep.mubr.bf16.mxu0 0
  %5265 = vmatmul.mubr.bf16.gmra.mrb[0].mxu0 %v5227
  %v5266 = vpop.f32.mrb[0].mxu0
  %v5267 = vadd.f32 0.0, %v5266
  %v5268 = vpop.f32.mrb[0].mxu0
  %v5269 = vpop.f32.mrb[0].mxu0
  %v5270 = vpop.f32.mrb[0].mxu0
  %5271 = vdwg.mxu0
  %v5273 = vsel %vm4684, %v5030, 0
  %v5276 = vsel %vm5044, %v4802, 0
  %5278 = vmatprep.subr.bf16.mxu0 0
  %5279 = vmatpush1.bf16.msra.mxu0 %v5276
  %5280 = vmatprep.subr.bf16.mxu0 0
  %5281 = vmatpush1.bf16.msra.mxu0 0
  %5282 = vmatprep.subr.bf16.mxu0 0
  %5283 = vmatpush1.bf16.msra.mxu0 0
  %5284 = vmatprep.subr.bf16.mxu0 0
  %5285 = vmatpush1.bf16.msra.mxu0 0
  %5286 = vmatprep.subr.bf16.mxu0 0
  %5287 = vmatpush1.bf16.msra.mxu0 0
  %5288 = vmatprep.subr.bf16.mxu0 0
  %5289 = vmatpush1.bf16.msra.mxu0 0
  %5290 = vmatprep.subr.bf16.mxu0 0
  %5291 = vmatpush1.bf16.msra.mxu0 0
  %5292 = vmatprep.subr.bf16.mxu0 0
  %5293 = vmatpush1.bf16.msra.mxu0 0
  %5294 = vmatprep.subr.bf16.mxu0 0
  %5295 = vmatpush1.bf16.msra.mxu0 0
  %5296 = vmatprep.subr.bf16.mxu0 0
  %5297 = vmatpush1.bf16.msra.mxu0 0
  %5298 = vmatprep.subr.bf16.mxu0 0
  %5299 = vmatpush1.bf16.msra.mxu0 0
  %5300 = vmatprep.subr.bf16.mxu0 0
  %5301 = vmatpush1.bf16.msra.mxu0 0
  %5302 = vmatprep.subr.bf16.mxu0 0
  %5303 = vmatpush1.bf16.msra.mxu0 0
  %5304 = vmatprep.subr.bf16.mxu0 0
  %5305 = vmatpush1.bf16.msra.mxu0 0
  %5306 = vmatprep.subr.bf16.mxu0 0
  %5307 = vmatpush1.bf16.msra.mxu0 0
  %5308 = vmatprep.subr.bf16.mxu0 0
  %5309 = vmatpush1.bf16.msra.mxu0 0
  %5310 = vmatprep.mubr.bf16.mxu0 0
  %5311 = vmatmul.mubr.bf16.gmra.mrb[0].mxu0 %v5273
  %v5312 = vpop.f32.mrb[0].mxu0
  %v5313 = vadd.f32 0.0, %v5312
  %v5314 = vpop.f32.mrb[0].mxu0
  %v5315 = vpop.f32.mrb[0].mxu0
  %v5316 = vpop.f32.mrb[0].mxu0
  %5317 = vdwg.mxu0
  %v5319 = vsel %vm4684, %v5031, 0
  %v5322 = vsel %vm5044, %v4803, 0
  %5324 = vmatprep.subr.bf16.mxu0 0
  %5325 = vmatpush1.bf16.msra.mxu0 %v5322
  %5326 = vmatprep.subr.bf16.mxu0 0
  %5327 = vmatpush1.bf16.msra.mxu0 0
  %5328 = vmatprep.subr.bf16.mxu0 0
  %5329 = vmatpush1.bf16.msra.mxu0 0
  %5330 = vmatprep.subr.bf16.mxu0 0
  %5331 = vmatpush1.bf16.msra.mxu0 0
  %5332 = vmatprep.subr.bf16.mxu0 0
  %5333 = vmatpush1.bf16.msra.mxu0 0
  %5334 = vmatprep.subr.bf16.mxu0 0
  %5335 = vmatpush1.bf16.msra.mxu0 0
  %5336 = vmatprep.subr.bf16.mxu0 0
  %5337 = vmatpush1.bf16.msra.mxu0 0
  %5338 = vmatprep.subr.bf16.mxu0 0
  %5339 = vmatpush1.bf16.msra.mxu0 0
  %5340 = vmatprep.subr.bf16.mxu0 0
  %5341 = vmatpush1.bf16.msra.mxu0 0
  %5342 = vmatprep.subr.bf16.mxu0 0
  %5343 = vmatpush1.bf16.msra.mxu0 0
  %5344 = vmatprep.subr.bf16.mxu0 0
  %5345 = vmatpush1.bf16.msra.mxu0 0
  %5346 = vmatprep.subr.bf16.mxu0 0
  %5347 = vmatpush1.bf16.msra.mxu0 0
  %5348 = vmatprep.subr.bf16.mxu0 0
  %5349 = vmatpush1.bf16.msra.mxu0 0
  %5350 = vmatprep.subr.bf16.mxu0 0
  %5351 = vmatpush1.bf16.msra.mxu0 0
  %5352 = vmatprep.subr.bf16.mxu0 0
  %5353 = vmatpush1.bf16.msra.mxu0 0
  %5354 = vmatprep.subr.bf16.mxu0 0
  %5355 = vmatpush1.bf16.msra.mxu0 0
  %5356 = vmatprep.mubr.bf16.mxu0 0
  %5357 = vmatmul.mubr.bf16.gmra.mrb[0].mxu0 %v5319
  %v5358 = vpop.f32.mrb[0].mxu0
  %v5359 = vadd.f32 0.0, %v5358
  %v5360 = vpop.f32.mrb[0].mxu0
  %v5361 = vpop.f32.mrb[0].mxu0
  %v5362 = vpop.f32.mrb[0].mxu0
  %5363 = vdwg.mxu0
  %v5365 = vsel %vm4684, %v5032, 0
  %v5368 = vsel %vm5044, %v4804, 0
  %5370 = vmatprep.subr.bf16.mxu0 0
  %5371 = vmatpush1.bf16.msra.mxu0 %v5368
  %5372 = vmatprep.subr.bf16.mxu0 0
  %5373 = vmatpush1.bf16.msra.mxu0 0
  %5374 = vmatprep.subr.bf16.mxu0 0
  %5375 = vmatpush1.bf16.msra.mxu0 0
  %5376 = vmatprep.subr.bf16.mxu0 0
  %5377 = vmatpush1.bf16.msra.mxu0 0
  %5378 = vmatprep.subr.bf16.mxu0 0
  %5379 = vmatpush1.bf16.msra.mxu0 0
  %5380 = vmatprep.subr.bf16.mxu0 0
  %5381 = vmatpush1.bf16.msra.mxu0 0
  %5382 = vmatprep.subr.bf16.mxu0 0
  %5383 = vmatpush1.bf16.msra.mxu0 0
  %5384 = vmatprep.subr.bf16.mxu0 0
  %5385 = vmatpush1.bf16.msra.mxu0 0
  %5386 = vmatprep.subr.bf16.mxu0 0
  %5387 = vmatpush1.bf16.msra.mxu0 0
  %5388 = vmatprep.subr.bf16.mxu0 0
  %5389 = vmatpush1.bf16.msra.mxu0 0
  %5390 = vmatprep.subr.bf16.mxu0 0
  %5391 = vmatpush1.bf16.msra.mxu0 0
  %5392 = vmatprep.subr.bf16.mxu0 0
  %5393 = vmatpush1.bf16.msra.mxu0 0
  %5394 = vmatprep.subr.bf16.mxu0 0
  %5395 = vmatpush1.bf16.msra.mxu0 0
  %5396 = vmatprep.subr.bf16.mxu0 0
  %5397 = vmatpush1.bf16.msra.mxu0 0
  %5398 = vmatprep.subr.bf16.mxu0 0
  %5399 = vmatpush1.bf16.msra.mxu0 0
  %5400 = vmatprep.subr.bf16.mxu0 0
  %5401 = vmatpush1.bf16.msra.mxu0 0
  %5402 = vmatprep.mubr.bf16.mxu0 0
  %5403 = vmatmul.mubr.bf16.gmra.mrb[0].mxu0 %v5365
  %v5404 = vpop.f32.mrb[0].mxu0
  %v5405 = vadd.f32 0.0, %v5404
  %v5406 = vpop.f32.mrb[0].mxu0
  %v5407 = vpop.f32.mrb[0].mxu0
  %v5408 = vpop.f32.mrb[0].mxu0
  %5409 = vdwg.mxu0
  %v5411 = vsel %vm4684, %v5033, 0
  %v5414 = vsel %vm5044, %v4805, 0
  %5416 = vmatprep.subr.bf16.mxu0 0
  %5417 = vmatpush1.bf16.msra.mxu0 %v5414
  %5418 = vmatprep.subr.bf16.mxu0 0
  %5419 = vmatpush1.bf16.msra.mxu0 0
  %5420 = vmatprep.subr.bf16.mxu0 0
  %5421 = vmatpush1.bf16.msra.mxu0 0
  %5422 = vmatprep.subr.bf16.mxu0 0
  %5423 = vmatpush1.bf16.msra.mxu0 0
  %5424 = vmatprep.subr.bf16.mxu0 0
  %5425 = vmatpush1.bf16.msra.mxu0 0
  %5426 = vmatprep.subr.bf16.mxu0 0
  %5427 = vmatpush1.bf16.msra.mxu0 0
  %5428 = vmatprep.subr.bf16.mxu0 0
  %5429 = vmatpush1.bf16.msra.mxu0 0
  %5430 = vmatprep.subr.bf16.mxu0 0
  %5431 = vmatpush1.bf16.msra.mxu0 0
  %5432 = vmatprep.subr.bf16.mxu0 0
  %5433 = vmatpush1.bf16.msra.mxu0 0
  %5434 = vmatprep.subr.bf16.mxu0 0
  %5435 = vmatpush1.bf16.msra.mxu0 0
  %5436 = vmatprep.subr.bf16.mxu0 0
  %5437 = vmatpush1.bf16.msra.mxu0 0
  %5438 = vmatprep.subr.bf16.mxu0 0
  %5439 = vmatpush1.bf16.msra.mxu0 0
  %5440 = vmatprep.subr.bf16.mxu0 0
  %5441 = vmatpush1.bf16.msra.mxu0 0
  %5442 = vmatprep.subr.bf16.mxu0 0
  %5443 = vmatpush1.bf16.msra.mxu0 0
  %5444 = vmatprep.subr.bf16.mxu0 0
  %5445 = vmatpush1.bf16.msra.mxu0 0
  %5446 = vmatprep.subr.bf16.mxu0 0
  %5447 = vmatpush1.bf16.msra.mxu0 0
  %5448 = vmatprep.mubr.bf16.mxu0 0
  %5449 = vmatmul.mubr.bf16.gmra.mrb[0].mxu0 %v5411
  %v5450 = vpop.f32.mrb[0].mxu0
  %v5451 = vadd.f32 0.0, %v5450
  %v5452 = vpop.f32.mrb[0].mxu0
  %v5453 = vpop.f32.mrb[0].mxu0
  %v5454 = vpop.f32.mrb[0].mxu0
  %5455 = vdwg.mxu0
  %v5457 = vsel %vm4684, %v5034, 0
  %v5460 = vsel %vm5044, %v4806, 0
  %5462 = vmatprep.subr.bf16.mxu0 0
  %5463 = vmatpush1.bf16.msra.mxu0 %v5460
  %5464 = vmatprep.subr.bf16.mxu0 0
  %5465 = vmatpush1.bf16.msra.mxu0 0
  %5466 = vmatprep.subr.bf16.mxu0 0
  %5467 = vmatpush1.bf16.msra.mxu0 0
  %5468 = vmatprep.subr.bf16.mxu0 0
  %5469 = vmatpush1.bf16.msra.mxu0 0
  %5470 = vmatprep.subr.bf16.mxu0 0
  %5471 = vmatpush1.bf16.msra.mxu0 0
  %5472 = vmatprep.subr.bf16.mxu0 0
  %5473 = vmatpush1.bf16.msra.mxu0 0
  %5474 = vmatprep.subr.bf16.mxu0 0
  %5475 = vmatpush1.bf16.msra.mxu0 0
  %5476 = vmatprep.subr.bf16.mxu0 0
  %5477 = vmatpush1.bf16.msra.mxu0 0
  %5478 = vmatprep.subr.bf16.mxu0 0
  %5479 = vmatpush1.bf16.msra.mxu0 0
  %5480 = vmatprep.subr.bf16.mxu0 0
  %5481 = vmatpush1.bf16.msra.mxu0 0
  %5482 = vmatprep.subr.bf16.mxu0 0
  %5483 = vmatpush1.bf16.msra.mxu0 0
  %5484 = vmatprep.subr.bf16.mxu0 0
  %5485 = vmatpush1.bf16.msra.mxu0 0
  %5486 = vmatprep.subr.bf16.mxu0 0
  %5487 = vmatpush1.bf16.msra.mxu0 0
  %5488 = vmatprep.subr.bf16.mxu0 0
  %5489 = vmatpush1.bf16.msra.mxu0 0
  %5490 = vmatprep.subr.bf16.mxu0 0
  %5491 = vmatpush1.bf16.msra.mxu0 0
  %5492 = vmatprep.subr.bf16.mxu0 0
  %5493 = vmatpush1.bf16.msra.mxu0 0
  %5494 = vmatprep.mubr.bf16.mxu0 0
  %5495 = vmatmul.mubr.bf16.gmra.mrb[0].mxu0 %v5457
  %v5496 = vpop.f32.mrb[0].mxu0
  %v5497 = vadd.f32 0.0, %v5496
  %v5498 = vpop.f32.mrb[0].mxu0
  %v5499 = vpop.f32.mrb[0].mxu0
  %v5500 = vpop.f32.mrb[0].mxu0
  %5501 = vdwg.mxu0
  %v5503 = vsel %vm4684, %v5035, 0
  %v5506 = vsel %vm5044, %v4807, 0
  %5508 = vmatprep.subr.bf16.mxu0 0
  %5509 = vmatpush1.bf16.msra.mxu0 %v5506
  %5510 = vmatprep.subr.bf16.mxu0 0
  %5511 = vmatpush1.bf16.msra.mxu0 0
  %5512 = vmatprep.subr.bf16.mxu0 0
  %5513 = vmatpush1.bf16.msra.mxu0 0
  %5514 = vmatprep.subr.bf16.mxu0 0
  %5515 = vmatpush1.bf16.msra.mxu0 0
  %5516 = vmatprep.subr.bf16.mxu0 0
  %5517 = vmatpush1.bf16.msra.mxu0 0
  %5518 = vmatprep.subr.bf16.mxu0 0
  %5519 = vmatpush1.bf16.msra.mxu0 0
  %5520 = vmatprep.subr.bf16.mxu0 0
  %5521 = vmatpush1.bf16.msra.mxu0 0
  %5522 = vmatprep.subr.bf16.mxu0 0
  %5523 = vmatpush1.bf16.msra.mxu0 0
  %5524 = vmatprep.subr.bf16.mxu0 0
  %5525 = vmatpush1.bf16.msra.mxu0 0
  %5526 = vmatprep.subr.bf16.mxu0 0
  %5527 = vmatpush1.bf16.msra.mxu0 0
  %5528 = vmatprep.subr.bf16.mxu0 0
  %5529 = vmatpush1.bf16.msra.mxu0 0
  %5530 = vmatprep.subr.bf16.mxu0 0
  %5531 = vmatpush1.bf16.msra.mxu0 0
  %5532 = vmatprep.subr.bf16.mxu0 0
  %5533 = vmatpush1.bf16.msra.mxu0 0
  %5534 = vmatprep.subr.bf16.mxu0 0
  %5535 = vmatpush1.bf16.msra.mxu0 0
  %5536 = vmatprep.subr.bf16.mxu0 0
  %5537 = vmatpush1.bf16.msra.mxu0 0
  %5538 = vmatprep.subr.bf16.mxu0 0
  %5539 = vmatpush1.bf16.msra.mxu0 0
  %5540 = vmatprep.mubr.bf16.mxu0 0
  %5541 = vmatmul.mubr.bf16.gmra.mrb[0].mxu0 %v5503
  %v5542 = vpop.f32.mrb[0].mxu0
  %v5543 = vadd.f32 0.0, %v5542
  %v5544 = vpop.f32.mrb[0].mxu0
  %v5545 = vpop.f32.mrb[0].mxu0
  %v5546 = vpop.f32.mrb[0].mxu0
  %5547 = vdwg.mxu0
  %v5549 = vsel %vm4684, %v5036, 0
  %v5552 = vsel %vm5044, %v4808, 0
  %5554 = vmatprep.subr.bf16.mxu0 0
  %5555 = vmatpush1.bf16.msra.mxu0 %v5552
  %5556 = vmatprep.subr.bf16.mxu0 0
  %5557 = vmatpush1.bf16.msra.mxu0 0
  %5558 = vmatprep.subr.bf16.mxu0 0
  %5559 = vmatpush1.bf16.msra.mxu0 0
  %5560 = vmatprep.subr.bf16.mxu0 0
  %5561 = vmatpush1.bf16.msra.mxu0 0
  %5562 = vmatprep.subr.bf16.mxu0 0
  %5563 = vmatpush1.bf16.msra.mxu0 0
  %5564 = vmatprep.subr.bf16.mxu0 0
  %5565 = vmatpush1.bf16.msra.mxu0 0
  %5566 = vmatprep.subr.bf16.mxu0 0
  %5567 = vmatpush1.bf16.msra.mxu0 0
  %5568 = vmatprep.subr.bf16.mxu0 0
  %5569 = vmatpush1.bf16.msra.mxu0 0
  %5570 = vmatprep.subr.bf16.mxu0 0
  %5571 = vmatpush1.bf16.msra.mxu0 0
  %5572 = vmatprep.subr.bf16.mxu0 0
  %5573 = vmatpush1.bf16.msra.mxu0 0
  %5574 = vmatprep.subr.bf16.mxu0 0
  %5575 = vmatpush1.bf16.msra.mxu0 0
  %5576 = vmatprep.subr.bf16.mxu0 0
  %5577 = vmatpush1.bf16.msra.mxu0 0
  %5578 = vmatprep.subr.bf16.mxu0 0
  %5579 = vmatpush1.bf16.msra.mxu0 0
  %5580 = vmatprep.subr.bf16.mxu0 0
  %5581 = vmatpush1.bf16.msra.mxu0 0
  %5582 = vmatprep.subr.bf16.mxu0 0
  %5583 = vmatpush1.bf16.msra.mxu0 0
  %5584 = vmatprep.subr.bf16.mxu0 0
  %5585 = vmatpush1.bf16.msra.mxu0 0
  %5586 = vmatprep.mubr.bf16.mxu0 0
  %5587 = vmatmul.mubr.bf16.gmra.mrb[0].mxu0 %v5549
  %v5588 = vpop.f32.mrb[0].mxu0
  %v5589 = vadd.f32 0.0, %v5588
  %v5590 = vpop.f32.mrb[0].mxu0
  %v5591 = vpop.f32.mrb[0].mxu0
  %v5592 = vpop.f32.mrb[0].mxu0
  %5593 = vdwg.mxu0
  %v5595 = vsel %vm4684, %v5037, 0
  %v5598 = vsel %vm5044, %v4809, 0
  %5600 = vmatprep.subr.bf16.mxu0 0
  %5601 = vmatpush1.bf16.msra.mxu0 %v5598
  %5602 = vmatprep.subr.bf16.mxu0 0
  %5603 = vmatpush1.bf16.msra.mxu0 0
  %5604 = vmatprep.subr.bf16.mxu0 0
  %5605 = vmatpush1.bf16.msra.mxu0 0
  %5606 = vmatprep.subr.bf16.mxu0 0
  %5607 = vmatpush1.bf16.msra.mxu0 0
  %5608 = vmatprep.subr.bf16.mxu0 0
  %5609 = vmatpush1.bf16.msra.mxu0 0
  %5610 = vmatprep.subr.bf16.mxu0 0
  %5611 = vmatpush1.bf16.msra.mxu0 0
  %5612 = vmatprep.subr.bf16.mxu0 0
  %5613 = vmatpush1.bf16.msra.mxu0 0
  %5614 = vmatprep.subr.bf16.mxu0 0
  %5615 = vmatpush1.bf16.msra.mxu0 0
  %5616 = vmatprep.subr.bf16.mxu0 0
  %5617 = vmatpush1.bf16.msra.mxu0 0
  %5618 = vmatprep.subr.bf16.mxu0 0
  %5619 = vmatpush1.bf16.msra.mxu0 0
  %5620 = vmatprep.subr.bf16.mxu0 0
  %5621 = vmatpush1.bf16.msra.mxu0 0
  %5622 = vmatprep.subr.bf16.mxu0 0
  %5623 = vmatpush1.bf16.msra.mxu0 0
  %5624 = vmatprep.subr.bf16.mxu0 0
  %5625 = vmatpush1.bf16.msra.mxu0 0
  %5626 = vmatprep.subr.bf16.mxu0 0
  %5627 = vmatpush1.bf16.msra.mxu0 0
  %5628 = vmatprep.subr.bf16.mxu0 0
  %5629 = vmatpush1.bf16.msra.mxu0 0
  %5630 = vmatprep.subr.bf16.mxu0 0
  %5631 = vmatpush1.bf16.msra.mxu0 0
  %5632 = vmatprep.mubr.bf16.mxu0 0
  %5633 = vmatmul.mubr.bf16.gmra.mrb[0].mxu0 %v5595
  %v5634 = vpop.f32.mrb[0].mxu0
  %v5635 = vadd.f32 0.0, %v5634
  %v5636 = vpop.f32.mrb[0].mxu0
  %v5637 = vpop.f32.mrb[0].mxu0
  %v5638 = vpop.f32.mrb[0].mxu0
  %5639 = vdwg.mxu0
  %v5641 = vsel %vm4684, %v5038, 0
  %v5644 = vsel %vm5044, %v4810, 0
  %5646 = vmatprep.subr.bf16.mxu0 0
  %5647 = vmatpush1.bf16.msra.mxu0 %v5644
  %5648 = vmatprep.subr.bf16.mxu0 0
  %5649 = vmatpush1.bf16.msra.mxu0 0
  %5650 = vmatprep.subr.bf16.mxu0 0
  %5651 = vmatpush1.bf16.msra.mxu0 0
  %5652 = vmatprep.subr.bf16.mxu0 0
  %5653 = vmatpush1.bf16.msra.mxu0 0
  %5654 = vmatprep.subr.bf16.mxu0 0
  %5655 = vmatpush1.bf16.msra.mxu0 0
  %5656 = vmatprep.subr.bf16.mxu0 0
  %5657 = vmatpush1.bf16.msra.mxu0 0
  %5658 = vmatprep.subr.bf16.mxu0 0
  %5659 = vmatpush1.bf16.msra.mxu0 0
  %5660 = vmatprep.subr.bf16.mxu0 0
  %5661 = vmatpush1.bf16.msra.mxu0 0
  %5662 = vmatprep.subr.bf16.mxu0 0
  %5663 = vmatpush1.bf16.msra.mxu0 0
  %5664 = vmatprep.subr.bf16.mxu0 0
  %5665 = vmatpush1.bf16.msra.mxu0 0
  %5666 = vmatprep.subr.bf16.mxu0 0
  %5667 = vmatpush1.bf16.msra.mxu0 0
  %5668 = vmatprep.subr.bf16.mxu0 0
  %5669 = vmatpush1.bf16.msra.mxu0 0
  %5670 = vmatprep.subr.bf16.mxu0 0
  %5671 = vmatpush1.bf16.msra.mxu0 0
  %5672 = vmatprep.subr.bf16.mxu0 0
  %5673 = vmatpush1.bf16.msra.mxu0 0
  %5674 = vmatprep.subr.bf16.mxu0 0
  %5675 = vmatpush1.bf16.msra.mxu0 0
  %5676 = vmatprep.subr.bf16.mxu0 0
  %5677 = vmatpush1.bf16.msra.mxu0 0
  %5678 = vmatprep.mubr.bf16.mxu0 0
  %5679 = vmatmul.mubr.bf16.gmra.mrb[0].mxu0 %v5641
  %v5680 = vpop.f32.mrb[0].mxu0
  %v5681 = vadd.f32 0.0, %v5680
  %v5682 = vpop.f32.mrb[0].mxu0
  %v5683 = vpop.f32.mrb[0].mxu0
  %v5684 = vpop.f32.mrb[0].mxu0
  %5685 = vdwg.mxu0
  %v5687 = vsel %vm4684, %v5039, 0
  %v5690 = vsel %vm5044, %v4811, 0
  %5692 = vmatprep.subr.bf16.mxu0 0
  %5693 = vmatpush1.bf16.msra.mxu0 %v5690
  %5694 = vmatprep.subr.bf16.mxu0 0
  %5695 = vmatpush1.bf16.msra.mxu0 0
  %5696 = vmatprep.subr.bf16.mxu0 0
  %5697 = vmatpush1.bf16.msra.mxu0 0
  %5698 = vmatprep.subr.bf16.mxu0 0
  %5699 = vmatpush1.bf16.msra.mxu0 0
  %5700 = vmatprep.subr.bf16.mxu0 0
  %5701 = vmatpush1.bf16.msra.mxu0 0
  %5702 = vmatprep.subr.bf16.mxu0 0
  %5703 = vmatpush1.bf16.msra.mxu0 0
  %5704 = vmatprep.subr.bf16.mxu0 0
  %5705 = vmatpush1.bf16.msra.mxu0 0
  %5706 = vmatprep.subr.bf16.mxu0 0
  %5707 = vmatpush1.bf16.msra.mxu0 0
  %5708 = vmatprep.subr.bf16.mxu0 0
  %5709 = vmatpush1.bf16.msra.mxu0 0
  %5710 = vmatprep.subr.bf16.mxu0 0
  %5711 = vmatpush1.bf16.msra.mxu0 0
  %5712 = vmatprep.subr.bf16.mxu0 0
  %5713 = vmatpush1.bf16.msra.mxu0 0
  %5714 = vmatprep.subr.bf16.mxu0 0
  %5715 = vmatpush1.bf16.msra.mxu0 0
  %5716 = vmatprep.subr.bf16.mxu0 0
  %5717 = vmatpush1.bf16.msra.mxu0 0
  %5718 = vmatprep.subr.bf16.mxu0 0
  %5719 = vmatpush1.bf16.msra.mxu0 0
  %5720 = vmatprep.subr.bf16.mxu0 0
  %5721 = vmatpush1.bf16.msra.mxu0 0
  %5722 = vmatprep.subr.bf16.mxu0 0
  %5723 = vmatpush1.bf16.msra.mxu0 0
  %5724 = vmatprep.mubr.bf16.mxu0 0
  %5725 = vmatmul.mubr.bf16.gmra.mrb[0].mxu0 %v5687
  %v5726 = vpop.f32.mrb[0].mxu0
  %v5727 = vadd.f32 0.0, %v5726
  %v5728 = vpop.f32.mrb[0].mxu0
  %v5729 = vpop.f32.mrb[0].mxu0
  %v5730 = vpop.f32.mrb[0].mxu0
  %5731 = vdwg.mxu0
  %v5733 = vsel %vm4684, %v5040, 0
  %v5736 = vsel %vm5044, %v4812, 0
  %5738 = vmatprep.subr.bf16.mxu0 0
  %5739 = vmatpush1.bf16.msra.mxu0 %v5736
  %5740 = vmatprep.subr.bf16.mxu0 0
  %5741 = vmatpush1.bf16.msra.mxu0 0
  %5742 = vmatprep.subr.bf16.mxu0 0
  %5743 = vmatpush1.bf16.msra.mxu0 0
  %5744 = vmatprep.subr.bf16.mxu0 0
  %5745 = vmatpush1.bf16.msra.mxu0 0
  %5746 = vmatprep.subr.bf16.mxu0 0
  %5747 = vmatpush1.bf16.msra.mxu0 0
  %5748 = vmatprep.subr.bf16.mxu0 0
  %5749 = vmatpush1.bf16.msra.mxu0 0
  %5750 = vmatprep.subr.bf16.mxu0 0
  %5751 = vmatpush1.bf16.msra.mxu0 0
  %5752 = vmatprep.subr.bf16.mxu0 0
  %5753 = vmatpush1.bf16.msra.mxu0 0
  %5754 = vmatprep.subr.bf16.mxu0 0
  %5755 = vmatpush1.bf16.msra.mxu0 0
  %5756 = vmatprep.subr.bf16.mxu0 0
  %5757 = vmatpush1.bf16.msra.mxu0 0
  %5758 = vmatprep.subr.bf16.mxu0 0
  %5759 = vmatpush1.bf16.msra.mxu0 0
  %5760 = vmatprep.subr.bf16.mxu0 0
  %5761 = vmatpush1.bf16.msra.mxu0 0
  %5762 = vmatprep.subr.bf16.mxu0 0
  %5763 = vmatpush1.bf16.msra.mxu0 0
  %5764 = vmatprep.subr.bf16.mxu0 0
  %5765 = vmatpush1.bf16.msra.mxu0 0
  %5766 = vmatprep.subr.bf16.mxu0 0
  %5767 = vmatpush1.bf16.msra.mxu0 0
  %5768 = vmatprep.subr.bf16.mxu0 0
  %5769 = vmatpush1.bf16.msra.mxu0 0
  %5770 = vmatprep.mubr.bf16.mxu0 0
  %5771 = vmatmul.mubr.bf16.gmra.mrb[0].mxu0 %v5733
  %v5772 = vpop.f32.mrb[0].mxu0
  %v5773 = vadd.f32 0.0, %v5772
  %v5774 = vpop.f32.mrb[0].mxu0
  %v5775 = vpop.f32.mrb[0].mxu0
  %v5776 = vpop.f32.mrb[0].mxu0
  %5777 = vdwg.mxu0
  %v5778 = vpack.c.bf16 %v5083, %v5083
  %v5779 = vpack.c.bf16 %v5129, %v5129
  %v5780 = vpack.c.bf16 %v5175, %v5175
  %v5781 = vpack.c.bf16 %v5221, %v5221
  %v5782 = vpack.c.bf16 %v5267, %v5267
  %v5783 = vpack.c.bf16 %v5313, %v5313
  %v5784 = vpack.c.bf16 %v5359, %v5359
  %v5785 = vpack.c.bf16 %v5405, %v5405
  %v5786 = vpack.c.bf16 %v5451, %v5451
  %v5787 = vpack.c.bf16 %v5497, %v5497
  %v5788 = vpack.c.bf16 %v5543, %v5543
  %v5789 = vpack.c.bf16 %v5589, %v5589
  %v5790 = vpack.c.bf16 %v5635, %v5635
  %v5791 = vpack.c.bf16 %v5681, %v5681
  %v5792 = vpack.c.bf16 %v5727, %v5727
  %v5793 = vpack.c.bf16 %v5773, %v5773
  %5794 = vst [vmem:[%s8] sm:$0xf] %v5778
  %5795 = vst [vmem:[%s8 + $0x4] sm:$0xf] %v5779
  %5796 = vst [vmem:[%s8 + $0x8] sm:$0xf] %v5780
  %5797 = vst [vmem:[%s8 + $0xc] sm:$0xf] %v5781
  %5798 = vst [vmem:[%s8 + $0x10] sm:$0xf] %v5782
  %5799 = vst [vmem:[%s8 + $0x14] sm:$0xf] %v5783
  %5800 = vst [vmem:[%s8 + $0x18] sm:$0xf] %v5784
  %5801 = vst [vmem:[%s8 + $0x1c] sm:$0xf] %v5785
  %5802 = vst [vmem:[%s8 + $0x20] sm:$0xf] %v5786
  %5803 = vst [vmem:[%s8 + $0x24] sm:$0xf] %v5787
  %5804 = vst [vmem:[%s8 + $0x28] sm:$0xf] %v5788
  %5805 = vst [vmem:[%s8 + $0x2c] sm:$0xf] %v5789
  %5806 = vst [vmem:[%s8 + $0x30] sm:$0xf] %v5790
  %5807 = vst [vmem:[%s8 + $0x34] sm:$0xf] %v5791
  %5808 = vst [vmem:[%s8 + $0x38] sm:$0xf] %v5792
  %5809 = vst [vmem:[%s8 + $0x3c] sm:$0xf] %v5793
  // Predicated region
  $region34: #{flashback_forward.2} parent=0 // pred_check
    _
  $region35: #{flashback_forward.2} parent=0 // pred_check_branch
    %5811 = sbr.rel (0) target = $region37
  $region36: #{flashback_forward.2} parent=0 // pred_region
    _
  $region37: #{flashback_forward.2} parent=0 // pred_fallthru
    _
  // Predicated region
  $region38: #{flashback_forward.2} parent=0 // pred_check
    _
  $region39: #{flashback_forward.2} parent=0 // pred_check_branch
    %5813 = sbr.rel (0) target = $region41
  $region40: #{flashback_forward.2} parent=0 // pred_region
    _
  $region41: #{flashback_forward.2} parent=0 // pred_fallthru
    _

</llo_original>
